<compile_context>
chip_gen: v7x
topology: tpu7x:2x2x1
jax: 0.10.0
libtpu: 0.0.40
codegen_flags: <defaults>
</compile_context>

<pallas_src>
import jax
import jax.numpy as jnp
import numpy as np
from jax import lax
from jax.experimental import pallas as pl
from jax.experimental.pallas import tpu as pltpu

# Module defaults (PrimaryCapules(...)):
NUM_CAPS = 32          # num_capsules
IN_CHANNELS = 256      # in_channels
OUT_CHANNELS = 8       # out_channels  == capsule vector length after .view
KERNEL = 9
STRIDE = 2
GRID = 6               # primary_caps_gridsize
IN_SPATIAL = 20        # (20 - 9)//2 + 1 == 6


# ---------------------------------------------------------------------------
# Pallas kernels
# ---------------------------------------------------------------------------
def _conv_matmul_kernel(a_ref, w_ref, b_ref, o_ref):
    """One K-tile step of  A @ W + bias.  The f32 output block stays resident
    in VMEM across the whole (1-D, 'arbitrary') reduction grid."""
    @pl.when(pl.program_id(0) == 0)
    def _init():
        o_ref[...] = jnp.zeros_like(o_ref) + b_ref[...]   # bias-broadcast init

    o_ref[...] += jnp.dot(a_ref[...], w_ref[...],
                          preferred_element_type=jnp.float32)


def _squash_kernel(u_ref, o_ref):
    """squash along the capsule-vector axis, laid out on sublanes (axis 0)."""
    u = u_ref[...]                                   # (caps_dim, L)
    sq = jnp.sum(u * u, axis=0, keepdims=True)       # (1, L)  -- XLU reduce
    scale = sq / ((1.0 + sq) * jnp.sqrt(sq))
    o_ref[...] = u * scale


# ---------------------------------------------------------------------------
# Pallas wrappers
# ---------------------------------------------------------------------------
def _pick_k_tile(m, k_total, n, vmem_budget=24 * 1024 * 1024):
    """Largest multiple-of-128 divisor of K (capped at 4096) such that the
    double-buffered A/W tiles plus the resident f32 output block fit in
    `vmem_budget`.  Amortizes per-step pipeline overhead while keeping the
    working set small."""
    out_bytes = 4 * (m * n + n)               # resident output + bias row
    per_k = 8 * (m + n)                       # A + W tiles, double-buffered f32
    cap = max(128, min(4096, (vmem_budget - out_bytes) // per_k))
    best = None
    for t in range(128, min(k_total, cap) + 1, 128):
        if k_total % t == 0:
            best = t
    return best if best is not None else k_total


def _conv_matmul(a, w_mat, bias_row):
    m, k_total = a.shape
    n = w_mat.shape[1]                               # 256 -> fully lane-dense
    tk = _pick_k_tile(m, k_total, n)
    grid = (k_total // tk,)                          # reduction axis only
    return pl.pallas_call(
        _conv_matmul_kernel,
        out_shape=jax.ShapeDtypeStruct((m, n), jnp.float32),
        grid=grid,
        in_specs=[
            pl.BlockSpec((m, tk), lambda kk: (0, kk)),     # A K-slab (once)
            pl.BlockSpec((tk, n), lambda kk: (kk, 0)),     # W K-slab (once)
            pl.BlockSpec((1, n), lambda kk: (0, 0)),       # bias row (once)
        ],
        out_specs=pl.BlockSpec((m, n), lambda kk: (0, 0)),  # resident acc
        compiler_params=pltpu.CompilerParams(
            dimension_semantics=("arbitrary",),
            # working set ~9 MB double-buffered; 32 MiB is safe on v5e/v6e and
            # well under v7x's 64 MiB physical VMEM.
            vmem_limit_bytes=32 * 1024 * 1024,
        ),
    )(a, w_mat, bias_row)


def _squash_lanes(u_t):
    d, l = u_t.shape                                  # (caps_dim, B*1152)
    return pl.pallas_call(
        _squash_kernel,
        out_shape=jax.ShapeDtypeStruct((d, l), jnp.float32),
        grid=(1,),
        in_specs=[pl.BlockSpec((d, l), lambda i: (0, 0))],
        out_specs=pl.BlockSpec((d, l), lambda i: (0, 0)),
    )(u_t)


# ---------------------------------------------------------------------------
# XLA glue: patch gather (im2col) for the stride-2 VALID conv
# ---------------------------------------------------------------------------
def _im2col_stride2(x_nhwc, kernel, grid, stride):
    """(B, H, W, C) -> (B*grid*grid, kernel*kernel*C); rows ordered (b, oy, ox),
    columns ordered (ky, kx, c_in)."""
    # TODO(synk): fusing this gather into the matmul kernel would need strided
    # sublane slicing + in-kernel reshapes; kept in XLA glue for robustness.
    b = x_nhwc.shape[0]
    c = x_nhwc.shape[3]
    cols = []
    for ky in range(kernel):
        for kx in range(kernel):
            cols.append(x_nhwc[:, ky:ky + stride * grid:stride,
                               kx:kx + stride * grid:stride, :])
    patches = jnp.stack(cols, axis=3)                 # (B, G, G, K*K, C)
    return patches.reshape(b * grid * grid, kernel * kernel * c)


# ---------------------------------------------------------------------------
# Parameters (PyTorch-style uniform fan-in init, deterministic)
# ---------------------------------------------------------------------------
def init_params(key):
    kw, kb = jax.random.split(key)
    fan_in = IN_CHANNELS * KERNEL * KERNEL
    lim = 1.0 / np.sqrt(fan_in)
    # w[oc, cap, cin, ky, kx]  == capsules[oc].weight (OIHW) stacked over oc
    w = jax.random.uniform(kw, (OUT_CHANNELS, NUM_CAPS, IN_CHANNELS, KERNEL, KERNEL),
                           jnp.float32, -lim, lim)
    b = jax.random.uniform(kb, (OUT_CHANNELS, NUM_CAPS), jnp.float32, -lim, lim)
    return {"w": w, "b": b}


def prepare_params(params):
    """One-time weight re-layout (kept out of the jitted forward so the 21 MB
    transpose is not re-materialized per call)."""
    w_mat = jnp.transpose(params["w"], (3, 4, 2, 0, 1)).reshape(
        KERNEL * KERNEL * IN_CHANNELS, OUT_CHANNELS * NUM_CAPS)   # (20736, 256)
    b_row = params["b"].reshape(1, OUT_CHANNELS * NUM_CAPS)        # (1, 256)
    return {"w_mat": w_mat, "b_row": b_row}


# ---------------------------------------------------------------------------
# Forward pass (Pallas)
# ---------------------------------------------------------------------------
def forward_pallas(prep, x):
    """x: (B, 256, 20, 20) NCHW  ->  (B, 1152, 8) squashed capsules."""
    bsz = x.shape[0]
    x_nhwc = jnp.transpose(x, (0, 2, 3, 1))                       # (B, 20, 20, 256)
    a = _im2col_stride2(x_nhwc, KERNEL, GRID, STRIDE)             # (B*36, 20736)
    y = _conv_matmul(a, prep["w_mat"], prep["b_row"])             # (B*36, 256)

    # rows (b, oy, ox) x cols (oc, cap)  ->  torch.stack(dim=1) layout
    stacked = y.reshape(bsz, GRID, GRID, OUT_CHANNELS, NUM_CAPS)
    stacked = jnp.transpose(stacked, (0, 3, 4, 1, 2))             # (B, 8, 32, 6, 6)
    u = stacked.reshape(bsz, NUM_CAPS * GRID * GRID, -1)          # (B, 1152, 8) = .view

    caps_dim = u.shape[-1]
    n_caps = u.shape[1]
    u_t = u.reshape(bsz * n_caps, caps_dim).T                     # (8, B*1152) lane-dense
    out_t = _squash_lanes(u_t)
    return out_t.T.reshape(bsz, n_caps, caps_dim)


# ---------------------------------------------------------------------------
# Plain-JAX reference (independent path: 8x lax.conv, stack, view, squash)
# ---------------------------------------------------------------------------
def forward_reference(params, x):
    bsz = x.shape[0]
    outs = []
    for oc in range(OUT_CHANNELS):
        w = params["w"][oc]                                       # (32, 256, 9, 9)
        y = lax.conv_general_dilated(
            x, w, window_strides=(STRIDE, STRIDE), padding="VALID",
            dimension_numbers=("NCHW", "OIHW", "NCHW"),
            precision=lax.Precision.HIGHEST)
        y = y + params["b"][oc][None, :, None, None]
        outs.append(y)
    out = jnp.stack(outs, axis=1)                                 # (B, 8, 32, 6, 6)
    u = out.reshape(bsz, NUM_CAPS * GRID * GRID, -1)              # (B, 1152, 8)
    sq = jnp.sum(u * u, axis=-1, keepdims=True)
    return u * (sq / ((1.0 + sq) * jnp.sqrt(sq)))


# ---------------------------------------------------------------------------
if __name__ == "__main__":
    key = jax.random.PRNGKey(0)
    kp, kx = jax.random.split(key)
    params = init_params(kp)
    prep = prepare_params(params)

    batch = 2
    x = jax.random.normal(kx, (batch, IN_CHANNELS, IN_SPATIAL, IN_SPATIAL), jnp.float32)

    out = jax.jit(forward_pallas)(prep, x)
    out = jax.block_until_ready(out)
    assert out.shape == (batch, NUM_CAPS * GRID * GRID, OUT_CHANNELS)

    ref = jax.jit(forward_reference)(params, x)
    ref = jax.block_until_ready(ref)
    np.testing.assert_allclose(np.asarray(out), np.asarray(ref), rtol=3e-3, atol=3e-4)

    print("KERNEL_OK")
</pallas_src>

<mosaic_0001>
module attributes {stable_mosaic.version = 11 : i64} {
  func.func @_conv_matmul_kernel(%arg0: i32, %arg1: memref<72x3456xf32, #tpu.memory_space<vmem>>, %arg2: memref<3456x256xf32, #tpu.memory_space<vmem>>, %arg3: memref<1x256xf32, #tpu.memory_space<vmem>>, %arg4: memref<72x256xf32, #tpu.memory_space<vmem>>) attributes {dimension_semantics = [#tpu.dimension_semantics<arbitrary>], iteration_bounds = array<i64: 6>, scalar_prefetch = 0 : i64, scratch_operands = 0 : i64, tpu.core_type = #tpu.core_type<tc>, window_params = [{transform_indices = @transform_0, window_bounds = array<i64: 72, 3456>}, {transform_indices = @transform_1, window_bounds = array<i64: 3456, 256>}, {pipeline_mode = #tpu.pipeline_mode<synchronous>, transform_indices = @transform_2, window_bounds = array<i64: 1, 256>}, {pipeline_mode = #tpu.pipeline_mode<synchronous>, transform_indices = @transform_3, window_bounds = array<i64: 72, 256>}]} {
    %c0_i32 = arith.constant 0 : i32
    %0 = arith.cmpi eq, %arg0, %c0_i32 : i32
    %1 = arith.extui %0 : i1 to i32
    %c0_i32_0 = arith.constant 0 : i32
    %2 = arith.cmpi ne, %1, %c0_i32_0 : i32
    scf.if %2 {
      %cst_8 = arith.constant 0.000000e+00 : f32
      %9 = vector.broadcast %cst_8 : f32 to vector<72x256xf32>
      %c0_9 = arith.constant 0 : index
      %c0_10 = arith.constant 0 : index
      %10 = vector.load %arg3[%c0_9, %c0_10] : memref<1x256xf32, #tpu.memory_space<vmem>>, vector<1x256xf32>
      %11 = vector.broadcast %10 : vector<1x256xf32> to vector<72x256xf32>
      %12 = arith.addf %9, %11 : vector<72x256xf32>
      %c0_11 = arith.constant 0 : index
      %c0_12 = arith.constant 0 : index
      %13 = vector.load %arg4[%c0_11, %c0_12] : memref<72x256xf32, #tpu.memory_space<vmem>>, vector<72x256xf32>
      tpu.vector_store %arg4[%c0_11, %c0_12], %12 {strides = array<i32>} : memref<72x256xf32, #tpu.memory_space<vmem>>, vector<72x256xf32>,
    } else {
    }
    %c0 = arith.constant 0 : index
    %c0_1 = arith.constant 0 : index
    %3 = vector.load %arg4[%c0, %c0_1] : memref<72x256xf32, #tpu.memory_space<vmem>>, vector<72x256xf32>
    %c0_2 = arith.constant 0 : index
    %c0_3 = arith.constant 0 : index
    %4 = vector.load %arg1[%c0_2, %c0_3] : memref<72x3456xf32, #tpu.memory_space<vmem>>, vector<72x3456xf32>
    %c0_4 = arith.constant 0 : index
    %c0_5 = arith.constant 0 : index
    %5 = vector.load %arg2[%c0_4, %c0_5] : memref<3456x256xf32, #tpu.memory_space<vmem>>, vector<3456x256xf32>
    %cst = arith.constant dense<0.000000e+00> : vector<72x256xf32>
    %6 = tpu.matmul %4, %5, %cst {dimension_numbers = #tpu.dot_dimension_numbers<[1], [0], [0], [1], [0, 0, 1, 1], [], []>} : vector<72x3456xf32>, vector<3456x256xf32>, vector<72x256xf32> -> vector<72x256xf32>
    %7 = arith.addf %3, %6 : vector<72x256xf32>
    %c0_6 = arith.constant 0 : index
    %c0_7 = arith.constant 0 : index
    %8 = vector.load %arg4[%c0_6, %c0_7] : memref<72x256xf32, #tpu.memory_space<vmem>>, vector<72x256xf32>
    tpu.vector_store %arg4[%c0_6, %c0_7], %7 {strides = array<i32>} : memref<72x256xf32, #tpu.memory_space<vmem>>, vector<72x256xf32>,
    return
  }
  func.func @transform_0(%arg0: i32) -> (i32, i32) {
    %c0_i32 = arith.constant 0 : i32
    %c0_i32_0 = arith.constant 0 : i32
    return %c0_i32, %arg0 : i32, i32
  }
  func.func @transform_1(%arg0: i32) -> (i32, i32) {
    %c0_i32 = arith.constant 0 : i32
    %c0_i32_0 = arith.constant 0 : i32
    return %arg0, %c0_i32 : i32, i32
  }
  func.func @transform_2(%arg0: i32) -> (i32, i32) {
    %c0_i32 = arith.constant 0 : i32
    %c0_i32_0 = arith.constant 0 : i32
    %c0_i32_1 = arith.constant 0 : i32
    return %c0_i32, %c0_i32_0 : i32, i32
  }
  func.func @transform_3(%arg0: i32) -> (i32, i32) {
    %c0_i32 = arith.constant 0 : i32
    %c0_i32_0 = arith.constant 0 : i32
    %c0_i32_1 = arith.constant 0 : i32
    return %c0_i32, %c0_i32_0 : i32, i32
  }
}

module attributes {stable_mosaic.version = 11 : i64} {
  func.func @_squash_kernel(%arg0: i32, %arg1: memref<8x2304xf32, #tpu.memory_space<vmem>>, %arg2: memref<8x2304xf32, #tpu.memory_space<vmem>>) attributes {dimension_semantics = [#tpu.dimension_semantics<arbitrary>], iteration_bounds = array<i64: 1>, scalar_prefetch = 0 : i64, scratch_operands = 0 : i64, tpu.core_type = #tpu.core_type<tc>, window_params = [{pipeline_mode = #tpu.pipeline_mode<synchronous>, transform_indices = @transform_0, window_bounds = array<i64: 8, 2304>}, {pipeline_mode = #tpu.pipeline_mode<synchronous>, transform_indices = @transform_1, window_bounds = array<i64: 8, 2304>}]} {
    %c0 = arith.constant 0 : index
    %c0_0 = arith.constant 0 : index
    %0 = vector.load %arg1[%c0, %c0_0] : memref<8x2304xf32, #tpu.memory_space<vmem>>, vector<8x2304xf32>
    %1 = arith.mulf %0, %0 : vector<8x2304xf32>
    %cst = arith.constant dense<0.000000e+00> : vector<2304xf32>
    %2 = vector.multi_reduction <add>, %1, %cst [0] : vector<8x2304xf32> to vector<2304xf32>
    %3 = vector.shape_cast %2 : vector<2304xf32> to vector<1x2304xf32>
    %cst_1 = arith.constant 1.000000e+00 : f32
    %4 = vector.broadcast %cst_1 : f32 to vector<1x2304xf32>
    %5 = arith.addf %4, %3 : vector<1x2304xf32>
    %6 = math.sqrt %3 : vector<1x2304xf32>
    %7 = arith.mulf %5, %6 : vector<1x2304xf32>
    %8 = arith.divf %3, %7 : vector<1x2304xf32>
    %9 = vector.broadcast %8 : vector<1x2304xf32> to vector<8x2304xf32>
    %10 = arith.mulf %0, %9 : vector<8x2304xf32>
    %c0_2 = arith.constant 0 : index
    %c0_3 = arith.constant 0 : index
    %11 = vector.load %arg2[%c0_2, %c0_3] : memref<8x2304xf32, #tpu.memory_space<vmem>>, vector<8x2304xf32>
    tpu.vector_store %arg2[%c0_2, %c0_3], %10 {strides = array<i32>} : memref<8x2304xf32, #tpu.memory_space<vmem>>, vector<8x2304xf32>,
    return
  }
  func.func @transform_0(%arg0: i32) -> (i32, i32) {
    %c0_i32 = arith.constant 0 : i32
    %c0_i32_0 = arith.constant 0 : i32
    %c0_i32_1 = arith.constant 0 : i32
    return %c0_i32, %c0_i32_0 : i32, i32
  }
  func.func @transform_1(%arg0: i32) -> (i32, i32) {
    %c0_i32 = arith.constant 0 : i32
    %c0_i32_0 = arith.constant 0 : i32
    %c0_i32_1 = arith.constant 0 : i32
    return %c0_i32, %c0_i32_0 : i32, i32
  }
}

</mosaic_0001>

<llo_original>
// kernel: forward_pallas.2
$region0: #{forward_pallas.2}
  #allocation0 [shape = 'u32[]', space=smem, size = 0x4, offset = 0x4, fixed_abs, tag = 'smem constant byte address 0x4 - core index']
  #allocation1 [shape = 'u32[144,128]{1,0:T(1,128)}', space=vmem, size = 0x12000, scoped, tag = 'internal scratch']
  %s0 = inlined_call_operand.vmem [shape: f32[72,20736], index: 0, kind: input, shape index: {}]
  %s1 = inlined_call_operand.vmem [shape: f32[20736,256], index: 1, kind: input, shape index: {}]
  %s2 = inlined_call_operand.vmem [shape: f32[1,256], index: 2, kind: input, shape index: {}]
  %s3 = inlined_call_operand.vmem [shape: f32[72,256], index: 3, kind: output, shape index: {}]
  %s4 = sld [smem:[#allocation0]]
  $region72: #{forward_pallas.2} parent=0
    _
  %s6 = ssub.s32 1, %s4
  %s7 = scalar_select 0, %s6, %s4
  $region1: #{forward_pallas.2} parent=0
    #allocation2 [shape = 'u8[1990656]{0}', space=vmem, size = 0x1e6000, scoped, tag = 'input window, operand 0']
    loop: start=0, step=1, limit=8
    $region2: #{forward_pallas.2} parent=1 // loop_pre_header
      _
    $region3: #{forward_pallas.2} parent=1 // loop_header
      %s9 = sphi 0, %s13
      %p10 = scmp.ge.s32.totalorder %s9, 8
      %s19 = sphi 0, %s21
      %s22 = sphi 0, %s19
      %s23 = sphi 0, %s22
      %s39 = sphi 0, %s23
      %s45 = sphi 0, %s47
      %s48 = sphi 0, %s45
      %s49 = sphi 0, %s48
      %s65 = sphi 0, %s49
      %s69 = sphi 0, %s69
      %s71 = sphi 0, %s69
      %s72 = sphi 0, %s71
      %s86 = sphi 0, %s72
      %s90 = sphi 0, %s90
      %s92 = sphi 0, %s90
      %s93 = sphi 0, %s92
      %s107 = sphi 0, %s93
    $region4: #{forward_pallas.2} parent=1 // loop_header_branch
      %12 = sbr.rel (%p10) target = $region8
    $region5: #{forward_pallas.2} parent=1 // loop_body
      %s14 = ssub.s32 %s9, 1
      %s15 = ssub.s32 %s9, 2
      %s16 = sadd.s32 %s9, 1
      %s17 = ssub.s32 %s9, %s16
      %p18 = scmp.eq.s32.totalorder %s17, 0
      %s20 = sadd.s32 %s19, 1
      %s21 = scalar_select %p18, %s19, %s20
      %p24 = pneg %p18
      %p25 = scmp.eq.s32.totalorder %s9, 5
      %p26 = por %p24, %p25
      %p27 = scmp.ne.s32.totalorder %s19, %s22
      %p28 = scmp.eq.s32.totalorder %s9, 0
      %p29 = por %p27, %p28
      %p30 = scmp.ne.s32.totalorder %s19, %s22
      %p31 = scmp.eq.s32.totalorder %s14, 5
      %p32 = por %p30, %p31
      %p33 = scmp.ne.s32.totalorder %s22, %s23
      %p34 = scmp.eq.s32.totalorder %s14, 0
      %p35 = por %p33, %p34
      %p36 = scmp.ne.s32.totalorder %s22, %s23
      %p37 = scmp.eq.s32.totalorder %s15, 5
      %p38 = por %p36, %p37
      %p40 = scmp.ne.s32.totalorder %s23, %s39
      %p41 = scmp.eq.s32.totalorder %s15, 0
      %p42 = por %p40, %p41
      %s43 = ssub.s32 %s9, %s16
      %p44 = scmp.eq.s32.totalorder %s43, 0
      %s46 = sadd.s32 %s45, 1
      %s47 = scalar_select %p44, %s45, %s46
      %p50 = pneg %p44
      %p51 = scmp.eq.s32.totalorder %s9, 5
      %p52 = por %p50, %p51
      %p53 = scmp.ne.s32.totalorder %s45, %s48
      %p54 = scmp.eq.s32.totalorder %s9, 0
      %p55 = por %p53, %p54
      %p56 = scmp.ne.s32.totalorder %s45, %s48
      %p57 = scmp.eq.s32.totalorder %s14, 5
      %p58 = por %p56, %p57
      %p59 = scmp.ne.s32.totalorder %s48, %s49
      %p60 = scmp.eq.s32.totalorder %s14, 0
      %p61 = por %p59, %p60
      %p62 = scmp.ne.s32.totalorder %s48, %s49
      %p63 = scmp.eq.s32.totalorder %s15, 5
      %p64 = por %p62, %p63
      %p66 = scmp.ne.s32.totalorder %s49, %s65
      %p67 = scmp.eq.s32.totalorder %s15, 0
      %p68 = por %p66, %p67
      %s70 = sadd.s32 %s69, 1
      %p73 = scmp.eq.s32.totalorder %s9, 5
      %p74 = scmp.ne.s32.totalorder %s69, %s71
      %p75 = scmp.eq.s32.totalorder %s9, 0
      %p76 = por %p74, %p75
      %p77 = scmp.ne.s32.totalorder %s69, %s71
      %p78 = scmp.eq.s32.totalorder %s14, 5
      %p79 = por %p77, %p78
      %p80 = scmp.ne.s32.totalorder %s71, %s72
      %p81 = scmp.eq.s32.totalorder %s14, 0
      %p82 = por %p80, %p81
      %p83 = scmp.ne.s32.totalorder %s71, %s72
      %p84 = scmp.eq.s32.totalorder %s15, 5
      %p85 = por %p83, %p84
      %p87 = scmp.ne.s32.totalorder %s72, %s86
      %p88 = scmp.eq.s32.totalorder %s15, 0
      %p89 = por %p87, %p88
      %s91 = sadd.s32 %s90, 1
      %p94 = scmp.eq.s32.totalorder %s9, 5
      %p95 = scmp.ne.s32.totalorder %s90, %s92
      %p96 = scmp.eq.s32.totalorder %s9, 0
      %p97 = por %p95, %p96
      %p98 = scmp.ne.s32.totalorder %s90, %s92
      %p99 = scmp.eq.s32.totalorder %s14, 5
      %p100 = por %p98, %p99
      %p101 = scmp.ne.s32.totalorder %s92, %s93
      %p102 = scmp.eq.s32.totalorder %s14, 0
      %p103 = por %p101, %p102
      %p104 = scmp.ne.s32.totalorder %s92, %s93
      %p105 = scmp.eq.s32.totalorder %s15, 5
      %p106 = por %p104, %p105
      %p108 = scmp.ne.s32.totalorder %s93, %s107
      %p109 = scmp.eq.s32.totalorder %s15, 0
      %p110 = por %p108, %p109
      %p111 = scmp.le.s32.totalorder 1, %s9
      %p112 = scmp.lt.s32.totalorder %s9, 7
      %p113 = pnand %p111, %p112
      %p114 = pneg %p113
      // Predicated region
      $region9: #{forward_pallas.2} parent=5 // pred_check
        _
      $region10: #{forward_pallas.2} parent=5 // pred_check_branch
        %116 = sbr.rel (%p113) target = $region12
      $region11: #{forward_pallas.2} parent=5 // pred_region
        %s117 = ssub.s32 %s9, 1
        // Predicated region
        $region13: #{forward_pallas.2} parent=11 // pred_check
          %p118 = pneg %p82
        $region14: #{forward_pallas.2} parent=11 // pred_check_branch
          %120 = sbr.rel (%p118) target = $region16
        $region15: #{forward_pallas.2} parent=11 // pred_region
          _
        $region16: #{forward_pallas.2} parent=11 // pred_fallthru
          _
      $region12: #{forward_pallas.2} parent=5 // pred_fallthru
        _
      %p121 = scmp.lt.s32.totalorder %s9, 6
      // Predicated region
      $region17: #{forward_pallas.2} parent=5 // pred_check
        %p122 = pneg %p121
      $region18: #{forward_pallas.2} parent=5 // pred_check_branch
        %124 = sbr.rel (%p122) target = $region20
      $region19: #{forward_pallas.2} parent=5 // pred_region
        // Predicated region
        $region21: #{forward_pallas.2} parent=19 // pred_check
          %p125 = pneg %p29
        $region22: #{forward_pallas.2} parent=19 // pred_check_branch
          %127 = sbr.rel (%p125) target = $region24
        $region23: #{forward_pallas.2} parent=19 // pred_region
          %s128 = sand.u32 %s19, 1
          %s129 = sand.u32 %s19, 1
          %s130 = smul.addr %s129, 1944
          %s131 = scalar_lea.vmem [#allocation2], %s130
          %s132 = smul.u32 27, %s9
          %s133 = smul.addr %s132, 8
          %s134 = scalar_lea.vmem %s0, %s133
          // Predicated region
          $region25: #{forward_pallas.2} parent=23 // pred_check
            _
          $region26: #{forward_pallas.2} parent=23 // pred_check_branch
            %136 = sbr.rel (0) target = $region28
          $region27: #{forward_pallas.2} parent=23 // pred_region
            // Predicated region
            $region29: #{forward_pallas.2} parent=27 // pred_check
              _
            $region30: #{forward_pallas.2} parent=27 // pred_check_branch
              %138 = sbr.rel (0) target = $region32
            $region31: #{forward_pallas.2} parent=27 // pred_region
              loop: start=0, step=1, limit=1
              $region33: #{forward_pallas.2} parent=31 // loop_pre_header
                _
              $region34: #{forward_pallas.2} parent=31 // loop_header
                %s140 = sphi 0, %s144
                %p141 = scmp.ge.s32.totalorder %s140, 1
                %s145 = sphi %s134, %s134
                %s146 = sphi %s131, %s131
              $region35: #{forward_pallas.2} parent=31 // loop_header_branch
                %143 = sbr.rel (%p141) target = $region39
              $region36: #{forward_pallas.2} parent=31 // loop_body
                %v147 = vld [vmem:[%s145] sm:$0xff]
                %148 = vst [vmem:[%s146] sm:$0xff] %v147
                %v149 = vld [vmem:[%s145 + $0x8] sm:$0xff]
                %150 = vst [vmem:[%s146 + $0x8] sm:$0xff] %v149
                %v151 = vld [vmem:[%s145 + $0x10] sm:$0xff]
                %152 = vst [vmem:[%s146 + $0x10] sm:$0xff] %v151
                %v153 = vld [vmem:[%s145 + $0x18] sm:$0xff]
                %154 = vst [vmem:[%s146 + $0x18] sm:$0xff] %v153
                %v155 = vld [vmem:[%s145 + $0x20] sm:$0xff]
                %156 = vst [vmem:[%s146 + $0x20] sm:$0xff] %v155
                %v157 = vld [vmem:[%s145 + $0x28] sm:$0xff]
                %158 = vst [vmem:[%s146 + $0x28] sm:$0xff] %v157
                %v159 = vld [vmem:[%s145 + $0x30] sm:$0xff]
                %160 = vst [vmem:[%s146 + $0x30] sm:$0xff] %v159
                %v161 = vld [vmem:[%s145 + $0x38] sm:$0xff]
                %162 = vst [vmem:[%s146 + $0x38] sm:$0xff] %v161
                %v163 = vld [vmem:[%s145 + $0x40] sm:$0xff]
                %164 = vst [vmem:[%s146 + $0x40] sm:$0xff] %v163
                %v165 = vld [vmem:[%s145 + $0x48] sm:$0xff]
                %166 = vst [vmem:[%s146 + $0x48] sm:$0xff] %v165
                %v167 = vld [vmem:[%s145 + $0x50] sm:$0xff]
                %168 = vst [vmem:[%s146 + $0x50] sm:$0xff] %v167
                %v169 = vld [vmem:[%s145 + $0x58] sm:$0xff]
                %170 = vst [vmem:[%s146 + $0x58] sm:$0xff] %v169
                %v171 = vld [vmem:[%s145 + $0x60] sm:$0xff]
                %172 = vst [vmem:[%s146 + $0x60] sm:$0xff] %v171
                %v173 = vld [vmem:[%s145 + $0x68] sm:$0xff]
                %174 = vst [vmem:[%s146 + $0x68] sm:$0xff] %v173
                %v175 = vld [vmem:[%s145 + $0x70] sm:$0xff]
                %176 = vst [vmem:[%s146 + $0x70] sm:$0xff] %v175
                %v177 = vld [vmem:[%s145 + $0x78] sm:$0xff]
                %178 = vst [vmem:[%s146 + $0x78] sm:$0xff] %v177
                %v179 = vld [vmem:[%s145 + $0x80] sm:$0xff]
                %180 = vst [vmem:[%s146 + $0x80] sm:$0xff] %v179
                %v181 = vld [vmem:[%s145 + $0x88] sm:$0xff]
                %182 = vst [vmem:[%s146 + $0x88] sm:$0xff] %v181
                %v183 = vld [vmem:[%s145 + $0x90] sm:$0xff]
                %184 = vst [vmem:[%s146 + $0x90] sm:$0xff] %v183
                %v185 = vld [vmem:[%s145 + $0x98] sm:$0xff]
                %186 = vst [vmem:[%s146 + $0x98] sm:$0xff] %v185
                %v187 = vld [vmem:[%s145 + $0xa0] sm:$0xff]
                %188 = vst [vmem:[%s146 + $0xa0] sm:$0xff] %v187
                %v189 = vld [vmem:[%s145 + $0xa8] sm:$0xff]
                %190 = vst [vmem:[%s146 + $0xa8] sm:$0xff] %v189
                %v191 = vld [vmem:[%s145 + $0xb0] sm:$0xff]
                %192 = vst [vmem:[%s146 + $0xb0] sm:$0xff] %v191
                %v193 = vld [vmem:[%s145 + $0xb8] sm:$0xff]
                %194 = vst [vmem:[%s146 + $0xb8] sm:$0xff] %v193
                %v195 = vld [vmem:[%s145 + $0xc0] sm:$0xff]
                %196 = vst [vmem:[%s146 + $0xc0] sm:$0xff] %v195
                %v197 = vld [vmem:[%s145 + $0xc8] sm:$0xff]
                %198 = vst [vmem:[%s146 + $0xc8] sm:$0xff] %v197
                %v199 = vld [vmem:[%s145 + $0xd0] sm:$0xff]
                %200 = vst [vmem:[%s146 + $0xd0] sm:$0xff] %v199
                %v201 = vld [vmem:[%s145 + $0x510] sm:$0xff]
                %202 = vst [vmem:[%s146 + $0xd8] sm:$0xff] %v201
                %v203 = vld [vmem:[%s145 + $0x518] sm:$0xff]
                %204 = vst [vmem:[%s146 + $0xe0] sm:$0xff] %v203
                %v205 = vld [vmem:[%s145 + $0x520] sm:$0xff]
                %206 = vst [vmem:[%s146 + $0xe8] sm:$0xff] %v205
                %v207 = vld [vmem:[%s145 + $0x528] sm:$0xff]
                %208 = vst [vmem:[%s146 + $0xf0] sm:$0xff] %v207
                %v209 = vld [vmem:[%s145 + $0x530] sm:$0xff]
                %210 = vst [vmem:[%s146 + $0xf8] sm:$0xff] %v209
                %v211 = vld [vmem:[%s145 + $0x538] sm:$0xff]
                %212 = vst [vmem:[%s146 + $0x100] sm:$0xff] %v211
                %v213 = vld [vmem:[%s145 + $0x540] sm:$0xff]
                %214 = vst [vmem:[%s146 + $0x108] sm:$0xff] %v213
                %v215 = vld [vmem:[%s145 + $0x548] sm:$0xff]
                %216 = vst [vmem:[%s146 + $0x110] sm:$0xff] %v215
                %v217 = vld [vmem:[%s145 + $0x550] sm:$0xff]
                %218 = vst [vmem:[%s146 + $0x118] sm:$0xff] %v217
                %v219 = vld [vmem:[%s145 + $0x558] sm:$0xff]
                %220 = vst [vmem:[%s146 + $0x120] sm:$0xff] %v219
                %v221 = vld [vmem:[%s145 + $0x560] sm:$0xff]
                %222 = vst [vmem:[%s146 + $0x128] sm:$0xff] %v221
                %v223 = vld [vmem:[%s145 + $0x568] sm:$0xff]
                %224 = vst [vmem:[%s146 + $0x130] sm:$0xff] %v223
                %v225 = vld [vmem:[%s145 + $0x570] sm:$0xff]
                %226 = vst [vmem:[%s146 + $0x138] sm:$0xff] %v225
                %v227 = vld [vmem:[%s145 + $0x578] sm:$0xff]
                %228 = vst [vmem:[%s146 + $0x140] sm:$0xff] %v227
                %v229 = vld [vmem:[%s145 + $0x580] sm:$0xff]
                %230 = vst [vmem:[%s146 + $0x148] sm:$0xff] %v229
                %v231 = vld [vmem:[%s145 + $0x588] sm:$0xff]
                %232 = vst [vmem:[%s146 + $0x150] sm:$0xff] %v231
                %v233 = vld [vmem:[%s145 + $0x590] sm:$0xff]
                %234 = vst [vmem:[%s146 + $0x158] sm:$0xff] %v233
                %v235 = vld [vmem:[%s145 + $0x598] sm:$0xff]
                %236 = vst [vmem:[%s146 + $0x160] sm:$0xff] %v235
                %v237 = vld [vmem:[%s145 + $0x5a0] sm:$0xff]
                %238 = vst [vmem:[%s146 + $0x168] sm:$0xff] %v237
                %v239 = vld [vmem:[%s145 + $0x5a8] sm:$0xff]
                %240 = vst [vmem:[%s146 + $0x170] sm:$0xff] %v239
                %v241 = vld [vmem:[%s145 + $0x5b0] sm:$0xff]
                %242 = vst [vmem:[%s146 + $0x178] sm:$0xff] %v241
                %v243 = vld [vmem:[%s145 + $0x5b8] sm:$0xff]
                %244 = vst [vmem:[%s146 + $0x180] sm:$0xff] %v243
                %v245 = vld [vmem:[%s145 + $0x5c0] sm:$0xff]
                %246 = vst [vmem:[%s146 + $0x188] sm:$0xff] %v245
                %v247 = vld [vmem:[%s145 + $0x5c8] sm:$0xff]
                %248 = vst [vmem:[%s146 + $0x190] sm:$0xff] %v247
                %v249 = vld [vmem:[%s145 + $0x5d0] sm:$0xff]
                %250 = vst [vmem:[%s146 + $0x198] sm:$0xff] %v249
                %v251 = vld [vmem:[%s145 + $0x5d8] sm:$0xff]
                %252 = vst [vmem:[%s146 + $0x1a0] sm:$0xff] %v251
                %v253 = vld [vmem:[%s145 + $0x5e0] sm:$0xff]
                %254 = vst [vmem:[%s146 + $0x1a8] sm:$0xff] %v253
                %v255 = vld [vmem:[%s145 + $0xa20] sm:$0xff]
                %256 = vst [vmem:[%s146 + $0x1b0] sm:$0xff] %v255
                %v257 = vld [vmem:[%s145 + $0xa28] sm:$0xff]
                %258 = vst [vmem:[%s146 + $0x1b8] sm:$0xff] %v257
                %v259 = vld [vmem:[%s145 + $0xa30] sm:$0xff]
                %260 = vst [vmem:[%s146 + $0x1c0] sm:$0xff] %v259
                %v261 = vld [vmem:[%s145 + $0xa38] sm:$0xff]
                %262 = vst [vmem:[%s146 + $0x1c8] sm:$0xff] %v261
                %v263 = vld [vmem:[%s145 + $0xa40] sm:$0xff]
                %264 = vst [vmem:[%s146 + $0x1d0] sm:$0xff] %v263
                %v265 = vld [vmem:[%s145 + $0xa48] sm:$0xff]
                %266 = vst [vmem:[%s146 + $0x1d8] sm:$0xff] %v265
                %v267 = vld [vmem:[%s145 + $0xa50] sm:$0xff]
                %268 = vst [vmem:[%s146 + $0x1e0] sm:$0xff] %v267
                %v269 = vld [vmem:[%s145 + $0xa58] sm:$0xff]
                %270 = vst [vmem:[%s146 + $0x1e8] sm:$0xff] %v269
                %v271 = vld [vmem:[%s145 + $0xa60] sm:$0xff]
                %272 = vst [vmem:[%s146 + $0x1f0] sm:$0xff] %v271
                %v273 = vld [vmem:[%s145 + $0xa68] sm:$0xff]
                %274 = vst [vmem:[%s146 + $0x1f8] sm:$0xff] %v273
                %v275 = vld [vmem:[%s145 + $0xa70] sm:$0xff]
                %276 = vst [vmem:[%s146 + $0x200] sm:$0xff] %v275
                %v277 = vld [vmem:[%s145 + $0xa78] sm:$0xff]
                %278 = vst [vmem:[%s146 + $0x208] sm:$0xff] %v277
                %v279 = vld [vmem:[%s145 + $0xa80] sm:$0xff]
                %280 = vst [vmem:[%s146 + $0x210] sm:$0xff] %v279
                %v281 = vld [vmem:[%s145 + $0xa88] sm:$0xff]
                %282 = vst [vmem:[%s146 + $0x218] sm:$0xff] %v281
                %v283 = vld [vmem:[%s145 + $0xa90] sm:$0xff]
                %284 = vst [vmem:[%s146 + $0x220] sm:$0xff] %v283
                %v285 = vld [vmem:[%s145 + $0xa98] sm:$0xff]
                %286 = vst [vmem:[%s146 + $0x228] sm:$0xff] %v285
                %v287 = vld [vmem:[%s145 + $0xaa0] sm:$0xff]
                %288 = vst [vmem:[%s146 + $0x230] sm:$0xff] %v287
                %v289 = vld [vmem:[%s145 + $0xaa8] sm:$0xff]
                %290 = vst [vmem:[%s146 + $0x238] sm:$0xff] %v289
                %v291 = vld [vmem:[%s145 + $0xab0] sm:$0xff]
                %292 = vst [vmem:[%s146 + $0x240] sm:$0xff] %v291
                %v293 = vld [vmem:[%s145 + $0xab8] sm:$0xff]
                %294 = vst [vmem:[%s146 + $0x248] sm:$0xff] %v293
                %v295 = vld [vmem:[%s145 + $0xac0] sm:$0xff]
                %296 = vst [vmem:[%s146 + $0x250] sm:$0xff] %v295
                %v297 = vld [vmem:[%s145 + $0xac8] sm:$0xff]
                %298 = vst [vmem:[%s146 + $0x258] sm:$0xff] %v297
                %v299 = vld [vmem:[%s145 + $0xad0] sm:$0xff]
                %300 = vst [vmem:[%s146 + $0x260] sm:$0xff] %v299
                %v301 = vld [vmem:[%s145 + $0xad8] sm:$0xff]
                %302 = vst [vmem:[%s146 + $0x268] sm:$0xff] %v301
                %v303 = vld [vmem:[%s145 + $0xae0] sm:$0xff]
                %304 = vst [vmem:[%s146 + $0x270] sm:$0xff] %v303
                %v305 = vld [vmem:[%s145 + $0xae8] sm:$0xff]
                %306 = vst [vmem:[%s146 + $0x278] sm:$0xff] %v305
                %v307 = vld [vmem:[%s145 + $0xaf0] sm:$0xff]
                %308 = vst [vmem:[%s146 + $0x280] sm:$0xff] %v307
                %v309 = vld [vmem:[%s145 + $0xf30] sm:$0xff]
                %310 = vst [vmem:[%s146 + $0x288] sm:$0xff] %v309
                %v311 = vld [vmem:[%s145 + $0xf38] sm:$0xff]
                %312 = vst [vmem:[%s146 + $0x290] sm:$0xff] %v311
                %v313 = vld [vmem:[%s145 + $0xf40] sm:$0xff]
                %314 = vst [vmem:[%s146 + $0x298] sm:$0xff] %v313
                %v315 = vld [vmem:[%s145 + $0xf48] sm:$0xff]
                %316 = vst [vmem:[%s146 + $0x2a0] sm:$0xff] %v315
                %v317 = vld [vmem:[%s145 + $0xf50] sm:$0xff]
                %318 = vst [vmem:[%s146 + $0x2a8] sm:$0xff] %v317
                %v319 = vld [vmem:[%s145 + $0xf58] sm:$0xff]
                %320 = vst [vmem:[%s146 + $0x2b0] sm:$0xff] %v319
                %v321 = vld [vmem:[%s145 + $0xf60] sm:$0xff]
                %322 = vst [vmem:[%s146 + $0x2b8] sm:$0xff] %v321
                %v323 = vld [vmem:[%s145 + $0xf68] sm:$0xff]
                %324 = vst [vmem:[%s146 + $0x2c0] sm:$0xff] %v323
                %v325 = vld [vmem:[%s145 + $0xf70] sm:$0xff]
                %326 = vst [vmem:[%s146 + $0x2c8] sm:$0xff] %v325
                %v327 = vld [vmem:[%s145 + $0xf78] sm:$0xff]
                %328 = vst [vmem:[%s146 + $0x2d0] sm:$0xff] %v327
                %v329 = vld [vmem:[%s145 + $0xf80] sm:$0xff]
                %330 = vst [vmem:[%s146 + $0x2d8] sm:$0xff] %v329
                %v331 = vld [vmem:[%s145 + $0xf88] sm:$0xff]
                %332 = vst [vmem:[%s146 + $0x2e0] sm:$0xff] %v331
                %v333 = vld [vmem:[%s145 + $0xf90] sm:$0xff]
                %334 = vst [vmem:[%s146 + $0x2e8] sm:$0xff] %v333
                %v335 = vld [vmem:[%s145 + $0xf98] sm:$0xff]
                %336 = vst [vmem:[%s146 + $0x2f0] sm:$0xff] %v335
                %v337 = vld [vmem:[%s145 + $0xfa0] sm:$0xff]
                %338 = vst [vmem:[%s146 + $0x2f8] sm:$0xff] %v337
                %v339 = vld [vmem:[%s145 + $0xfa8] sm:$0xff]
                %340 = vst [vmem:[%s146 + $0x300] sm:$0xff] %v339
                %v341 = vld [vmem:[%s145 + $0xfb0] sm:$0xff]
                %342 = vst [vmem:[%s146 + $0x308] sm:$0xff] %v341
                %v343 = vld [vmem:[%s145 + $0xfb8] sm:$0xff]
                %344 = vst [vmem:[%s146 + $0x310] sm:$0xff] %v343
                %v345 = vld [vmem:[%s145 + $0xfc0] sm:$0xff]
                %346 = vst [vmem:[%s146 + $0x318] sm:$0xff] %v345
                %v347 = vld [vmem:[%s145 + $0xfc8] sm:$0xff]
                %348 = vst [vmem:[%s146 + $0x320] sm:$0xff] %v347
                %v349 = vld [vmem:[%s145 + $0xfd0] sm:$0xff]
                %350 = vst [vmem:[%s146 + $0x328] sm:$0xff] %v349
                %v351 = vld [vmem:[%s145 + $0xfd8] sm:$0xff]
                %352 = vst [vmem:[%s146 + $0x330] sm:$0xff] %v351
                %v353 = vld [vmem:[%s145 + $0xfe0] sm:$0xff]
                %354 = vst [vmem:[%s146 + $0x338] sm:$0xff] %v353
                %v355 = vld [vmem:[%s145 + $0xfe8] sm:$0xff]
                %356 = vst [vmem:[%s146 + $0x340] sm:$0xff] %v355
                %v357 = vld [vmem:[%s145 + $0xff0] sm:$0xff]
                %358 = vst [vmem:[%s146 + $0x348] sm:$0xff] %v357
                %v359 = vld [vmem:[%s145 + $0xff8] sm:$0xff]
                %360 = vst [vmem:[%s146 + $0x350] sm:$0xff] %v359
                %v361 = vld [vmem:[%s145 + $0x1000] sm:$0xff]
                %362 = vst [vmem:[%s146 + $0x358] sm:$0xff] %v361
                %v363 = vld [vmem:[%s145 + $0x1440] sm:$0xff]
                %364 = vst [vmem:[%s146 + $0x360] sm:$0xff] %v363
                %v365 = vld [vmem:[%s145 + $0x1448] sm:$0xff]
                %366 = vst [vmem:[%s146 + $0x368] sm:$0xff] %v365
                %v367 = vld [vmem:[%s145 + $0x1450] sm:$0xff]
                %368 = vst [vmem:[%s146 + $0x370] sm:$0xff] %v367
                %v369 = vld [vmem:[%s145 + $0x1458] sm:$0xff]
                %370 = vst [vmem:[%s146 + $0x378] sm:$0xff] %v369
                %v371 = vld [vmem:[%s145 + $0x1460] sm:$0xff]
                %372 = vst [vmem:[%s146 + $0x380] sm:$0xff] %v371
                %v373 = vld [vmem:[%s145 + $0x1468] sm:$0xff]
                %374 = vst [vmem:[%s146 + $0x388] sm:$0xff] %v373
                %v375 = vld [vmem:[%s145 + $0x1470] sm:$0xff]
                %376 = vst [vmem:[%s146 + $0x390] sm:$0xff] %v375
                %v377 = vld [vmem:[%s145 + $0x1478] sm:$0xff]
                %378 = vst [vmem:[%s146 + $0x398] sm:$0xff] %v377
                %v379 = vld [vmem:[%s145 + $0x1480] sm:$0xff]
                %380 = vst [vmem:[%s146 + $0x3a0] sm:$0xff] %v379
                %v381 = vld [vmem:[%s145 + $0x1488] sm:$0xff]
                %382 = vst [vmem:[%s146 + $0x3a8] sm:$0xff] %v381
                %v383 = vld [vmem:[%s145 + $0x1490] sm:$0xff]
                %384 = vst [vmem:[%s146 + $0x3b0] sm:$0xff] %v383
                %v385 = vld [vmem:[%s145 + $0x1498] sm:$0xff]
                %386 = vst [vmem:[%s146 + $0x3b8] sm:$0xff] %v385
                %v387 = vld [vmem:[%s145 + $0x14a0] sm:$0xff]
                %388 = vst [vmem:[%s146 + $0x3c0] sm:$0xff] %v387
                %v389 = vld [vmem:[%s145 + $0x14a8] sm:$0xff]
                %390 = vst [vmem:[%s146 + $0x3c8] sm:$0xff] %v389
                %v391 = vld [vmem:[%s145 + $0x14b0] sm:$0xff]
                %392 = vst [vmem:[%s146 + $0x3d0] sm:$0xff] %v391
                %v393 = vld [vmem:[%s145 + $0x14b8] sm:$0xff]
                %394 = vst [vmem:[%s146 + $0x3d8] sm:$0xff] %v393
                %v395 = vld [vmem:[%s145 + $0x14c0] sm:$0xff]
                %396 = vst [vmem:[%s146 + $0x3e0] sm:$0xff] %v395
                %v397 = vld [vmem:[%s145 + $0x14c8] sm:$0xff]
                %398 = vst [vmem:[%s146 + $0x3e8] sm:$0xff] %v397
                %v399 = vld [vmem:[%s145 + $0x14d0] sm:$0xff]
                %400 = vst [vmem:[%s146 + $0x3f0] sm:$0xff] %v399
                %v401 = vld [vmem:[%s145 + $0x14d8] sm:$0xff]
                %402 = vst [vmem:[%s146 + $0x3f8] sm:$0xff] %v401
                %v403 = vld [vmem:[%s145 + $0x14e0] sm:$0xff]
                %404 = vst [vmem:[%s146 + $0x400] sm:$0xff] %v403
                %v405 = vld [vmem:[%s145 + $0x14e8] sm:$0xff]
                %406 = vst [vmem:[%s146 + $0x408] sm:$0xff] %v405
                %v407 = vld [vmem:[%s145 + $0x14f0] sm:$0xff]
                %408 = vst [vmem:[%s146 + $0x410] sm:$0xff] %v407
                %v409 = vld [vmem:[%s145 + $0x14f8] sm:$0xff]
                %410 = vst [vmem:[%s146 + $0x418] sm:$0xff] %v409
                %v411 = vld [vmem:[%s145 + $0x1500] sm:$0xff]
                %412 = vst [vmem:[%s146 + $0x420] sm:$0xff] %v411
                %v413 = vld [vmem:[%s145 + $0x1508] sm:$0xff]
                %414 = vst [vmem:[%s146 + $0x428] sm:$0xff] %v413
                %v415 = vld [vmem:[%s145 + $0x1510] sm:$0xff]
                %416 = vst [vmem:[%s146 + $0x430] sm:$0xff] %v415
                %v417 = vld [vmem:[%s145 + $0x1950] sm:$0xff]
                %418 = vst [vmem:[%s146 + $0x438] sm:$0xff] %v417
                %v419 = vld [vmem:[%s145 + $0x1958] sm:$0xff]
                %420 = vst [vmem:[%s146 + $0x440] sm:$0xff] %v419
                %v421 = vld [vmem:[%s145 + $0x1960] sm:$0xff]
                %422 = vst [vmem:[%s146 + $0x448] sm:$0xff] %v421
                %v423 = vld [vmem:[%s145 + $0x1968] sm:$0xff]
                %424 = vst [vmem:[%s146 + $0x450] sm:$0xff] %v423
                %v425 = vld [vmem:[%s145 + $0x1970] sm:$0xff]
                %426 = vst [vmem:[%s146 + $0x458] sm:$0xff] %v425
                %v427 = vld [vmem:[%s145 + $0x1978] sm:$0xff]
                %428 = vst [vmem:[%s146 + $0x460] sm:$0xff] %v427
                %v429 = vld [vmem:[%s145 + $0x1980] sm:$0xff]
                %430 = vst [vmem:[%s146 + $0x468] sm:$0xff] %v429
                %v431 = vld [vmem:[%s145 + $0x1988] sm:$0xff]
                %432 = vst [vmem:[%s146 + $0x470] sm:$0xff] %v431
                %v433 = vld [vmem:[%s145 + $0x1990] sm:$0xff]
                %434 = vst [vmem:[%s146 + $0x478] sm:$0xff] %v433
                %v435 = vld [vmem:[%s145 + $0x1998] sm:$0xff]
                %436 = vst [vmem:[%s146 + $0x480] sm:$0xff] %v435
                %v437 = vld [vmem:[%s145 + $0x19a0] sm:$0xff]
                %438 = vst [vmem:[%s146 + $0x488] sm:$0xff] %v437
                %v439 = vld [vmem:[%s145 + $0x19a8] sm:$0xff]
                %440 = vst [vmem:[%s146 + $0x490] sm:$0xff] %v439
                %v441 = vld [vmem:[%s145 + $0x19b0] sm:$0xff]
                %442 = vst [vmem:[%s146 + $0x498] sm:$0xff] %v441
                %v443 = vld [vmem:[%s145 + $0x19b8] sm:$0xff]
                %444 = vst [vmem:[%s146 + $0x4a0] sm:$0xff] %v443
                %v445 = vld [vmem:[%s145 + $0x19c0] sm:$0xff]
                %446 = vst [vmem:[%s146 + $0x4a8] sm:$0xff] %v445
                %v447 = vld [vmem:[%s145 + $0x19c8] sm:$0xff]
                %448 = vst [vmem:[%s146 + $0x4b0] sm:$0xff] %v447
                %v449 = vld [vmem:[%s145 + $0x19d0] sm:$0xff]
                %450 = vst [vmem:[%s146 + $0x4b8] sm:$0xff] %v449
                %v451 = vld [vmem:[%s145 + $0x19d8] sm:$0xff]
                %452 = vst [vmem:[%s146 + $0x4c0] sm:$0xff] %v451
                %v453 = vld [vmem:[%s145 + $0x19e0] sm:$0xff]
                %454 = vst [vmem:[%s146 + $0x4c8] sm:$0xff] %v453
                %v455 = vld [vmem:[%s145 + $0x19e8] sm:$0xff]
                %456 = vst [vmem:[%s146 + $0x4d0] sm:$0xff] %v455
                %v457 = vld [vmem:[%s145 + $0x19f0] sm:$0xff]
                %458 = vst [vmem:[%s146 + $0x4d8] sm:$0xff] %v457
                %v459 = vld [vmem:[%s145 + $0x19f8] sm:$0xff]
                %460 = vst [vmem:[%s146 + $0x4e0] sm:$0xff] %v459
                %v461 = vld [vmem:[%s145 + $0x1a00] sm:$0xff]
                %462 = vst [vmem:[%s146 + $0x4e8] sm:$0xff] %v461
                %v463 = vld [vmem:[%s145 + $0x1a08] sm:$0xff]
                %464 = vst [vmem:[%s146 + $0x4f0] sm:$0xff] %v463
                %v465 = vld [vmem:[%s145 + $0x1a10] sm:$0xff]
                %466 = vst [vmem:[%s146 + $0x4f8] sm:$0xff] %v465
                %v467 = vld [vmem:[%s145 + $0x1a18] sm:$0xff]
                %468 = vst [vmem:[%s146 + $0x500] sm:$0xff] %v467
                %v469 = vld [vmem:[%s145 + $0x1a20] sm:$0xff]
                %470 = vst [vmem:[%s146 + $0x508] sm:$0xff] %v469
                %v471 = vld [vmem:[%s145 + $0x1e60] sm:$0xff]
                %472 = vst [vmem:[%s146 + $0x510] sm:$0xff] %v471
                %v473 = vld [vmem:[%s145 + $0x1e68] sm:$0xff]
                %474 = vst [vmem:[%s146 + $0x518] sm:$0xff] %v473
                %v475 = vld [vmem:[%s145 + $0x1e70] sm:$0xff]
                %476 = vst [vmem:[%s146 + $0x520] sm:$0xff] %v475
                %v477 = vld [vmem:[%s145 + $0x1e78] sm:$0xff]
                %478 = vst [vmem:[%s146 + $0x528] sm:$0xff] %v477
                %v479 = vld [vmem:[%s145 + $0x1e80] sm:$0xff]
                %480 = vst [vmem:[%s146 + $0x530] sm:$0xff] %v479
                %v481 = vld [vmem:[%s145 + $0x1e88] sm:$0xff]
                %482 = vst [vmem:[%s146 + $0x538] sm:$0xff] %v481
                %v483 = vld [vmem:[%s145 + $0x1e90] sm:$0xff]
                %484 = vst [vmem:[%s146 + $0x540] sm:$0xff] %v483
                %v485 = vld [vmem:[%s145 + $0x1e98] sm:$0xff]
                %486 = vst [vmem:[%s146 + $0x548] sm:$0xff] %v485
                %v487 = vld [vmem:[%s145 + $0x1ea0] sm:$0xff]
                %488 = vst [vmem:[%s146 + $0x550] sm:$0xff] %v487
                %v489 = vld [vmem:[%s145 + $0x1ea8] sm:$0xff]
                %490 = vst [vmem:[%s146 + $0x558] sm:$0xff] %v489
                %v491 = vld [vmem:[%s145 + $0x1eb0] sm:$0xff]
                %492 = vst [vmem:[%s146 + $0x560] sm:$0xff] %v491
                %v493 = vld [vmem:[%s145 + $0x1eb8] sm:$0xff]
                %494 = vst [vmem:[%s146 + $0x568] sm:$0xff] %v493
                %v495 = vld [vmem:[%s145 + $0x1ec0] sm:$0xff]
                %496 = vst [vmem:[%s146 + $0x570] sm:$0xff] %v495
                %v497 = vld [vmem:[%s145 + $0x1ec8] sm:$0xff]
                %498 = vst [vmem:[%s146 + $0x578] sm:$0xff] %v497
                %v499 = vld [vmem:[%s145 + $0x1ed0] sm:$0xff]
                %500 = vst [vmem:[%s146 + $0x580] sm:$0xff] %v499
                %v501 = vld [vmem:[%s145 + $0x1ed8] sm:$0xff]
                %502 = vst [vmem:[%s146 + $0x588] sm:$0xff] %v501
                %v503 = vld [vmem:[%s145 + $0x1ee0] sm:$0xff]
                %504 = vst [vmem:[%s146 + $0x590] sm:$0xff] %v503
                %v505 = vld [vmem:[%s145 + $0x1ee8] sm:$0xff]
                %506 = vst [vmem:[%s146 + $0x598] sm:$0xff] %v505
                %v507 = vld [vmem:[%s145 + $0x1ef0] sm:$0xff]
                %508 = vst [vmem:[%s146 + $0x5a0] sm:$0xff] %v507
                %v509 = vld [vmem:[%s145 + $0x1ef8] sm:$0xff]
                %510 = vst [vmem:[%s146 + $0x5a8] sm:$0xff] %v509
                %v511 = vld [vmem:[%s145 + $0x1f00] sm:$0xff]
                %512 = vst [vmem:[%s146 + $0x5b0] sm:$0xff] %v511
                %v513 = vld [vmem:[%s145 + $0x1f08] sm:$0xff]
                %514 = vst [vmem:[%s146 + $0x5b8] sm:$0xff] %v513
                %v515 = vld [vmem:[%s145 + $0x1f10] sm:$0xff]
                %516 = vst [vmem:[%s146 + $0x5c0] sm:$0xff] %v515
                %v517 = vld [vmem:[%s145 + $0x1f18] sm:$0xff]
                %518 = vst [vmem:[%s146 + $0x5c8] sm:$0xff] %v517
                %v519 = vld [vmem:[%s145 + $0x1f20] sm:$0xff]
                %520 = vst [vmem:[%s146 + $0x5d0] sm:$0xff] %v519
                %v521 = vld [vmem:[%s145 + $0x1f28] sm:$0xff]
                %522 = vst [vmem:[%s146 + $0x5d8] sm:$0xff] %v521
                %v523 = vld [vmem:[%s145 + $0x1f30] sm:$0xff]
                %524 = vst [vmem:[%s146 + $0x5e0] sm:$0xff] %v523
                %v525 = vld [vmem:[%s145 + $0x2370] sm:$0xff]
                %526 = vst [vmem:[%s146 + $0x5e8] sm:$0xff] %v525
                %v527 = vld [vmem:[%s145 + $0x2378] sm:$0xff]
                %528 = vst [vmem:[%s146 + $0x5f0] sm:$0xff] %v527
                %v529 = vld [vmem:[%s145 + $0x2380] sm:$0xff]
                %530 = vst [vmem:[%s146 + $0x5f8] sm:$0xff] %v529
                %v531 = vld [vmem:[%s145 + $0x2388] sm:$0xff]
                %532 = vst [vmem:[%s146 + $0x600] sm:$0xff] %v531
                %v533 = vld [vmem:[%s145 + $0x2390] sm:$0xff]
                %534 = vst [vmem:[%s146 + $0x608] sm:$0xff] %v533
                %v535 = vld [vmem:[%s145 + $0x2398] sm:$0xff]
                %536 = vst [vmem:[%s146 + $0x610] sm:$0xff] %v535
                %v537 = vld [vmem:[%s145 + $0x23a0] sm:$0xff]
                %538 = vst [vmem:[%s146 + $0x618] sm:$0xff] %v537
                %v539 = vld [vmem:[%s145 + $0x23a8] sm:$0xff]
                %540 = vst [vmem:[%s146 + $0x620] sm:$0xff] %v539
                %v541 = vld [vmem:[%s145 + $0x23b0] sm:$0xff]
                %542 = vst [vmem:[%s146 + $0x628] sm:$0xff] %v541
                %v543 = vld [vmem:[%s145 + $0x23b8] sm:$0xff]
                %544 = vst [vmem:[%s146 + $0x630] sm:$0xff] %v543
                %v545 = vld [vmem:[%s145 + $0x23c0] sm:$0xff]
                %546 = vst [vmem:[%s146 + $0x638] sm:$0xff] %v545
                %v547 = vld [vmem:[%s145 + $0x23c8] sm:$0xff]
                %548 = vst [vmem:[%s146 + $0x640] sm:$0xff] %v547
                %v549 = vld [vmem:[%s145 + $0x23d0] sm:$0xff]
                %550 = vst [vmem:[%s146 + $0x648] sm:$0xff] %v549
                %v551 = vld [vmem:[%s145 + $0x23d8] sm:$0xff]
                %552 = vst [vmem:[%s146 + $0x650] sm:$0xff] %v551
                %v553 = vld [vmem:[%s145 + $0x23e0] sm:$0xff]
                %554 = vst [vmem:[%s146 + $0x658] sm:$0xff] %v553
                %v555 = vld [vmem:[%s145 + $0x23e8] sm:$0xff]
                %556 = vst [vmem:[%s146 + $0x660] sm:$0xff] %v555
                %v557 = vld [vmem:[%s145 + $0x23f0] sm:$0xff]
                %558 = vst [vmem:[%s146 + $0x668] sm:$0xff] %v557
                %v559 = vld [vmem:[%s145 + $0x23f8] sm:$0xff]
                %560 = vst [vmem:[%s146 + $0x670] sm:$0xff] %v559
                %v561 = vld [vmem:[%s145 + $0x2400] sm:$0xff]
                %562 = vst [vmem:[%s146 + $0x678] sm:$0xff] %v561
                %v563 = vld [vmem:[%s145 + $0x2408] sm:$0xff]
                %564 = vst [vmem:[%s146 + $0x680] sm:$0xff] %v563
                %v565 = vld [vmem:[%s145 + $0x2410] sm:$0xff]
                %566 = vst [vmem:[%s146 + $0x688] sm:$0xff] %v565
                %v567 = vld [vmem:[%s145 + $0x2418] sm:$0xff]
                %568 = vst [vmem:[%s146 + $0x690] sm:$0xff] %v567
                %v569 = vld [vmem:[%s145 + $0x2420] sm:$0xff]
                %570 = vst [vmem:[%s146 + $0x698] sm:$0xff] %v569
                %v571 = vld [vmem:[%s145 + $0x2428] sm:$0xff]
                %572 = vst [vmem:[%s146 + $0x6a0] sm:$0xff] %v571
                %v573 = vld [vmem:[%s145 + $0x2430] sm:$0xff]
                %574 = vst [vmem:[%s146 + $0x6a8] sm:$0xff] %v573
                %v575 = vld [vmem:[%s145 + $0x2438] sm:$0xff]
                %576 = vst [vmem:[%s146 + $0x6b0] sm:$0xff] %v575
                %v577 = vld [vmem:[%s145 + $0x2440] sm:$0xff]
                %578 = vst [vmem:[%s146 + $0x6b8] sm:$0xff] %v577
                %v579 = vld [vmem:[%s145 + $0x2880] sm:$0xff]
                %580 = vst [vmem:[%s146 + $0x6c0] sm:$0xff] %v579
                %v581 = vld [vmem:[%s145 + $0x2888] sm:$0xff]
                %582 = vst [vmem:[%s146 + $0x6c8] sm:$0xff] %v581
                %v583 = vld [vmem:[%s145 + $0x2890] sm:$0xff]
                %584 = vst [vmem:[%s146 + $0x6d0] sm:$0xff] %v583
                %v585 = vld [vmem:[%s145 + $0x2898] sm:$0xff]
                %586 = vst [vmem:[%s146 + $0x6d8] sm:$0xff] %v585
                %v587 = vld [vmem:[%s145 + $0x28a0] sm:$0xff]
                %588 = vst [vmem:[%s146 + $0x6e0] sm:$0xff] %v587
                %v589 = vld [vmem:[%s145 + $0x28a8] sm:$0xff]
                %590 = vst [vmem:[%s146 + $0x6e8] sm:$0xff] %v589
                %v591 = vld [vmem:[%s145 + $0x28b0] sm:$0xff]
                %592 = vst [vmem:[%s146 + $0x6f0] sm:$0xff] %v591
                %v593 = vld [vmem:[%s145 + $0x28b8] sm:$0xff]
                %594 = vst [vmem:[%s146 + $0x6f8] sm:$0xff] %v593
                %v595 = vld [vmem:[%s145 + $0x28c0] sm:$0xff]
                %596 = vst [vmem:[%s146 + $0x700] sm:$0xff] %v595
                %v597 = vld [vmem:[%s145 + $0x28c8] sm:$0xff]
                %598 = vst [vmem:[%s146 + $0x708] sm:$0xff] %v597
                %v599 = vld [vmem:[%s145 + $0x28d0] sm:$0xff]
                %600 = vst [vmem:[%s146 + $0x710] sm:$0xff] %v599
                %v601 = vld [vmem:[%s145 + $0x28d8] sm:$0xff]
                %602 = vst [vmem:[%s146 + $0x718] sm:$0xff] %v601
                %v603 = vld [vmem:[%s145 + $0x28e0] sm:$0xff]
                %604 = vst [vmem:[%s146 + $0x720] sm:$0xff] %v603
                %v605 = vld [vmem:[%s145 + $0x28e8] sm:$0xff]
                %606 = vst [vmem:[%s146 + $0x728] sm:$0xff] %v605
                %v607 = vld [vmem:[%s145 + $0x28f0] sm:$0xff]
                %608 = vst [vmem:[%s146 + $0x730] sm:$0xff] %v607
                %v609 = vld [vmem:[%s145 + $0x28f8] sm:$0xff]
                %610 = vst [vmem:[%s146 + $0x738] sm:$0xff] %v609
                %v611 = vld [vmem:[%s145 + $0x2900] sm:$0xff]
                %612 = vst [vmem:[%s146 + $0x740] sm:$0xff] %v611
                %v613 = vld [vmem:[%s145 + $0x2908] sm:$0xff]
                %614 = vst [vmem:[%s146 + $0x748] sm:$0xff] %v613
                %v615 = vld [vmem:[%s145 + $0x2910] sm:$0xff]
                %616 = vst [vmem:[%s146 + $0x750] sm:$0xff] %v615
                %v617 = vld [vmem:[%s145 + $0x2918] sm:$0xff]
                %618 = vst [vmem:[%s146 + $0x758] sm:$0xff] %v617
                %v619 = vld [vmem:[%s145 + $0x2920] sm:$0xff]
                %620 = vst [vmem:[%s146 + $0x760] sm:$0xff] %v619
                %v621 = vld [vmem:[%s145 + $0x2928] sm:$0xff]
                %622 = vst [vmem:[%s146 + $0x768] sm:$0xff] %v621
                %v623 = vld [vmem:[%s145 + $0x2930] sm:$0xff]
                %624 = vst [vmem:[%s146 + $0x770] sm:$0xff] %v623
                %v625 = vld [vmem:[%s145 + $0x2938] sm:$0xff]
                %626 = vst [vmem:[%s146 + $0x778] sm:$0xff] %v625
                %v627 = vld [vmem:[%s145 + $0x2940] sm:$0xff]
                %628 = vst [vmem:[%s146 + $0x780] sm:$0xff] %v627
                %v629 = vld [vmem:[%s145 + $0x2948] sm:$0xff]
                %630 = vst [vmem:[%s146 + $0x788] sm:$0xff] %v629
                %v631 = vld [vmem:[%s145 + $0x2950] sm:$0xff]
                %632 = vst [vmem:[%s146 + $0x790] sm:$0xff] %v631
              $region37: #{forward_pallas.2} parent=31 // loop_footer
                %s144 = sadd.s32 1, %s140
              $region38: #{forward_pallas.2} parent=31 // loop_footer_branch
                %139 = sbr.rel target = $region34
              $region39: #{forward_pallas.2} parent=31 // loop_exit
                _
            $region32: #{forward_pallas.2} parent=27 // pred_fallthru
              _
            // Predicated region
            $region40: #{forward_pallas.2} parent=27 // pred_check
              _
            $region41: #{forward_pallas.2} parent=27 // pred_check_branch
              %634 = sbr.rel target = $region43
            $region42: #{forward_pallas.2} parent=27 // pred_region
              _
            $region43: #{forward_pallas.2} parent=27 // pred_fallthru
              _
          $region28: #{forward_pallas.2} parent=23 // pred_fallthru
            _
          %635 = vnop
        $region24: #{forward_pallas.2} parent=19 // pred_fallthru
          _
        // Predicated region
        $region44: #{forward_pallas.2} parent=19 // pred_check
          %p636 = pneg %p55
        $region45: #{forward_pallas.2} parent=19 // pred_check_branch
          %638 = sbr.rel (%p636) target = $region47
        $region46: #{forward_pallas.2} parent=19 // pred_region
          %s639 = smul.u32 432, %s9
          %p640 = scmp.lt.s32.totalorder %s639, 2591
          %s641 = scalar_select %p640, %s639, 2591
          %s642 = smul.addr %s641, 2
          %s643 = smul.addr %s642, 8
          %s644 = scalar_lea.vmem %s1, %s643
          %s645 = smul.u32 432, %s9
        $region47: #{forward_pallas.2} parent=19 // pred_fallthru
          _
      $region20: #{forward_pallas.2} parent=5 // pred_fallthru
        _
      %p646 = scmp.le.s32.totalorder 1, %s9
      %p647 = scmp.lt.s32.totalorder %s9, 7
      %p648 = pnand %p646, %p647
      %p649 = pneg %p648
      // Predicated region
      $region48: #{forward_pallas.2} parent=5 // pred_check
        _
      $region49: #{forward_pallas.2} parent=5 // pred_check_branch
        %651 = sbr.rel (%p648) target = $region51
      $region50: #{forward_pallas.2} parent=5 // pred_region
        %s652 = ssub.s32 %s9, 1
        %s653 = sand.u32 %s22, 1
        %s654 = sand.u32 %s22, 1
        %s655 = smul.addr %s654, 1944
        %s656 = scalar_lea.vmem [#allocation2], %s655
        // Predicated region
        $region52: #{forward_pallas.2} parent=50 // pred_check
          %p657 = pneg %p35
        $region53: #{forward_pallas.2} parent=50 // pred_check_branch
          %659 = sbr.rel (%p657) target = $region55
        $region54: #{forward_pallas.2} parent=50 // pred_region
          _
        $region55: #{forward_pallas.2} parent=50 // pred_fallthru
          _
        %s660 = sand.u32 %s22, 1
        %s661 = sand.u32 %s22, 1
        %s662 = smul.addr %s661, 1944
        %s663 = scalar_lea.vmem [#allocation2], %s662
        %p664 = pneg %p35
        %p665 = pneg %p32
        %s666 = smul.u32 432, %s14
        %p667 = scmp.lt.s32.totalorder %s666, 2591
        %s668 = scalar_select %p667, %s666, 2591
        %s669 = smul.addr %s668, 2
        %s670 = smul.addr %s669, 8
        %s671 = scalar_lea.vmem %s1, %s670
        %p672 = pneg %p61
        %p673 = pneg %p58
        %p674 = pneg %p82
        %p675 = pneg %p79
        %p676 = pneg %p103
        %p677 = pneg %p100
        %s678 = smul.u32 27, %s14
        %s679 = smul.u32 432, %s14
        %p680 = scmp.lt.s32.totalorder %s679, 2591
        %s681 = scalar_select %p680, %s679, 2591
        %s682 = smul.addr %s681, 2
        %s683 = smul.addr %s682, 8
        %s684 = scalar_lea.vmem %s1, %s683
        %s685 = smul.u32 432, %s14
        %p686 = scmp.eq.s32.totalorder %s14, 0
        // Predicated region
        $region56: #{forward_pallas.2} parent=50 // pred_check
          %p687 = pneg %p686
        $region57: #{forward_pallas.2} parent=50 // pred_check_branch
          %689 = sbr.rel (%p687) target = $region59
        $region58: #{forward_pallas.2} parent=50 // pred_region
          %v690 = vld [vmem:[%s2] sm:$0x3]
          %v692 = vlaneseq
          %v693 = vshrl.u32 %v692, 7
          %v694 = vsub.s32 0, %v693
          %v695 = vrot.slane %v690, %v694
          %v696 = vlaneseq
          %v697 = vshrl.u32 %v696, 7
          %v698 = vsub.s32 1, %v697
          %v699 = vrot.slane %v690, %v698
          %v702 = vadd.f32 %v695, 0.0
          %v703 = vadd.f32 %v699, 0.0
          %704 = vst [vmem:[%s3] sm:$0xff] %v702
          %705 = vst [vmem:[%s3 + $0x8] sm:$0xff] %v703
          %706 = vst [vmem:[%s3 + $0x10] sm:$0xff] %v702
          %707 = vst [vmem:[%s3 + $0x18] sm:$0xff] %v703
          %708 = vst [vmem:[%s3 + $0x20] sm:$0xff] %v702
          %709 = vst [vmem:[%s3 + $0x28] sm:$0xff] %v703
          %710 = vst [vmem:[%s3 + $0x30] sm:$0xff] %v702
          %711 = vst [vmem:[%s3 + $0x38] sm:$0xff] %v703
          %712 = vst [vmem:[%s3 + $0x40] sm:$0xff] %v702
          %713 = vst [vmem:[%s3 + $0x48] sm:$0xff] %v703
          %714 = vst [vmem:[%s3 + $0x50] sm:$0xff] %v702
          %715 = vst [vmem:[%s3 + $0x58] sm:$0xff] %v703
          %716 = vst [vmem:[%s3 + $0x60] sm:$0xff] %v702
          %717 = vst [vmem:[%s3 + $0x68] sm:$0xff] %v703
          %718 = vst [vmem:[%s3 + $0x70] sm:$0xff] %v702
          %719 = vst [vmem:[%s3 + $0x78] sm:$0xff] %v703
          %720 = vst [vmem:[%s3 + $0x80] sm:$0xff] %v702
          %721 = vst [vmem:[%s3 + $0x88] sm:$0xff] %v703
        $region59: #{forward_pallas.2} parent=50 // pred_fallthru
          _
        %v722 = vld [vmem:[%s3] sm:$0xff]
        %v723 = vld [vmem:[%s3 + $0x8] sm:$0xff]
        %v724 = vld [vmem:[%s3 + $0x10] sm:$0xff]
        %v725 = vld [vmem:[%s3 + $0x18] sm:$0xff]
        %v726 = vld [vmem:[%s3 + $0x20] sm:$0xff]
        %v727 = vld [vmem:[%s3 + $0x28] sm:$0xff]
        %v728 = vld [vmem:[%s3 + $0x30] sm:$0xff]
        %v729 = vld [vmem:[%s3 + $0x38] sm:$0xff]
        %v730 = vld [vmem:[%s3 + $0x40] sm:$0xff]
        %v731 = vld [vmem:[%s3 + $0x48] sm:$0xff]
        %v732 = vld [vmem:[%s3 + $0x50] sm:$0xff]
        %v733 = vld [vmem:[%s3 + $0x58] sm:$0xff]
        %v734 = vld [vmem:[%s3 + $0x60] sm:$0xff]
        %v735 = vld [vmem:[%s3 + $0x68] sm:$0xff]
        %v736 = vld [vmem:[%s3 + $0x70] sm:$0xff]
        %v737 = vld [vmem:[%s3 + $0x78] sm:$0xff]
        %v738 = vld [vmem:[%s3 + $0x80] sm:$0xff]
        %v739 = vld [vmem:[%s3 + $0x88] sm:$0xff]
        %v740 = vld [vmem:[%s656] sm:$0xff]
        %v741 = vld [vmem:[%s656 + $0x8] sm:$0xff]
        %v742 = vld [vmem:[%s656 + $0x10] sm:$0xff]
        %v743 = vld [vmem:[%s656 + $0x18] sm:$0xff]
        %v744 = vld [vmem:[%s656 + $0x20] sm:$0xff]
        %v745 = vld [vmem:[%s656 + $0x28] sm:$0xff]
        %v746 = vld [vmem:[%s656 + $0x30] sm:$0xff]
        %v747 = vld [vmem:[%s656 + $0x38] sm:$0xff]
        %v748 = vld [vmem:[%s656 + $0x40] sm:$0xff]
        %v749 = vld [vmem:[%s656 + $0x48] sm:$0xff]
        %v750 = vld [vmem:[%s656 + $0x50] sm:$0xff]
        %v751 = vld [vmem:[%s656 + $0x58] sm:$0xff]
        %v752 = vld [vmem:[%s656 + $0x60] sm:$0xff]
        %v753 = vld [vmem:[%s656 + $0x68] sm:$0xff]
        %v754 = vld [vmem:[%s656 + $0x70] sm:$0xff]
        %v755 = vld [vmem:[%s656 + $0x78] sm:$0xff]
        %v756 = vld [vmem:[%s656 + $0x80] sm:$0xff]
        %v757 = vld [vmem:[%s656 + $0x88] sm:$0xff]
        %v758 = vld [vmem:[%s656 + $0x90] sm:$0xff]
        %v759 = vld [vmem:[%s656 + $0x98] sm:$0xff]
        %v760 = vld [vmem:[%s656 + $0xa0] sm:$0xff]
        %v761 = vld [vmem:[%s656 + $0xa8] sm:$0xff]
        %v762 = vld [vmem:[%s656 + $0xb0] sm:$0xff]
        %v763 = vld [vmem:[%s656 + $0xb8] sm:$0xff]
        %v764 = vld [vmem:[%s656 + $0xc0] sm:$0xff]
        %v765 = vld [vmem:[%s656 + $0xc8] sm:$0xff]
        %v766 = vld [vmem:[%s656 + $0xd0] sm:$0xff]
        %v767 = vld [vmem:[%s656 + $0xd8] sm:$0xff]
        %v768 = vld [vmem:[%s656 + $0xe0] sm:$0xff]
        %v769 = vld [vmem:[%s656 + $0xe8] sm:$0xff]
        %v770 = vld [vmem:[%s656 + $0xf0] sm:$0xff]
        %v771 = vld [vmem:[%s656 + $0xf8] sm:$0xff]
        %v772 = vld [vmem:[%s656 + $0x100] sm:$0xff]
        %v773 = vld [vmem:[%s656 + $0x108] sm:$0xff]
        %v774 = vld [vmem:[%s656 + $0x110] sm:$0xff]
        %v775 = vld [vmem:[%s656 + $0x118] sm:$0xff]
        %v776 = vld [vmem:[%s656 + $0x120] sm:$0xff]
        %v777 = vld [vmem:[%s656 + $0x128] sm:$0xff]
        %v778 = vld [vmem:[%s656 + $0x130] sm:$0xff]
        %v779 = vld [vmem:[%s656 + $0x138] sm:$0xff]
        %v780 = vld [vmem:[%s656 + $0x140] sm:$0xff]
        %v781 = vld [vmem:[%s656 + $0x148] sm:$0xff]
        %v782 = vld [vmem:[%s656 + $0x150] sm:$0xff]
        %v783 = vld [vmem:[%s656 + $0x158] sm:$0xff]
        %v784 = vld [vmem:[%s656 + $0x160] sm:$0xff]
        %v785 = vld [vmem:[%s656 + $0x168] sm:$0xff]
        %v786 = vld [vmem:[%s656 + $0x170] sm:$0xff]
        %v787 = vld [vmem:[%s656 + $0x178] sm:$0xff]
        %v788 = vld [vmem:[%s656 + $0x180] sm:$0xff]
        %v789 = vld [vmem:[%s656 + $0x188] sm:$0xff]
        %v790 = vld [vmem:[%s656 + $0x190] sm:$0xff]
        %v791 = vld [vmem:[%s656 + $0x198] sm:$0xff]
        %v792 = vld [vmem:[%s656 + $0x1a0] sm:$0xff]
        %v793 = vld [vmem:[%s656 + $0x1a8] sm:$0xff]
        %v794 = vld [vmem:[%s656 + $0x1b0] sm:$0xff]
        %v795 = vld [vmem:[%s656 + $0x1b8] sm:$0xff]
        %v796 = vld [vmem:[%s656 + $0x1c0] sm:$0xff]
        %v797 = vld [vmem:[%s656 + $0x1c8] sm:$0xff]
        %v798 = vld [vmem:[%s656 + $0x1d0] sm:$0xff]
        %v799 = vld [vmem:[%s656 + $0x1d8] sm:$0xff]
        %v800 = vld [vmem:[%s656 + $0x1e0] sm:$0xff]
        %v801 = vld [vmem:[%s656 + $0x1e8] sm:$0xff]
        %v802 = vld [vmem:[%s656 + $0x1f0] sm:$0xff]
        %v803 = vld [vmem:[%s656 + $0x1f8] sm:$0xff]
        %v804 = vld [vmem:[%s656 + $0x200] sm:$0xff]
        %v805 = vld [vmem:[%s656 + $0x208] sm:$0xff]
        %v806 = vld [vmem:[%s656 + $0x210] sm:$0xff]
        %v807 = vld [vmem:[%s656 + $0x218] sm:$0xff]
        %v808 = vld [vmem:[%s656 + $0x220] sm:$0xff]
        %v809 = vld [vmem:[%s656 + $0x228] sm:$0xff]
        %v810 = vld [vmem:[%s656 + $0x230] sm:$0xff]
        %v811 = vld [vmem:[%s656 + $0x238] sm:$0xff]
        %v812 = vld [vmem:[%s656 + $0x240] sm:$0xff]
        %v813 = vld [vmem:[%s656 + $0x248] sm:$0xff]
        %v814 = vld [vmem:[%s656 + $0x250] sm:$0xff]
        %v815 = vld [vmem:[%s656 + $0x258] sm:$0xff]
        %v816 = vld [vmem:[%s656 + $0x260] sm:$0xff]
        %v817 = vld [vmem:[%s656 + $0x268] sm:$0xff]
        %v818 = vld [vmem:[%s656 + $0x270] sm:$0xff]
        %v819 = vld [vmem:[%s656 + $0x278] sm:$0xff]
        %v820 = vld [vmem:[%s656 + $0x280] sm:$0xff]
        %v821 = vld [vmem:[%s656 + $0x288] sm:$0xff]
        %v822 = vld [vmem:[%s656 + $0x290] sm:$0xff]
        %v823 = vld [vmem:[%s656 + $0x298] sm:$0xff]
        %v824 = vld [vmem:[%s656 + $0x2a0] sm:$0xff]
        %v825 = vld [vmem:[%s656 + $0x2a8] sm:$0xff]
        %v826 = vld [vmem:[%s656 + $0x2b0] sm:$0xff]
        %v827 = vld [vmem:[%s656 + $0x2b8] sm:$0xff]
        %v828 = vld [vmem:[%s656 + $0x2c0] sm:$0xff]
        %v829 = vld [vmem:[%s656 + $0x2c8] sm:$0xff]
        %v830 = vld [vmem:[%s656 + $0x2d0] sm:$0xff]
        %v831 = vld [vmem:[%s656 + $0x2d8] sm:$0xff]
        %v832 = vld [vmem:[%s656 + $0x2e0] sm:$0xff]
        %v833 = vld [vmem:[%s656 + $0x2e8] sm:$0xff]
        %v834 = vld [vmem:[%s656 + $0x2f0] sm:$0xff]
        %v835 = vld [vmem:[%s656 + $0x2f8] sm:$0xff]
        %v836 = vld [vmem:[%s656 + $0x300] sm:$0xff]
        %v837 = vld [vmem:[%s656 + $0x308] sm:$0xff]
        %v838 = vld [vmem:[%s656 + $0x310] sm:$0xff]
        %v839 = vld [vmem:[%s656 + $0x318] sm:$0xff]
        %v840 = vld [vmem:[%s656 + $0x320] sm:$0xff]
        %v841 = vld [vmem:[%s656 + $0x328] sm:$0xff]
        %v842 = vld [vmem:[%s656 + $0x330] sm:$0xff]
        %v843 = vld [vmem:[%s656 + $0x338] sm:$0xff]
        %v844 = vld [vmem:[%s656 + $0x340] sm:$0xff]
        %v845 = vld [vmem:[%s656 + $0x348] sm:$0xff]
        %v846 = vld [vmem:[%s656 + $0x350] sm:$0xff]
        %v847 = vld [vmem:[%s656 + $0x358] sm:$0xff]
        %v848 = vld [vmem:[%s656 + $0x360] sm:$0xff]
        %v849 = vld [vmem:[%s656 + $0x368] sm:$0xff]
        %v850 = vld [vmem:[%s656 + $0x370] sm:$0xff]
        %v851 = vld [vmem:[%s656 + $0x378] sm:$0xff]
        %v852 = vld [vmem:[%s656 + $0x380] sm:$0xff]
        %v853 = vld [vmem:[%s656 + $0x388] sm:$0xff]
        %v854 = vld [vmem:[%s656 + $0x390] sm:$0xff]
        %v855 = vld [vmem:[%s656 + $0x398] sm:$0xff]
        %v856 = vld [vmem:[%s656 + $0x3a0] sm:$0xff]
        %v857 = vld [vmem:[%s656 + $0x3a8] sm:$0xff]
        %v858 = vld [vmem:[%s656 + $0x3b0] sm:$0xff]
        %v859 = vld [vmem:[%s656 + $0x3b8] sm:$0xff]
        %v860 = vld [vmem:[%s656 + $0x3c0] sm:$0xff]
        %v861 = vld [vmem:[%s656 + $0x3c8] sm:$0xff]
        %v862 = vld [vmem:[%s656 + $0x3d0] sm:$0xff]
        %v863 = vld [vmem:[%s656 + $0x3d8] sm:$0xff]
        %v864 = vld [vmem:[%s656 + $0x3e0] sm:$0xff]
        %v865 = vld [vmem:[%s656 + $0x3e8] sm:$0xff]
        %v866 = vld [vmem:[%s656 + $0x3f0] sm:$0xff]
        %v867 = vld [vmem:[%s656 + $0x3f8] sm:$0xff]
        %v868 = vld [vmem:[%s656 + $0x400] sm:$0xff]
        %v869 = vld [vmem:[%s656 + $0x408] sm:$0xff]
        %v870 = vld [vmem:[%s656 + $0x410] sm:$0xff]
        %v871 = vld [vmem:[%s656 + $0x418] sm:$0xff]
        %v872 = vld [vmem:[%s656 + $0x420] sm:$0xff]
        %v873 = vld [vmem:[%s656 + $0x428] sm:$0xff]
        %v874 = vld [vmem:[%s656 + $0x430] sm:$0xff]
        %v875 = vld [vmem:[%s656 + $0x438] sm:$0xff]
        %v876 = vld [vmem:[%s656 + $0x440] sm:$0xff]
        %v877 = vld [vmem:[%s656 + $0x448] sm:$0xff]
        %v878 = vld [vmem:[%s656 + $0x450] sm:$0xff]
        %v879 = vld [vmem:[%s656 + $0x458] sm:$0xff]
        %v880 = vld [vmem:[%s656 + $0x460] sm:$0xff]
        %v881 = vld [vmem:[%s656 + $0x468] sm:$0xff]
        %v882 = vld [vmem:[%s656 + $0x470] sm:$0xff]
        %v883 = vld [vmem:[%s656 + $0x478] sm:$0xff]
        %v884 = vld [vmem:[%s656 + $0x480] sm:$0xff]
        %v885 = vld [vmem:[%s656 + $0x488] sm:$0xff]
        %v886 = vld [vmem:[%s656 + $0x490] sm:$0xff]
        %v887 = vld [vmem:[%s656 + $0x498] sm:$0xff]
        %v888 = vld [vmem:[%s656 + $0x4a0] sm:$0xff]
        %v889 = vld [vmem:[%s656 + $0x4a8] sm:$0xff]
        %v890 = vld [vmem:[%s656 + $0x4b0] sm:$0xff]
        %v891 = vld [vmem:[%s656 + $0x4b8] sm:$0xff]
        %v892 = vld [vmem:[%s656 + $0x4c0] sm:$0xff]
        %v893 = vld [vmem:[%s656 + $0x4c8] sm:$0xff]
        %v894 = vld [vmem:[%s656 + $0x4d0] sm:$0xff]
        %v895 = vld [vmem:[%s656 + $0x4d8] sm:$0xff]
        %v896 = vld [vmem:[%s656 + $0x4e0] sm:$0xff]
        %v897 = vld [vmem:[%s656 + $0x4e8] sm:$0xff]
        %v898 = vld [vmem:[%s656 + $0x4f0] sm:$0xff]
        %v899 = vld [vmem:[%s656 + $0x4f8] sm:$0xff]
        %v900 = vld [vmem:[%s656 + $0x500] sm:$0xff]
        %v901 = vld [vmem:[%s656 + $0x508] sm:$0xff]
        %v902 = vld [vmem:[%s656 + $0x510] sm:$0xff]
        %v903 = vld [vmem:[%s656 + $0x518] sm:$0xff]
        %v904 = vld [vmem:[%s656 + $0x520] sm:$0xff]
        %v905 = vld [vmem:[%s656 + $0x528] sm:$0xff]
        %v906 = vld [vmem:[%s656 + $0x530] sm:$0xff]
        %v907 = vld [vmem:[%s656 + $0x538] sm:$0xff]
        %v908 = vld [vmem:[%s656 + $0x540] sm:$0xff]
        %v909 = vld [vmem:[%s656 + $0x548] sm:$0xff]
        %v910 = vld [vmem:[%s656 + $0x550] sm:$0xff]
        %v911 = vld [vmem:[%s656 + $0x558] sm:$0xff]
        %v912 = vld [vmem:[%s656 + $0x560] sm:$0xff]
        %v913 = vld [vmem:[%s656 + $0x568] sm:$0xff]
        %v914 = vld [vmem:[%s656 + $0x570] sm:$0xff]
        %v915 = vld [vmem:[%s656 + $0x578] sm:$0xff]
        %v916 = vld [vmem:[%s656 + $0x580] sm:$0xff]
        %v917 = vld [vmem:[%s656 + $0x588] sm:$0xff]
        %v918 = vld [vmem:[%s656 + $0x590] sm:$0xff]
        %v919 = vld [vmem:[%s656 + $0x598] sm:$0xff]
        %v920 = vld [vmem:[%s656 + $0x5a0] sm:$0xff]
        %v921 = vld [vmem:[%s656 + $0x5a8] sm:$0xff]
        %v922 = vld [vmem:[%s656 + $0x5b0] sm:$0xff]
        %v923 = vld [vmem:[%s656 + $0x5b8] sm:$0xff]
        %v924 = vld [vmem:[%s656 + $0x5c0] sm:$0xff]
        %v925 = vld [vmem:[%s656 + $0x5c8] sm:$0xff]
        %v926 = vld [vmem:[%s656 + $0x5d0] sm:$0xff]
        %v927 = vld [vmem:[%s656 + $0x5d8] sm:$0xff]
        %v928 = vld [vmem:[%s656 + $0x5e0] sm:$0xff]
        %v929 = vld [vmem:[%s656 + $0x5e8] sm:$0xff]
        %v930 = vld [vmem:[%s656 + $0x5f0] sm:$0xff]
        %v931 = vld [vmem:[%s656 + $0x5f8] sm:$0xff]
        %v932 = vld [vmem:[%s656 + $0x600] sm:$0xff]
        %v933 = vld [vmem:[%s656 + $0x608] sm:$0xff]
        %v934 = vld [vmem:[%s656 + $0x610] sm:$0xff]
        %v935 = vld [vmem:[%s656 + $0x618] sm:$0xff]
        %v936 = vld [vmem:[%s656 + $0x620] sm:$0xff]
        %v937 = vld [vmem:[%s656 + $0x628] sm:$0xff]
        %v938 = vld [vmem:[%s656 + $0x630] sm:$0xff]
        %v939 = vld [vmem:[%s656 + $0x638] sm:$0xff]
        %v940 = vld [vmem:[%s656 + $0x640] sm:$0xff]
        %v941 = vld [vmem:[%s656 + $0x648] sm:$0xff]
        %v942 = vld [vmem:[%s656 + $0x650] sm:$0xff]
        %v943 = vld [vmem:[%s656 + $0x658] sm:$0xff]
        %v944 = vld [vmem:[%s656 + $0x660] sm:$0xff]
        %v945 = vld [vmem:[%s656 + $0x668] sm:$0xff]
        %v946 = vld [vmem:[%s656 + $0x670] sm:$0xff]
        %v947 = vld [vmem:[%s656 + $0x678] sm:$0xff]
        %v948 = vld [vmem:[%s656 + $0x680] sm:$0xff]
        %v949 = vld [vmem:[%s656 + $0x688] sm:$0xff]
        %v950 = vld [vmem:[%s656 + $0x690] sm:$0xff]
        %v951 = vld [vmem:[%s656 + $0x698] sm:$0xff]
        %v952 = vld [vmem:[%s656 + $0x6a0] sm:$0xff]
        %v953 = vld [vmem:[%s656 + $0x6a8] sm:$0xff]
        %v954 = vld [vmem:[%s656 + $0x6b0] sm:$0xff]
        %v955 = vld [vmem:[%s656 + $0x6b8] sm:$0xff]
        %v956 = vld [vmem:[%s656 + $0x6c0] sm:$0xff]
        %v957 = vld [vmem:[%s656 + $0x6c8] sm:$0xff]
        %v958 = vld [vmem:[%s656 + $0x6d0] sm:$0xff]
        %v959 = vld [vmem:[%s656 + $0x6d8] sm:$0xff]
        %v960 = vld [vmem:[%s656 + $0x6e0] sm:$0xff]
        %v961 = vld [vmem:[%s656 + $0x6e8] sm:$0xff]
        %v962 = vld [vmem:[%s656 + $0x6f0] sm:$0xff]
        %v963 = vld [vmem:[%s656 + $0x6f8] sm:$0xff]
        %v964 = vld [vmem:[%s656 + $0x700] sm:$0xff]
        %v965 = vld [vmem:[%s656 + $0x708] sm:$0xff]
        %v966 = vld [vmem:[%s656 + $0x710] sm:$0xff]
        %v967 = vld [vmem:[%s656 + $0x718] sm:$0xff]
        %v968 = vld [vmem:[%s656 + $0x720] sm:$0xff]
        %v969 = vld [vmem:[%s656 + $0x728] sm:$0xff]
        %v970 = vld [vmem:[%s656 + $0x730] sm:$0xff]
        %v971 = vld [vmem:[%s656 + $0x738] sm:$0xff]
        %v972 = vld [vmem:[%s656 + $0x740] sm:$0xff]
        %v973 = vld [vmem:[%s656 + $0x748] sm:$0xff]
        %v974 = vld [vmem:[%s656 + $0x750] sm:$0xff]
        %v975 = vld [vmem:[%s656 + $0x758] sm:$0xff]
        %v976 = vld [vmem:[%s656 + $0x760] sm:$0xff]
        %v977 = vld [vmem:[%s656 + $0x768] sm:$0xff]
        %v978 = vld [vmem:[%s656 + $0x770] sm:$0xff]
        %v979 = vld [vmem:[%s656 + $0x778] sm:$0xff]
        %v980 = vld [vmem:[%s656 + $0x780] sm:$0xff]
        %v981 = vld [vmem:[%s656 + $0x788] sm:$0xff]
        %v982 = vld [vmem:[%s656 + $0x790] sm:$0xff]
        %v983 = vld [vmem:[%s684] sm:$0xff]
        %v984 = vld [vmem:[%s684 + $0x8] sm:$0xff]
        %v985 = vld [vmem:[%s684 + $0x10] sm:$0xff]
        %v986 = vld [vmem:[%s684 + $0x18] sm:$0xff]
        %v987 = vld [vmem:[%s684 + $0x20] sm:$0xff]
        %v988 = vld [vmem:[%s684 + $0x28] sm:$0xff]
        %v989 = vld [vmem:[%s684 + $0x30] sm:$0xff]
        %v990 = vld [vmem:[%s684 + $0x38] sm:$0xff]
        %v991 = vld [vmem:[%s684 + $0x40] sm:$0xff]
        %v992 = vld [vmem:[%s684 + $0x48] sm:$0xff]
        %v993 = vld [vmem:[%s684 + $0x50] sm:$0xff]
        %v994 = vld [vmem:[%s684 + $0x58] sm:$0xff]
        %v995 = vld [vmem:[%s684 + $0x60] sm:$0xff]
        %v996 = vld [vmem:[%s684 + $0x68] sm:$0xff]
        %v997 = vld [vmem:[%s684 + $0x70] sm:$0xff]
        %v998 = vld [vmem:[%s684 + $0x78] sm:$0xff]
        %v999 = vld [vmem:[%s684 + $0x80] sm:$0xff]
        %v1000 = vld [vmem:[%s684 + $0x88] sm:$0xff]
        %v1001 = vld [vmem:[%s684 + $0x90] sm:$0xff]
        %v1002 = vld [vmem:[%s684 + $0x98] sm:$0xff]
        %v1003 = vld [vmem:[%s684 + $0xa0] sm:$0xff]
        %v1004 = vld [vmem:[%s684 + $0xa8] sm:$0xff]
        %v1005 = vld [vmem:[%s684 + $0xb0] sm:$0xff]
        %v1006 = vld [vmem:[%s684 + $0xb8] sm:$0xff]
        %v1007 = vld [vmem:[%s684 + $0xc0] sm:$0xff]
        %v1008 = vld [vmem:[%s684 + $0xc8] sm:$0xff]
        %v1009 = vld [vmem:[%s684 + $0xd0] sm:$0xff]
        %v1010 = vld [vmem:[%s684 + $0xd8] sm:$0xff]
        %v1011 = vld [vmem:[%s684 + $0xe0] sm:$0xff]
        %v1012 = vld [vmem:[%s684 + $0xe8] sm:$0xff]
        %v1013 = vld [vmem:[%s684 + $0xf0] sm:$0xff]
        %v1014 = vld [vmem:[%s684 + $0xf8] sm:$0xff]
        %v1015 = vld [vmem:[%s684 + $0x100] sm:$0xff]
        %v1016 = vld [vmem:[%s684 + $0x108] sm:$0xff]
        %v1017 = vld [vmem:[%s684 + $0x110] sm:$0xff]
        %v1018 = vld [vmem:[%s684 + $0x118] sm:$0xff]
        %v1019 = vld [vmem:[%s684 + $0x120] sm:$0xff]
        %v1020 = vld [vmem:[%s684 + $0x128] sm:$0xff]
        %v1021 = vld [vmem:[%s684 + $0x130] sm:$0xff]
        %v1022 = vld [vmem:[%s684 + $0x138] sm:$0xff]
        %v1023 = vld [vmem:[%s684 + $0x140] sm:$0xff]
        %v1024 = vld [vmem:[%s684 + $0x148] sm:$0xff]
        %v1025 = vld [vmem:[%s684 + $0x150] sm:$0xff]
        %v1026 = vld [vmem:[%s684 + $0x158] sm:$0xff]
        %v1027 = vld [vmem:[%s684 + $0x160] sm:$0xff]
        %v1028 = vld [vmem:[%s684 + $0x168] sm:$0xff]
        %v1029 = vld [vmem:[%s684 + $0x170] sm:$0xff]
        %v1030 = vld [vmem:[%s684 + $0x178] sm:$0xff]
        %v1031 = vld [vmem:[%s684 + $0x180] sm:$0xff]
        %v1032 = vld [vmem:[%s684 + $0x188] sm:$0xff]
        %v1033 = vld [vmem:[%s684 + $0x190] sm:$0xff]
        %v1034 = vld [vmem:[%s684 + $0x198] sm:$0xff]
        %v1035 = vld [vmem:[%s684 + $0x1a0] sm:$0xff]
        %v1036 = vld [vmem:[%s684 + $0x1a8] sm:$0xff]
        %v1037 = vld [vmem:[%s684 + $0x1b0] sm:$0xff]
        %v1038 = vld [vmem:[%s684 + $0x1b8] sm:$0xff]
        %v1039 = vld [vmem:[%s684 + $0x1c0] sm:$0xff]
        %v1040 = vld [vmem:[%s684 + $0x1c8] sm:$0xff]
        %v1041 = vld [vmem:[%s684 + $0x1d0] sm:$0xff]
        %v1042 = vld [vmem:[%s684 + $0x1d8] sm:$0xff]
        %v1043 = vld [vmem:[%s684 + $0x1e0] sm:$0xff]
        %v1044 = vld [vmem:[%s684 + $0x1e8] sm:$0xff]
        %v1045 = vld [vmem:[%s684 + $0x1f0] sm:$0xff]
        %v1046 = vld [vmem:[%s684 + $0x1f8] sm:$0xff]
        %v1047 = vld [vmem:[%s684 + $0x200] sm:$0xff]
        %v1048 = vld [vmem:[%s684 + $0x208] sm:$0xff]
        %v1049 = vld [vmem:[%s684 + $0x210] sm:$0xff]
        %v1050 = vld [vmem:[%s684 + $0x218] sm:$0xff]
        %v1051 = vld [vmem:[%s684 + $0x220] sm:$0xff]
        %v1052 = vld [vmem:[%s684 + $0x228] sm:$0xff]
        %v1053 = vld [vmem:[%s684 + $0x230] sm:$0xff]
        %v1054 = vld [vmem:[%s684 + $0x238] sm:$0xff]
        %v1055 = vld [vmem:[%s684 + $0x240] sm:$0xff]
        %v1056 = vld [vmem:[%s684 + $0x248] sm:$0xff]
        %v1057 = vld [vmem:[%s684 + $0x250] sm:$0xff]
        %v1058 = vld [vmem:[%s684 + $0x258] sm:$0xff]
        %v1059 = vld [vmem:[%s684 + $0x260] sm:$0xff]
        %v1060 = vld [vmem:[%s684 + $0x268] sm:$0xff]
        %v1061 = vld [vmem:[%s684 + $0x270] sm:$0xff]
        %v1062 = vld [vmem:[%s684 + $0x278] sm:$0xff]
        %v1063 = vld [vmem:[%s684 + $0x280] sm:$0xff]
        %v1064 = vld [vmem:[%s684 + $0x288] sm:$0xff]
        %v1065 = vld [vmem:[%s684 + $0x290] sm:$0xff]
        %v1066 = vld [vmem:[%s684 + $0x298] sm:$0xff]
        %v1067 = vld [vmem:[%s684 + $0x2a0] sm:$0xff]
        %v1068 = vld [vmem:[%s684 + $0x2a8] sm:$0xff]
        %v1069 = vld [vmem:[%s684 + $0x2b0] sm:$0xff]
        %v1070 = vld [vmem:[%s684 + $0x2b8] sm:$0xff]
        %v1071 = vld [vmem:[%s684 + $0x2c0] sm:$0xff]
        %v1072 = vld [vmem:[%s684 + $0x2c8] sm:$0xff]
        %v1073 = vld [vmem:[%s684 + $0x2d0] sm:$0xff]
        %v1074 = vld [vmem:[%s684 + $0x2d8] sm:$0xff]
        %v1075 = vld [vmem:[%s684 + $0x2e0] sm:$0xff]
        %v1076 = vld [vmem:[%s684 + $0x2e8] sm:$0xff]
        %v1077 = vld [vmem:[%s684 + $0x2f0] sm:$0xff]
        %v1078 = vld [vmem:[%s684 + $0x2f8] sm:$0xff]
        %v1079 = vld [vmem:[%s684 + $0x300] sm:$0xff]
        %v1080 = vld [vmem:[%s684 + $0x308] sm:$0xff]
        %v1081 = vld [vmem:[%s684 + $0x310] sm:$0xff]
        %v1082 = vld [vmem:[%s684 + $0x318] sm:$0xff]
        %v1083 = vld [vmem:[%s684 + $0x320] sm:$0xff]
        %v1084 = vld [vmem:[%s684 + $0x328] sm:$0xff]
        %v1085 = vld [vmem:[%s684 + $0x330] sm:$0xff]
        %v1086 = vld [vmem:[%s684 + $0x338] sm:$0xff]
        %v1087 = vld [vmem:[%s684 + $0x340] sm:$0xff]
        %v1088 = vld [vmem:[%s684 + $0x348] sm:$0xff]
        %v1089 = vld [vmem:[%s684 + $0x350] sm:$0xff]
        %v1090 = vld [vmem:[%s684 + $0x358] sm:$0xff]
        %v1091 = vld [vmem:[%s684 + $0x360] sm:$0xff]
        %v1092 = vld [vmem:[%s684 + $0x368] sm:$0xff]
        %v1093 = vld [vmem:[%s684 + $0x370] sm:$0xff]
        %v1094 = vld [vmem:[%s684 + $0x378] sm:$0xff]
        %v1095 = vld [vmem:[%s684 + $0x380] sm:$0xff]
        %v1096 = vld [vmem:[%s684 + $0x388] sm:$0xff]
        %v1097 = vld [vmem:[%s684 + $0x390] sm:$0xff]
        %v1098 = vld [vmem:[%s684 + $0x398] sm:$0xff]
        %v1099 = vld [vmem:[%s684 + $0x3a0] sm:$0xff]
        %v1100 = vld [vmem:[%s684 + $0x3a8] sm:$0xff]
        %v1101 = vld [vmem:[%s684 + $0x3b0] sm:$0xff]
        %v1102 = vld [vmem:[%s684 + $0x3b8] sm:$0xff]
        %v1103 = vld [vmem:[%s684 + $0x3c0] sm:$0xff]
        %v1104 = vld [vmem:[%s684 + $0x3c8] sm:$0xff]
        %v1105 = vld [vmem:[%s684 + $0x3d0] sm:$0xff]
        %v1106 = vld [vmem:[%s684 + $0x3d8] sm:$0xff]
        %v1107 = vld [vmem:[%s684 + $0x3e0] sm:$0xff]
        %v1108 = vld [vmem:[%s684 + $0x3e8] sm:$0xff]
        %v1109 = vld [vmem:[%s684 + $0x3f0] sm:$0xff]
        %v1110 = vld [vmem:[%s684 + $0x3f8] sm:$0xff]
        %v1111 = vld [vmem:[%s684 + $0x400] sm:$0xff]
        %v1112 = vld [vmem:[%s684 + $0x408] sm:$0xff]
        %v1113 = vld [vmem:[%s684 + $0x410] sm:$0xff]
        %v1114 = vld [vmem:[%s684 + $0x418] sm:$0xff]
        %v1115 = vld [vmem:[%s684 + $0x420] sm:$0xff]
        %v1116 = vld [vmem:[%s684 + $0x428] sm:$0xff]
        %v1117 = vld [vmem:[%s684 + $0x430] sm:$0xff]
        %v1118 = vld [vmem:[%s684 + $0x438] sm:$0xff]
        %v1119 = vld [vmem:[%s684 + $0x440] sm:$0xff]
        %v1120 = vld [vmem:[%s684 + $0x448] sm:$0xff]
        %v1121 = vld [vmem:[%s684 + $0x450] sm:$0xff]
        %v1122 = vld [vmem:[%s684 + $0x458] sm:$0xff]
        %v1123 = vld [vmem:[%s684 + $0x460] sm:$0xff]
        %v1124 = vld [vmem:[%s684 + $0x468] sm:$0xff]
        %v1125 = vld [vmem:[%s684 + $0x470] sm:$0xff]
        %v1126 = vld [vmem:[%s684 + $0x478] sm:$0xff]
        %v1127 = vld [vmem:[%s684 + $0x480] sm:$0xff]
        %v1128 = vld [vmem:[%s684 + $0x488] sm:$0xff]
        %v1129 = vld [vmem:[%s684 + $0x490] sm:$0xff]
        %v1130 = vld [vmem:[%s684 + $0x498] sm:$0xff]
        %v1131 = vld [vmem:[%s684 + $0x4a0] sm:$0xff]
        %v1132 = vld [vmem:[%s684 + $0x4a8] sm:$0xff]
        %v1133 = vld [vmem:[%s684 + $0x4b0] sm:$0xff]
        %v1134 = vld [vmem:[%s684 + $0x4b8] sm:$0xff]
        %v1135 = vld [vmem:[%s684 + $0x4c0] sm:$0xff]
        %v1136 = vld [vmem:[%s684 + $0x4c8] sm:$0xff]
        %v1137 = vld [vmem:[%s684 + $0x4d0] sm:$0xff]
        %v1138 = vld [vmem:[%s684 + $0x4d8] sm:$0xff]
        %v1139 = vld [vmem:[%s684 + $0x4e0] sm:$0xff]
        %v1140 = vld [vmem:[%s684 + $0x4e8] sm:$0xff]
        %v1141 = vld [vmem:[%s684 + $0x4f0] sm:$0xff]
        %v1142 = vld [vmem:[%s684 + $0x4f8] sm:$0xff]
        %v1143 = vld [vmem:[%s684 + $0x500] sm:$0xff]
        %v1144 = vld [vmem:[%s684 + $0x508] sm:$0xff]
        %v1145 = vld [vmem:[%s684 + $0x510] sm:$0xff]
        %v1146 = vld [vmem:[%s684 + $0x518] sm:$0xff]
        %v1147 = vld [vmem:[%s684 + $0x520] sm:$0xff]
        %v1148 = vld [vmem:[%s684 + $0x528] sm:$0xff]
        %v1149 = vld [vmem:[%s684 + $0x530] sm:$0xff]
        %v1150 = vld [vmem:[%s684 + $0x538] sm:$0xff]
        %v1151 = vld [vmem:[%s684 + $0x540] sm:$0xff]
        %v1152 = vld [vmem:[%s684 + $0x548] sm:$0xff]
        %v1153 = vld [vmem:[%s684 + $0x550] sm:$0xff]
        %v1154 = vld [vmem:[%s684 + $0x558] sm:$0xff]
        %v1155 = vld [vmem:[%s684 + $0x560] sm:$0xff]
        %v1156 = vld [vmem:[%s684 + $0x568] sm:$0xff]
        %v1157 = vld [vmem:[%s684 + $0x570] sm:$0xff]
        %v1158 = vld [vmem:[%s684 + $0x578] sm:$0xff]
        %v1159 = vld [vmem:[%s684 + $0x580] sm:$0xff]
        %v1160 = vld [vmem:[%s684 + $0x588] sm:$0xff]
        %v1161 = vld [vmem:[%s684 + $0x590] sm:$0xff]
        %v1162 = vld [vmem:[%s684 + $0x598] sm:$0xff]
        %v1163 = vld [vmem:[%s684 + $0x5a0] sm:$0xff]
        %v1164 = vld [vmem:[%s684 + $0x5a8] sm:$0xff]
        %v1165 = vld [vmem:[%s684 + $0x5b0] sm:$0xff]
        %v1166 = vld [vmem:[%s684 + $0x5b8] sm:$0xff]
        %v1167 = vld [vmem:[%s684 + $0x5c0] sm:$0xff]
        %v1168 = vld [vmem:[%s684 + $0x5c8] sm:$0xff]
        %v1169 = vld [vmem:[%s684 + $0x5d0] sm:$0xff]
        %v1170 = vld [vmem:[%s684 + $0x5d8] sm:$0xff]
        %v1171 = vld [vmem:[%s684 + $0x5e0] sm:$0xff]
        %v1172 = vld [vmem:[%s684 + $0x5e8] sm:$0xff]
        %v1173 = vld [vmem:[%s684 + $0x5f0] sm:$0xff]
        %v1174 = vld [vmem:[%s684 + $0x5f8] sm:$0xff]
        %v1175 = vld [vmem:[%s684 + $0x600] sm:$0xff]
        %v1176 = vld [vmem:[%s684 + $0x608] sm:$0xff]
        %v1177 = vld [vmem:[%s684 + $0x610] sm:$0xff]
        %v1178 = vld [vmem:[%s684 + $0x618] sm:$0xff]
        %v1179 = vld [vmem:[%s684 + $0x620] sm:$0xff]
        %v1180 = vld [vmem:[%s684 + $0x628] sm:$0xff]
        %v1181 = vld [vmem:[%s684 + $0x630] sm:$0xff]
        %v1182 = vld [vmem:[%s684 + $0x638] sm:$0xff]
        %v1183 = vld [vmem:[%s684 + $0x640] sm:$0xff]
        %v1184 = vld [vmem:[%s684 + $0x648] sm:$0xff]
        %v1185 = vld [vmem:[%s684 + $0x650] sm:$0xff]
        %v1186 = vld [vmem:[%s684 + $0x658] sm:$0xff]
        %v1187 = vld [vmem:[%s684 + $0x660] sm:$0xff]
        %v1188 = vld [vmem:[%s684 + $0x668] sm:$0xff]
        %v1189 = vld [vmem:[%s684 + $0x670] sm:$0xff]
        %v1190 = vld [vmem:[%s684 + $0x678] sm:$0xff]
        %v1191 = vld [vmem:[%s684 + $0x680] sm:$0xff]
        %v1192 = vld [vmem:[%s684 + $0x688] sm:$0xff]
        %v1193 = vld [vmem:[%s684 + $0x690] sm:$0xff]
        %v1194 = vld [vmem:[%s684 + $0x698] sm:$0xff]
        %v1195 = vld [vmem:[%s684 + $0x6a0] sm:$0xff]
        %v1196 = vld [vmem:[%s684 + $0x6a8] sm:$0xff]
        %v1197 = vld [vmem:[%s684 + $0x6b0] sm:$0xff]
        %v1198 = vld [vmem:[%s684 + $0x6b8] sm:$0xff]
        %v1199 = vld [vmem:[%s684 + $0x6c0] sm:$0xff]
        %v1200 = vld [vmem:[%s684 + $0x6c8] sm:$0xff]
        %v1201 = vld [vmem:[%s684 + $0x6d0] sm:$0xff]
        %v1202 = vld [vmem:[%s684 + $0x6d8] sm:$0xff]
        %v1203 = vld [vmem:[%s684 + $0x6e0] sm:$0xff]
        %v1204 = vld [vmem:[%s684 + $0x6e8] sm:$0xff]
        %v1205 = vld [vmem:[%s684 + $0x6f0] sm:$0xff]
        %v1206 = vld [vmem:[%s684 + $0x6f8] sm:$0xff]
        %v1207 = vld [vmem:[%s684 + $0x700] sm:$0xff]
        %v1208 = vld [vmem:[%s684 + $0x708] sm:$0xff]
        %v1209 = vld [vmem:[%s684 + $0x710] sm:$0xff]
        %v1210 = vld [vmem:[%s684 + $0x718] sm:$0xff]
        %v1211 = vld [vmem:[%s684 + $0x720] sm:$0xff]
        %v1212 = vld [vmem:[%s684 + $0x728] sm:$0xff]
        %v1213 = vld [vmem:[%s684 + $0x730] sm:$0xff]
        %v1214 = vld [vmem:[%s684 + $0x738] sm:$0xff]
        %v1215 = vld [vmem:[%s684 + $0x740] sm:$0xff]
        %v1216 = vld [vmem:[%s684 + $0x748] sm:$0xff]
        %v1217 = vld [vmem:[%s684 + $0x750] sm:$0xff]
        %v1218 = vld [vmem:[%s684 + $0x758] sm:$0xff]
        %v1219 = vld [vmem:[%s684 + $0x760] sm:$0xff]
        %v1220 = vld [vmem:[%s684 + $0x768] sm:$0xff]
        %v1221 = vld [vmem:[%s684 + $0x770] sm:$0xff]
        %v1222 = vld [vmem:[%s684 + $0x778] sm:$0xff]
        %v1223 = vld [vmem:[%s684 + $0x780] sm:$0xff]
        %v1224 = vld [vmem:[%s684 + $0x788] sm:$0xff]
        %v1225 = vld [vmem:[%s684 + $0x790] sm:$0xff]
        %v1226 = vld [vmem:[%s684 + $0x798] sm:$0xff]
        %v1227 = vld [vmem:[%s684 + $0x7a0] sm:$0xff]
        %v1228 = vld [vmem:[%s684 + $0x7a8] sm:$0xff]
        %v1229 = vld [vmem:[%s684 + $0x7b0] sm:$0xff]
        %v1230 = vld [vmem:[%s684 + $0x7b8] sm:$0xff]
        %v1231 = vld [vmem:[%s684 + $0x7c0] sm:$0xff]
        %v1232 = vld [vmem:[%s684 + $0x7c8] sm:$0xff]
        %v1233 = vld [vmem:[%s684 + $0x7d0] sm:$0xff]
        %v1234 = vld [vmem:[%s684 + $0x7d8] sm:$0xff]
        %v1235 = vld [vmem:[%s684 + $0x7e0] sm:$0xff]
        %v1236 = vld [vmem:[%s684 + $0x7e8] sm:$0xff]
        %v1237 = vld [vmem:[%s684 + $0x7f0] sm:$0xff]
        %v1238 = vld [vmem:[%s684 + $0x7f8] sm:$0xff]
        %v1239 = vld [vmem:[%s684 + $0x800] sm:$0xff]
        %v1240 = vld [vmem:[%s684 + $0x808] sm:$0xff]
        %v1241 = vld [vmem:[%s684 + $0x810] sm:$0xff]
        %v1242 = vld [vmem:[%s684 + $0x818] sm:$0xff]
        %v1243 = vld [vmem:[%s684 + $0x820] sm:$0xff]
        %v1244 = vld [vmem:[%s684 + $0x828] sm:$0xff]
        %v1245 = vld [vmem:[%s684 + $0x830] sm:$0xff]
        %v1246 = vld [vmem:[%s684 + $0x838] sm:$0xff]
        %v1247 = vld [vmem:[%s684 + $0x840] sm:$0xff]
        %v1248 = vld [vmem:[%s684 + $0x848] sm:$0xff]
        %v1249 = vld [vmem:[%s684 + $0x850] sm:$0xff]
        %v1250 = vld [vmem:[%s684 + $0x858] sm:$0xff]
        %v1251 = vld [vmem:[%s684 + $0x860] sm:$0xff]
        %v1252 = vld [vmem:[%s684 + $0x868] sm:$0xff]
        %v1253 = vld [vmem:[%s684 + $0x870] sm:$0xff]
        %v1254 = vld [vmem:[%s684 + $0x878] sm:$0xff]
        %v1255 = vld [vmem:[%s684 + $0x880] sm:$0xff]
        %v1256 = vld [vmem:[%s684 + $0x888] sm:$0xff]
        %v1257 = vld [vmem:[%s684 + $0x890] sm:$0xff]
        %v1258 = vld [vmem:[%s684 + $0x898] sm:$0xff]
        %v1259 = vld [vmem:[%s684 + $0x8a0] sm:$0xff]
        %v1260 = vld [vmem:[%s684 + $0x8a8] sm:$0xff]
        %v1261 = vld [vmem:[%s684 + $0x8b0] sm:$0xff]
        %v1262 = vld [vmem:[%s684 + $0x8b8] sm:$0xff]
        %v1263 = vld [vmem:[%s684 + $0x8c0] sm:$0xff]
        %v1264 = vld [vmem:[%s684 + $0x8c8] sm:$0xff]
        %v1265 = vld [vmem:[%s684 + $0x8d0] sm:$0xff]
        %v1266 = vld [vmem:[%s684 + $0x8d8] sm:$0xff]
        %v1267 = vld [vmem:[%s684 + $0x8e0] sm:$0xff]
        %v1268 = vld [vmem:[%s684 + $0x8e8] sm:$0xff]
        %v1269 = vld [vmem:[%s684 + $0x8f0] sm:$0xff]
        %v1270 = vld [vmem:[%s684 + $0x8f8] sm:$0xff]
        %v1271 = vld [vmem:[%s684 + $0x900] sm:$0xff]
        %v1272 = vld [vmem:[%s684 + $0x908] sm:$0xff]
        %v1273 = vld [vmem:[%s684 + $0x910] sm:$0xff]
        %v1274 = vld [vmem:[%s684 + $0x918] sm:$0xff]
        %v1275 = vld [vmem:[%s684 + $0x920] sm:$0xff]
        %v1276 = vld [vmem:[%s684 + $0x928] sm:$0xff]
        %v1277 = vld [vmem:[%s684 + $0x930] sm:$0xff]
        %v1278 = vld [vmem:[%s684 + $0x938] sm:$0xff]
        %v1279 = vld [vmem:[%s684 + $0x940] sm:$0xff]
        %v1280 = vld [vmem:[%s684 + $0x948] sm:$0xff]
        %v1281 = vld [vmem:[%s684 + $0x950] sm:$0xff]
        %v1282 = vld [vmem:[%s684 + $0x958] sm:$0xff]
        %v1283 = vld [vmem:[%s684 + $0x960] sm:$0xff]
        %v1284 = vld [vmem:[%s684 + $0x968] sm:$0xff]
        %v1285 = vld [vmem:[%s684 + $0x970] sm:$0xff]
        %v1286 = vld [vmem:[%s684 + $0x978] sm:$0xff]
        %v1287 = vld [vmem:[%s684 + $0x980] sm:$0xff]
        %v1288 = vld [vmem:[%s684 + $0x988] sm:$0xff]
        %v1289 = vld [vmem:[%s684 + $0x990] sm:$0xff]
        %v1290 = vld [vmem:[%s684 + $0x998] sm:$0xff]
        %v1291 = vld [vmem:[%s684 + $0x9a0] sm:$0xff]
        %v1292 = vld [vmem:[%s684 + $0x9a8] sm:$0xff]
        %v1293 = vld [vmem:[%s684 + $0x9b0] sm:$0xff]
        %v1294 = vld [vmem:[%s684 + $0x9b8] sm:$0xff]
        %v1295 = vld [vmem:[%s684 + $0x9c0] sm:$0xff]
        %v1296 = vld [vmem:[%s684 + $0x9c8] sm:$0xff]
        %v1297 = vld [vmem:[%s684 + $0x9d0] sm:$0xff]
        %v1298 = vld [vmem:[%s684 + $0x9d8] sm:$0xff]
        %v1299 = vld [vmem:[%s684 + $0x9e0] sm:$0xff]
        %v1300 = vld [vmem:[%s684 + $0x9e8] sm:$0xff]
        %v1301 = vld [vmem:[%s684 + $0x9f0] sm:$0xff]
        %v1302 = vld [vmem:[%s684 + $0x9f8] sm:$0xff]
        %v1303 = vld [vmem:[%s684 + $0xa00] sm:$0xff]
        %v1304 = vld [vmem:[%s684 + $0xa08] sm:$0xff]
        %v1305 = vld [vmem:[%s684 + $0xa10] sm:$0xff]
        %v1306 = vld [vmem:[%s684 + $0xa18] sm:$0xff]
        %v1307 = vld [vmem:[%s684 + $0xa20] sm:$0xff]
        %v1308 = vld [vmem:[%s684 + $0xa28] sm:$0xff]
        %v1309 = vld [vmem:[%s684 + $0xa30] sm:$0xff]
        %v1310 = vld [vmem:[%s684 + $0xa38] sm:$0xff]
        %v1311 = vld [vmem:[%s684 + $0xa40] sm:$0xff]
        %v1312 = vld [vmem:[%s684 + $0xa48] sm:$0xff]
        %v1313 = vld [vmem:[%s684 + $0xa50] sm:$0xff]
        %v1314 = vld [vmem:[%s684 + $0xa58] sm:$0xff]
        %v1315 = vld [vmem:[%s684 + $0xa60] sm:$0xff]
        %v1316 = vld [vmem:[%s684 + $0xa68] sm:$0xff]
        %v1317 = vld [vmem:[%s684 + $0xa70] sm:$0xff]
        %v1318 = vld [vmem:[%s684 + $0xa78] sm:$0xff]
        %v1319 = vld [vmem:[%s684 + $0xa80] sm:$0xff]
        %v1320 = vld [vmem:[%s684 + $0xa88] sm:$0xff]
        %v1321 = vld [vmem:[%s684 + $0xa90] sm:$0xff]
        %v1322 = vld [vmem:[%s684 + $0xa98] sm:$0xff]
        %v1323 = vld [vmem:[%s684 + $0xaa0] sm:$0xff]
        %v1324 = vld [vmem:[%s684 + $0xaa8] sm:$0xff]
        %v1325 = vld [vmem:[%s684 + $0xab0] sm:$0xff]
        %v1326 = vld [vmem:[%s684 + $0xab8] sm:$0xff]
        %v1327 = vld [vmem:[%s684 + $0xac0] sm:$0xff]
        %v1328 = vld [vmem:[%s684 + $0xac8] sm:$0xff]
        %v1329 = vld [vmem:[%s684 + $0xad0] sm:$0xff]
        %v1330 = vld [vmem:[%s684 + $0xad8] sm:$0xff]
        %v1331 = vld [vmem:[%s684 + $0xae0] sm:$0xff]
        %v1332 = vld [vmem:[%s684 + $0xae8] sm:$0xff]
        %v1333 = vld [vmem:[%s684 + $0xaf0] sm:$0xff]
        %v1334 = vld [vmem:[%s684 + $0xaf8] sm:$0xff]
        %v1335 = vld [vmem:[%s684 + $0xb00] sm:$0xff]
        %v1336 = vld [vmem:[%s684 + $0xb08] sm:$0xff]
        %v1337 = vld [vmem:[%s684 + $0xb10] sm:$0xff]
        %v1338 = vld [vmem:[%s684 + $0xb18] sm:$0xff]
        %v1339 = vld [vmem:[%s684 + $0xb20] sm:$0xff]
        %v1340 = vld [vmem:[%s684 + $0xb28] sm:$0xff]
        %v1341 = vld [vmem:[%s684 + $0xb30] sm:$0xff]
        %v1342 = vld [vmem:[%s684 + $0xb38] sm:$0xff]
        %v1343 = vld [vmem:[%s684 + $0xb40] sm:$0xff]
        %v1344 = vld [vmem:[%s684 + $0xb48] sm:$0xff]
        %v1345 = vld [vmem:[%s684 + $0xb50] sm:$0xff]
        %v1346 = vld [vmem:[%s684 + $0xb58] sm:$0xff]
        %v1347 = vld [vmem:[%s684 + $0xb60] sm:$0xff]
        %v1348 = vld [vmem:[%s684 + $0xb68] sm:$0xff]
        %v1349 = vld [vmem:[%s684 + $0xb70] sm:$0xff]
        %v1350 = vld [vmem:[%s684 + $0xb78] sm:$0xff]
        %v1351 = vld [vmem:[%s684 + $0xb80] sm:$0xff]
        %v1352 = vld [vmem:[%s684 + $0xb88] sm:$0xff]
        %v1353 = vld [vmem:[%s684 + $0xb90] sm:$0xff]
        %v1354 = vld [vmem:[%s684 + $0xb98] sm:$0xff]
        %v1355 = vld [vmem:[%s684 + $0xba0] sm:$0xff]
        %v1356 = vld [vmem:[%s684 + $0xba8] sm:$0xff]
        %v1357 = vld [vmem:[%s684 + $0xbb0] sm:$0xff]
        %v1358 = vld [vmem:[%s684 + $0xbb8] sm:$0xff]
        %v1359 = vld [vmem:[%s684 + $0xbc0] sm:$0xff]
        %v1360 = vld [vmem:[%s684 + $0xbc8] sm:$0xff]
        %v1361 = vld [vmem:[%s684 + $0xbd0] sm:$0xff]
        %v1362 = vld [vmem:[%s684 + $0xbd8] sm:$0xff]
        %v1363 = vld [vmem:[%s684 + $0xbe0] sm:$0xff]
        %v1364 = vld [vmem:[%s684 + $0xbe8] sm:$0xff]
        %v1365 = vld [vmem:[%s684 + $0xbf0] sm:$0xff]
        %v1366 = vld [vmem:[%s684 + $0xbf8] sm:$0xff]
        %v1367 = vld [vmem:[%s684 + $0xc00] sm:$0xff]
        %v1368 = vld [vmem:[%s684 + $0xc08] sm:$0xff]
        %v1369 = vld [vmem:[%s684 + $0xc10] sm:$0xff]
        %v1370 = vld [vmem:[%s684 + $0xc18] sm:$0xff]
        %v1371 = vld [vmem:[%s684 + $0xc20] sm:$0xff]
        %v1372 = vld [vmem:[%s684 + $0xc28] sm:$0xff]
        %v1373 = vld [vmem:[%s684 + $0xc30] sm:$0xff]
        %v1374 = vld [vmem:[%s684 + $0xc38] sm:$0xff]
        %v1375 = vld [vmem:[%s684 + $0xc40] sm:$0xff]
        %v1376 = vld [vmem:[%s684 + $0xc48] sm:$0xff]
        %v1377 = vld [vmem:[%s684 + $0xc50] sm:$0xff]
        %v1378 = vld [vmem:[%s684 + $0xc58] sm:$0xff]
        %v1379 = vld [vmem:[%s684 + $0xc60] sm:$0xff]
        %v1380 = vld [vmem:[%s684 + $0xc68] sm:$0xff]
        %v1381 = vld [vmem:[%s684 + $0xc70] sm:$0xff]
        %v1382 = vld [vmem:[%s684 + $0xc78] sm:$0xff]
        %v1383 = vld [vmem:[%s684 + $0xc80] sm:$0xff]
        %v1384 = vld [vmem:[%s684 + $0xc88] sm:$0xff]
        %v1385 = vld [vmem:[%s684 + $0xc90] sm:$0xff]
        %v1386 = vld [vmem:[%s684 + $0xc98] sm:$0xff]
        %v1387 = vld [vmem:[%s684 + $0xca0] sm:$0xff]
        %v1388 = vld [vmem:[%s684 + $0xca8] sm:$0xff]
        %v1389 = vld [vmem:[%s684 + $0xcb0] sm:$0xff]
        %v1390 = vld [vmem:[%s684 + $0xcb8] sm:$0xff]
        %v1391 = vld [vmem:[%s684 + $0xcc0] sm:$0xff]
        %v1392 = vld [vmem:[%s684 + $0xcc8] sm:$0xff]
        %v1393 = vld [vmem:[%s684 + $0xcd0] sm:$0xff]
        %v1394 = vld [vmem:[%s684 + $0xcd8] sm:$0xff]
        %v1395 = vld [vmem:[%s684 + $0xce0] sm:$0xff]
        %v1396 = vld [vmem:[%s684 + $0xce8] sm:$0xff]
        %v1397 = vld [vmem:[%s684 + $0xcf0] sm:$0xff]
        %v1398 = vld [vmem:[%s684 + $0xcf8] sm:$0xff]
        %v1399 = vld [vmem:[%s684 + $0xd00] sm:$0xff]
        %v1400 = vld [vmem:[%s684 + $0xd08] sm:$0xff]
        %v1401 = vld [vmem:[%s684 + $0xd10] sm:$0xff]
        %v1402 = vld [vmem:[%s684 + $0xd18] sm:$0xff]
        %v1403 = vld [vmem:[%s684 + $0xd20] sm:$0xff]
        %v1404 = vld [vmem:[%s684 + $0xd28] sm:$0xff]
        %v1405 = vld [vmem:[%s684 + $0xd30] sm:$0xff]
        %v1406 = vld [vmem:[%s684 + $0xd38] sm:$0xff]
        %v1407 = vld [vmem:[%s684 + $0xd40] sm:$0xff]
        %v1408 = vld [vmem:[%s684 + $0xd48] sm:$0xff]
        %v1409 = vld [vmem:[%s684 + $0xd50] sm:$0xff]
        %v1410 = vld [vmem:[%s684 + $0xd58] sm:$0xff]
        %v1411 = vld [vmem:[%s684 + $0xd60] sm:$0xff]
        %v1412 = vld [vmem:[%s684 + $0xd68] sm:$0xff]
        %v1413 = vld [vmem:[%s684 + $0xd70] sm:$0xff]
        %v1414 = vld [vmem:[%s684 + $0xd78] sm:$0xff]
        %v1415 = vld [vmem:[%s684 + $0xd80] sm:$0xff]
        %v1416 = vld [vmem:[%s684 + $0xd88] sm:$0xff]
        %v1417 = vld [vmem:[%s684 + $0xd90] sm:$0xff]
        %v1418 = vld [vmem:[%s684 + $0xd98] sm:$0xff]
        %v1419 = vld [vmem:[%s684 + $0xda0] sm:$0xff]
        %v1420 = vld [vmem:[%s684 + $0xda8] sm:$0xff]
        %v1421 = vld [vmem:[%s684 + $0xdb0] sm:$0xff]
        %v1422 = vld [vmem:[%s684 + $0xdb8] sm:$0xff]
        %v1423 = vld [vmem:[%s684 + $0xdc0] sm:$0xff]
        %v1424 = vld [vmem:[%s684 + $0xdc8] sm:$0xff]
        %v1425 = vld [vmem:[%s684 + $0xdd0] sm:$0xff]
        %v1426 = vld [vmem:[%s684 + $0xdd8] sm:$0xff]
        %v1427 = vld [vmem:[%s684 + $0xde0] sm:$0xff]
        %v1428 = vld [vmem:[%s684 + $0xde8] sm:$0xff]
        %v1429 = vld [vmem:[%s684 + $0xdf0] sm:$0xff]
        %v1430 = vld [vmem:[%s684 + $0xdf8] sm:$0xff]
        %v1431 = vld [vmem:[%s684 + $0xe00] sm:$0xff]
        %v1432 = vld [vmem:[%s684 + $0xe08] sm:$0xff]
        %v1433 = vld [vmem:[%s684 + $0xe10] sm:$0xff]
        %v1434 = vld [vmem:[%s684 + $0xe18] sm:$0xff]
        %v1435 = vld [vmem:[%s684 + $0xe20] sm:$0xff]
        %v1436 = vld [vmem:[%s684 + $0xe28] sm:$0xff]
        %v1437 = vld [vmem:[%s684 + $0xe30] sm:$0xff]
        %v1438 = vld [vmem:[%s684 + $0xe38] sm:$0xff]
        %v1439 = vld [vmem:[%s684 + $0xe40] sm:$0xff]
        %v1440 = vld [vmem:[%s684 + $0xe48] sm:$0xff]
        %v1441 = vld [vmem:[%s684 + $0xe50] sm:$0xff]
        %v1442 = vld [vmem:[%s684 + $0xe58] sm:$0xff]
        %v1443 = vld [vmem:[%s684 + $0xe60] sm:$0xff]
        %v1444 = vld [vmem:[%s684 + $0xe68] sm:$0xff]
        %v1445 = vld [vmem:[%s684 + $0xe70] sm:$0xff]
        %v1446 = vld [vmem:[%s684 + $0xe78] sm:$0xff]
        %v1447 = vld [vmem:[%s684 + $0xe80] sm:$0xff]
        %v1448 = vld [vmem:[%s684 + $0xe88] sm:$0xff]
        %v1449 = vld [vmem:[%s684 + $0xe90] sm:$0xff]
        %v1450 = vld [vmem:[%s684 + $0xe98] sm:$0xff]
        %v1451 = vld [vmem:[%s684 + $0xea0] sm:$0xff]
        %v1452 = vld [vmem:[%s684 + $0xea8] sm:$0xff]
        %v1453 = vld [vmem:[%s684 + $0xeb0] sm:$0xff]
        %v1454 = vld [vmem:[%s684 + $0xeb8] sm:$0xff]
        %v1455 = vld [vmem:[%s684 + $0xec0] sm:$0xff]
        %v1456 = vld [vmem:[%s684 + $0xec8] sm:$0xff]
        %v1457 = vld [vmem:[%s684 + $0xed0] sm:$0xff]
        %v1458 = vld [vmem:[%s684 + $0xed8] sm:$0xff]
        %v1459 = vld [vmem:[%s684 + $0xee0] sm:$0xff]
        %v1460 = vld [vmem:[%s684 + $0xee8] sm:$0xff]
        %v1461 = vld [vmem:[%s684 + $0xef0] sm:$0xff]
        %v1462 = vld [vmem:[%s684 + $0xef8] sm:$0xff]
        %v1463 = vld [vmem:[%s684 + $0xf00] sm:$0xff]
        %v1464 = vld [vmem:[%s684 + $0xf08] sm:$0xff]
        %v1465 = vld [vmem:[%s684 + $0xf10] sm:$0xff]
        %v1466 = vld [vmem:[%s684 + $0xf18] sm:$0xff]
        %v1467 = vld [vmem:[%s684 + $0xf20] sm:$0xff]
        %v1468 = vld [vmem:[%s684 + $0xf28] sm:$0xff]
        %v1469 = vld [vmem:[%s684 + $0xf30] sm:$0xff]
        %v1470 = vld [vmem:[%s684 + $0xf38] sm:$0xff]
        %v1471 = vld [vmem:[%s684 + $0xf40] sm:$0xff]
        %v1472 = vld [vmem:[%s684 + $0xf48] sm:$0xff]
        %v1473 = vld [vmem:[%s684 + $0xf50] sm:$0xff]
        %v1474 = vld [vmem:[%s684 + $0xf58] sm:$0xff]
        %v1475 = vld [vmem:[%s684 + $0xf60] sm:$0xff]
        %v1476 = vld [vmem:[%s684 + $0xf68] sm:$0xff]
        %v1477 = vld [vmem:[%s684 + $0xf70] sm:$0xff]
        %v1478 = vld [vmem:[%s684 + $0xf78] sm:$0xff]
        %v1479 = vld [vmem:[%s684 + $0xf80] sm:$0xff]
        %v1480 = vld [vmem:[%s684 + $0xf88] sm:$0xff]
        %v1481 = vld [vmem:[%s684 + $0xf90] sm:$0xff]
        %v1482 = vld [vmem:[%s684 + $0xf98] sm:$0xff]
        %v1483 = vld [vmem:[%s684 + $0xfa0] sm:$0xff]
        %v1484 = vld [vmem:[%s684 + $0xfa8] sm:$0xff]
        %v1485 = vld [vmem:[%s684 + $0xfb0] sm:$0xff]
        %v1486 = vld [vmem:[%s684 + $0xfb8] sm:$0xff]
        %v1487 = vld [vmem:[%s684 + $0xfc0] sm:$0xff]
        %v1488 = vld [vmem:[%s684 + $0xfc8] sm:$0xff]
        %v1489 = vld [vmem:[%s684 + $0xfd0] sm:$0xff]
        %v1490 = vld [vmem:[%s684 + $0xfd8] sm:$0xff]
        %v1491 = vld [vmem:[%s684 + $0xfe0] sm:$0xff]
        %v1492 = vld [vmem:[%s684 + $0xfe8] sm:$0xff]
        %v1493 = vld [vmem:[%s684 + $0xff0] sm:$0xff]
        %v1494 = vld [vmem:[%s684 + $0xff8] sm:$0xff]
        %v1495 = vld [vmem:[%s684 + $0x1000] sm:$0xff]
        %v1496 = vld [vmem:[%s684 + $0x1008] sm:$0xff]
        %v1497 = vld [vmem:[%s684 + $0x1010] sm:$0xff]
        %v1498 = vld [vmem:[%s684 + $0x1018] sm:$0xff]
        %v1499 = vld [vmem:[%s684 + $0x1020] sm:$0xff]
        %v1500 = vld [vmem:[%s684 + $0x1028] sm:$0xff]
        %v1501 = vld [vmem:[%s684 + $0x1030] sm:$0xff]
        %v1502 = vld [vmem:[%s684 + $0x1038] sm:$0xff]
        %v1503 = vld [vmem:[%s684 + $0x1040] sm:$0xff]
        %v1504 = vld [vmem:[%s684 + $0x1048] sm:$0xff]
        %v1505 = vld [vmem:[%s684 + $0x1050] sm:$0xff]
        %v1506 = vld [vmem:[%s684 + $0x1058] sm:$0xff]
        %v1507 = vld [vmem:[%s684 + $0x1060] sm:$0xff]
        %v1508 = vld [vmem:[%s684 + $0x1068] sm:$0xff]
        %v1509 = vld [vmem:[%s684 + $0x1070] sm:$0xff]
        %v1510 = vld [vmem:[%s684 + $0x1078] sm:$0xff]
        %v1511 = vld [vmem:[%s684 + $0x1080] sm:$0xff]
        %v1512 = vld [vmem:[%s684 + $0x1088] sm:$0xff]
        %v1513 = vld [vmem:[%s684 + $0x1090] sm:$0xff]
        %v1514 = vld [vmem:[%s684 + $0x1098] sm:$0xff]
        %v1515 = vld [vmem:[%s684 + $0x10a0] sm:$0xff]
        %v1516 = vld [vmem:[%s684 + $0x10a8] sm:$0xff]
        %v1517 = vld [vmem:[%s684 + $0x10b0] sm:$0xff]
        %v1518 = vld [vmem:[%s684 + $0x10b8] sm:$0xff]
        %v1519 = vld [vmem:[%s684 + $0x10c0] sm:$0xff]
        %v1520 = vld [vmem:[%s684 + $0x10c8] sm:$0xff]
        %v1521 = vld [vmem:[%s684 + $0x10d0] sm:$0xff]
        %v1522 = vld [vmem:[%s684 + $0x10d8] sm:$0xff]
        %v1523 = vld [vmem:[%s684 + $0x10e0] sm:$0xff]
        %v1524 = vld [vmem:[%s684 + $0x10e8] sm:$0xff]
        %v1525 = vld [vmem:[%s684 + $0x10f0] sm:$0xff]
        %v1526 = vld [vmem:[%s684 + $0x10f8] sm:$0xff]
        %v1527 = vld [vmem:[%s684 + $0x1100] sm:$0xff]
        %v1528 = vld [vmem:[%s684 + $0x1108] sm:$0xff]
        %v1529 = vld [vmem:[%s684 + $0x1110] sm:$0xff]
        %v1530 = vld [vmem:[%s684 + $0x1118] sm:$0xff]
        %v1531 = vld [vmem:[%s684 + $0x1120] sm:$0xff]
        %v1532 = vld [vmem:[%s684 + $0x1128] sm:$0xff]
        %v1533 = vld [vmem:[%s684 + $0x1130] sm:$0xff]
        %v1534 = vld [vmem:[%s684 + $0x1138] sm:$0xff]
        %v1535 = vld [vmem:[%s684 + $0x1140] sm:$0xff]
        %v1536 = vld [vmem:[%s684 + $0x1148] sm:$0xff]
        %v1537 = vld [vmem:[%s684 + $0x1150] sm:$0xff]
        %v1538 = vld [vmem:[%s684 + $0x1158] sm:$0xff]
        %v1539 = vld [vmem:[%s684 + $0x1160] sm:$0xff]
        %v1540 = vld [vmem:[%s684 + $0x1168] sm:$0xff]
        %v1541 = vld [vmem:[%s684 + $0x1170] sm:$0xff]
        %v1542 = vld [vmem:[%s684 + $0x1178] sm:$0xff]
        %v1543 = vld [vmem:[%s684 + $0x1180] sm:$0xff]
        %v1544 = vld [vmem:[%s684 + $0x1188] sm:$0xff]
        %v1545 = vld [vmem:[%s684 + $0x1190] sm:$0xff]
        %v1546 = vld [vmem:[%s684 + $0x1198] sm:$0xff]
        %v1547 = vld [vmem:[%s684 + $0x11a0] sm:$0xff]
        %v1548 = vld [vmem:[%s684 + $0x11a8] sm:$0xff]
        %v1549 = vld [vmem:[%s684 + $0x11b0] sm:$0xff]
        %v1550 = vld [vmem:[%s684 + $0x11b8] sm:$0xff]
        %v1551 = vld [vmem:[%s684 + $0x11c0] sm:$0xff]
        %v1552 = vld [vmem:[%s684 + $0x11c8] sm:$0xff]
        %v1553 = vld [vmem:[%s684 + $0x11d0] sm:$0xff]
        %v1554 = vld [vmem:[%s684 + $0x11d8] sm:$0xff]
        %v1555 = vld [vmem:[%s684 + $0x11e0] sm:$0xff]
        %v1556 = vld [vmem:[%s684 + $0x11e8] sm:$0xff]
        %v1557 = vld [vmem:[%s684 + $0x11f0] sm:$0xff]
        %v1558 = vld [vmem:[%s684 + $0x11f8] sm:$0xff]
        %v1559 = vld [vmem:[%s684 + $0x1200] sm:$0xff]
        %v1560 = vld [vmem:[%s684 + $0x1208] sm:$0xff]
        %v1561 = vld [vmem:[%s684 + $0x1210] sm:$0xff]
        %v1562 = vld [vmem:[%s684 + $0x1218] sm:$0xff]
        %v1563 = vld [vmem:[%s684 + $0x1220] sm:$0xff]
        %v1564 = vld [vmem:[%s684 + $0x1228] sm:$0xff]
        %v1565 = vld [vmem:[%s684 + $0x1230] sm:$0xff]
        %v1566 = vld [vmem:[%s684 + $0x1238] sm:$0xff]
        %v1567 = vld [vmem:[%s684 + $0x1240] sm:$0xff]
        %v1568 = vld [vmem:[%s684 + $0x1248] sm:$0xff]
        %v1569 = vld [vmem:[%s684 + $0x1250] sm:$0xff]
        %v1570 = vld [vmem:[%s684 + $0x1258] sm:$0xff]
        %v1571 = vld [vmem:[%s684 + $0x1260] sm:$0xff]
        %v1572 = vld [vmem:[%s684 + $0x1268] sm:$0xff]
        %v1573 = vld [vmem:[%s684 + $0x1270] sm:$0xff]
        %v1574 = vld [vmem:[%s684 + $0x1278] sm:$0xff]
        %v1575 = vld [vmem:[%s684 + $0x1280] sm:$0xff]
        %v1576 = vld [vmem:[%s684 + $0x1288] sm:$0xff]
        %v1577 = vld [vmem:[%s684 + $0x1290] sm:$0xff]
        %v1578 = vld [vmem:[%s684 + $0x1298] sm:$0xff]
        %v1579 = vld [vmem:[%s684 + $0x12a0] sm:$0xff]
        %v1580 = vld [vmem:[%s684 + $0x12a8] sm:$0xff]
        %v1581 = vld [vmem:[%s684 + $0x12b0] sm:$0xff]
        %v1582 = vld [vmem:[%s684 + $0x12b8] sm:$0xff]
        %v1583 = vld [vmem:[%s684 + $0x12c0] sm:$0xff]
        %v1584 = vld [vmem:[%s684 + $0x12c8] sm:$0xff]
        %v1585 = vld [vmem:[%s684 + $0x12d0] sm:$0xff]
        %v1586 = vld [vmem:[%s684 + $0x12d8] sm:$0xff]
        %v1587 = vld [vmem:[%s684 + $0x12e0] sm:$0xff]
        %v1588 = vld [vmem:[%s684 + $0x12e8] sm:$0xff]
        %v1589 = vld [vmem:[%s684 + $0x12f0] sm:$0xff]
        %v1590 = vld [vmem:[%s684 + $0x12f8] sm:$0xff]
        %v1591 = vld [vmem:[%s684 + $0x1300] sm:$0xff]
        %v1592 = vld [vmem:[%s684 + $0x1308] sm:$0xff]
        %v1593 = vld [vmem:[%s684 + $0x1310] sm:$0xff]
        %v1594 = vld [vmem:[%s684 + $0x1318] sm:$0xff]
        %v1595 = vld [vmem:[%s684 + $0x1320] sm:$0xff]
        %v1596 = vld [vmem:[%s684 + $0x1328] sm:$0xff]
        %v1597 = vld [vmem:[%s684 + $0x1330] sm:$0xff]
        %v1598 = vld [vmem:[%s684 + $0x1338] sm:$0xff]
        %v1599 = vld [vmem:[%s684 + $0x1340] sm:$0xff]
        %v1600 = vld [vmem:[%s684 + $0x1348] sm:$0xff]
        %v1601 = vld [vmem:[%s684 + $0x1350] sm:$0xff]
        %v1602 = vld [vmem:[%s684 + $0x1358] sm:$0xff]
        %v1603 = vld [vmem:[%s684 + $0x1360] sm:$0xff]
        %v1604 = vld [vmem:[%s684 + $0x1368] sm:$0xff]
        %v1605 = vld [vmem:[%s684 + $0x1370] sm:$0xff]
        %v1606 = vld [vmem:[%s684 + $0x1378] sm:$0xff]
        %v1607 = vld [vmem:[%s684 + $0x1380] sm:$0xff]
        %v1608 = vld [vmem:[%s684 + $0x1388] sm:$0xff]
        %v1609 = vld [vmem:[%s684 + $0x1390] sm:$0xff]
        %v1610 = vld [vmem:[%s684 + $0x1398] sm:$0xff]
        %v1611 = vld [vmem:[%s684 + $0x13a0] sm:$0xff]
        %v1612 = vld [vmem:[%s684 + $0x13a8] sm:$0xff]
        %v1613 = vld [vmem:[%s684 + $0x13b0] sm:$0xff]
        %v1614 = vld [vmem:[%s684 + $0x13b8] sm:$0xff]
        %v1615 = vld [vmem:[%s684 + $0x13c0] sm:$0xff]
        %v1616 = vld [vmem:[%s684 + $0x13c8] sm:$0xff]
        %v1617 = vld [vmem:[%s684 + $0x13d0] sm:$0xff]
        %v1618 = vld [vmem:[%s684 + $0x13d8] sm:$0xff]
        %v1619 = vld [vmem:[%s684 + $0x13e0] sm:$0xff]
        %v1620 = vld [vmem:[%s684 + $0x13e8] sm:$0xff]
        %v1621 = vld [vmem:[%s684 + $0x13f0] sm:$0xff]
        %v1622 = vld [vmem:[%s684 + $0x13f8] sm:$0xff]
        %v1623 = vld [vmem:[%s684 + $0x1400] sm:$0xff]
        %v1624 = vld [vmem:[%s684 + $0x1408] sm:$0xff]
        %v1625 = vld [vmem:[%s684 + $0x1410] sm:$0xff]
        %v1626 = vld [vmem:[%s684 + $0x1418] sm:$0xff]
        %v1627 = vld [vmem:[%s684 + $0x1420] sm:$0xff]
        %v1628 = vld [vmem:[%s684 + $0x1428] sm:$0xff]
        %v1629 = vld [vmem:[%s684 + $0x1430] sm:$0xff]
        %v1630 = vld [vmem:[%s684 + $0x1438] sm:$0xff]
        %v1631 = vld [vmem:[%s684 + $0x1440] sm:$0xff]
        %v1632 = vld [vmem:[%s684 + $0x1448] sm:$0xff]
        %v1633 = vld [vmem:[%s684 + $0x1450] sm:$0xff]
        %v1634 = vld [vmem:[%s684 + $0x1458] sm:$0xff]
        %v1635 = vld [vmem:[%s684 + $0x1460] sm:$0xff]
        %v1636 = vld [vmem:[%s684 + $0x1468] sm:$0xff]
        %v1637 = vld [vmem:[%s684 + $0x1470] sm:$0xff]
        %v1638 = vld [vmem:[%s684 + $0x1478] sm:$0xff]
        %v1639 = vld [vmem:[%s684 + $0x1480] sm:$0xff]
        %v1640 = vld [vmem:[%s684 + $0x1488] sm:$0xff]
        %v1641 = vld [vmem:[%s684 + $0x1490] sm:$0xff]
        %v1642 = vld [vmem:[%s684 + $0x1498] sm:$0xff]
        %v1643 = vld [vmem:[%s684 + $0x14a0] sm:$0xff]
        %v1644 = vld [vmem:[%s684 + $0x14a8] sm:$0xff]
        %v1645 = vld [vmem:[%s684 + $0x14b0] sm:$0xff]
        %v1646 = vld [vmem:[%s684 + $0x14b8] sm:$0xff]
        %v1647 = vld [vmem:[%s684 + $0x14c0] sm:$0xff]
        %v1648 = vld [vmem:[%s684 + $0x14c8] sm:$0xff]
        %v1649 = vld [vmem:[%s684 + $0x14d0] sm:$0xff]
        %v1650 = vld [vmem:[%s684 + $0x14d8] sm:$0xff]
        %v1651 = vld [vmem:[%s684 + $0x14e0] sm:$0xff]
        %v1652 = vld [vmem:[%s684 + $0x14e8] sm:$0xff]
        %v1653 = vld [vmem:[%s684 + $0x14f0] sm:$0xff]
        %v1654 = vld [vmem:[%s684 + $0x14f8] sm:$0xff]
        %v1655 = vld [vmem:[%s684 + $0x1500] sm:$0xff]
        %v1656 = vld [vmem:[%s684 + $0x1508] sm:$0xff]
        %v1657 = vld [vmem:[%s684 + $0x1510] sm:$0xff]
        %v1658 = vld [vmem:[%s684 + $0x1518] sm:$0xff]
        %v1659 = vld [vmem:[%s684 + $0x1520] sm:$0xff]
        %v1660 = vld [vmem:[%s684 + $0x1528] sm:$0xff]
        %v1661 = vld [vmem:[%s684 + $0x1530] sm:$0xff]
        %v1662 = vld [vmem:[%s684 + $0x1538] sm:$0xff]
        %v1663 = vld [vmem:[%s684 + $0x1540] sm:$0xff]
        %v1664 = vld [vmem:[%s684 + $0x1548] sm:$0xff]
        %v1665 = vld [vmem:[%s684 + $0x1550] sm:$0xff]
        %v1666 = vld [vmem:[%s684 + $0x1558] sm:$0xff]
        %v1667 = vld [vmem:[%s684 + $0x1560] sm:$0xff]
        %v1668 = vld [vmem:[%s684 + $0x1568] sm:$0xff]
        %v1669 = vld [vmem:[%s684 + $0x1570] sm:$0xff]
        %v1670 = vld [vmem:[%s684 + $0x1578] sm:$0xff]
        %v1671 = vld [vmem:[%s684 + $0x1580] sm:$0xff]
        %v1672 = vld [vmem:[%s684 + $0x1588] sm:$0xff]
        %v1673 = vld [vmem:[%s684 + $0x1590] sm:$0xff]
        %v1674 = vld [vmem:[%s684 + $0x1598] sm:$0xff]
        %v1675 = vld [vmem:[%s684 + $0x15a0] sm:$0xff]
        %v1676 = vld [vmem:[%s684 + $0x15a8] sm:$0xff]
        %v1677 = vld [vmem:[%s684 + $0x15b0] sm:$0xff]
        %v1678 = vld [vmem:[%s684 + $0x15b8] sm:$0xff]
        %v1679 = vld [vmem:[%s684 + $0x15c0] sm:$0xff]
        %v1680 = vld [vmem:[%s684 + $0x15c8] sm:$0xff]
        %v1681 = vld [vmem:[%s684 + $0x15d0] sm:$0xff]
        %v1682 = vld [vmem:[%s684 + $0x15d8] sm:$0xff]
        %v1683 = vld [vmem:[%s684 + $0x15e0] sm:$0xff]
        %v1684 = vld [vmem:[%s684 + $0x15e8] sm:$0xff]
        %v1685 = vld [vmem:[%s684 + $0x15f0] sm:$0xff]
        %v1686 = vld [vmem:[%s684 + $0x15f8] sm:$0xff]
        %v1687 = vld [vmem:[%s684 + $0x1600] sm:$0xff]
        %v1688 = vld [vmem:[%s684 + $0x1608] sm:$0xff]
        %v1689 = vld [vmem:[%s684 + $0x1610] sm:$0xff]
        %v1690 = vld [vmem:[%s684 + $0x1618] sm:$0xff]
        %v1691 = vld [vmem:[%s684 + $0x1620] sm:$0xff]
        %v1692 = vld [vmem:[%s684 + $0x1628] sm:$0xff]
        %v1693 = vld [vmem:[%s684 + $0x1630] sm:$0xff]
        %v1694 = vld [vmem:[%s684 + $0x1638] sm:$0xff]
        %v1695 = vld [vmem:[%s684 + $0x1640] sm:$0xff]
        %v1696 = vld [vmem:[%s684 + $0x1648] sm:$0xff]
        %v1697 = vld [vmem:[%s684 + $0x1650] sm:$0xff]
        %v1698 = vld [vmem:[%s684 + $0x1658] sm:$0xff]
        %v1699 = vld [vmem:[%s684 + $0x1660] sm:$0xff]
        %v1700 = vld [vmem:[%s684 + $0x1668] sm:$0xff]
        %v1701 = vld [vmem:[%s684 + $0x1670] sm:$0xff]
        %v1702 = vld [vmem:[%s684 + $0x1678] sm:$0xff]
        %v1703 = vld [vmem:[%s684 + $0x1680] sm:$0xff]
        %v1704 = vld [vmem:[%s684 + $0x1688] sm:$0xff]
        %v1705 = vld [vmem:[%s684 + $0x1690] sm:$0xff]
        %v1706 = vld [vmem:[%s684 + $0x1698] sm:$0xff]
        %v1707 = vld [vmem:[%s684 + $0x16a0] sm:$0xff]
        %v1708 = vld [vmem:[%s684 + $0x16a8] sm:$0xff]
        %v1709 = vld [vmem:[%s684 + $0x16b0] sm:$0xff]
        %v1710 = vld [vmem:[%s684 + $0x16b8] sm:$0xff]
        %v1711 = vld [vmem:[%s684 + $0x16c0] sm:$0xff]
        %v1712 = vld [vmem:[%s684 + $0x16c8] sm:$0xff]
        %v1713 = vld [vmem:[%s684 + $0x16d0] sm:$0xff]
        %v1714 = vld [vmem:[%s684 + $0x16d8] sm:$0xff]
        %v1715 = vld [vmem:[%s684 + $0x16e0] sm:$0xff]
        %v1716 = vld [vmem:[%s684 + $0x16e8] sm:$0xff]
        %v1717 = vld [vmem:[%s684 + $0x16f0] sm:$0xff]
        %v1718 = vld [vmem:[%s684 + $0x16f8] sm:$0xff]
        %v1719 = vld [vmem:[%s684 + $0x1700] sm:$0xff]
        %v1720 = vld [vmem:[%s684 + $0x1708] sm:$0xff]
        %v1721 = vld [vmem:[%s684 + $0x1710] sm:$0xff]
        %v1722 = vld [vmem:[%s684 + $0x1718] sm:$0xff]
        %v1723 = vld [vmem:[%s684 + $0x1720] sm:$0xff]
        %v1724 = vld [vmem:[%s684 + $0x1728] sm:$0xff]
        %v1725 = vld [vmem:[%s684 + $0x1730] sm:$0xff]
        %v1726 = vld [vmem:[%s684 + $0x1738] sm:$0xff]
        %v1727 = vld [vmem:[%s684 + $0x1740] sm:$0xff]
        %v1728 = vld [vmem:[%s684 + $0x1748] sm:$0xff]
        %v1729 = vld [vmem:[%s684 + $0x1750] sm:$0xff]
        %v1730 = vld [vmem:[%s684 + $0x1758] sm:$0xff]
        %v1731 = vld [vmem:[%s684 + $0x1760] sm:$0xff]
        %v1732 = vld [vmem:[%s684 + $0x1768] sm:$0xff]
        %v1733 = vld [vmem:[%s684 + $0x1770] sm:$0xff]
        %v1734 = vld [vmem:[%s684 + $0x1778] sm:$0xff]
        %v1735 = vld [vmem:[%s684 + $0x1780] sm:$0xff]
        %v1736 = vld [vmem:[%s684 + $0x1788] sm:$0xff]
        %v1737 = vld [vmem:[%s684 + $0x1790] sm:$0xff]
        %v1738 = vld [vmem:[%s684 + $0x1798] sm:$0xff]
        %v1739 = vld [vmem:[%s684 + $0x17a0] sm:$0xff]
        %v1740 = vld [vmem:[%s684 + $0x17a8] sm:$0xff]
        %v1741 = vld [vmem:[%s684 + $0x17b0] sm:$0xff]
        %v1742 = vld [vmem:[%s684 + $0x17b8] sm:$0xff]
        %v1743 = vld [vmem:[%s684 + $0x17c0] sm:$0xff]
        %v1744 = vld [vmem:[%s684 + $0x17c8] sm:$0xff]
        %v1745 = vld [vmem:[%s684 + $0x17d0] sm:$0xff]
        %v1746 = vld [vmem:[%s684 + $0x17d8] sm:$0xff]
        %v1747 = vld [vmem:[%s684 + $0x17e0] sm:$0xff]
        %v1748 = vld [vmem:[%s684 + $0x17e8] sm:$0xff]
        %v1749 = vld [vmem:[%s684 + $0x17f0] sm:$0xff]
        %v1750 = vld [vmem:[%s684 + $0x17f8] sm:$0xff]
        %v1751 = vld [vmem:[%s684 + $0x1800] sm:$0xff]
        %v1752 = vld [vmem:[%s684 + $0x1808] sm:$0xff]
        %v1753 = vld [vmem:[%s684 + $0x1810] sm:$0xff]
        %v1754 = vld [vmem:[%s684 + $0x1818] sm:$0xff]
        %v1755 = vld [vmem:[%s684 + $0x1820] sm:$0xff]
        %v1756 = vld [vmem:[%s684 + $0x1828] sm:$0xff]
        %v1757 = vld [vmem:[%s684 + $0x1830] sm:$0xff]
        %v1758 = vld [vmem:[%s684 + $0x1838] sm:$0xff]
        %v1759 = vld [vmem:[%s684 + $0x1840] sm:$0xff]
        %v1760 = vld [vmem:[%s684 + $0x1848] sm:$0xff]
        %v1761 = vld [vmem:[%s684 + $0x1850] sm:$0xff]
        %v1762 = vld [vmem:[%s684 + $0x1858] sm:$0xff]
        %v1763 = vld [vmem:[%s684 + $0x1860] sm:$0xff]
        %v1764 = vld [vmem:[%s684 + $0x1868] sm:$0xff]
        %v1765 = vld [vmem:[%s684 + $0x1870] sm:$0xff]
        %v1766 = vld [vmem:[%s684 + $0x1878] sm:$0xff]
        %v1767 = vld [vmem:[%s684 + $0x1880] sm:$0xff]
        %v1768 = vld [vmem:[%s684 + $0x1888] sm:$0xff]
        %v1769 = vld [vmem:[%s684 + $0x1890] sm:$0xff]
        %v1770 = vld [vmem:[%s684 + $0x1898] sm:$0xff]
        %v1771 = vld [vmem:[%s684 + $0x18a0] sm:$0xff]
        %v1772 = vld [vmem:[%s684 + $0x18a8] sm:$0xff]
        %v1773 = vld [vmem:[%s684 + $0x18b0] sm:$0xff]
        %v1774 = vld [vmem:[%s684 + $0x18b8] sm:$0xff]
        %v1775 = vld [vmem:[%s684 + $0x18c0] sm:$0xff]
        %v1776 = vld [vmem:[%s684 + $0x18c8] sm:$0xff]
        %v1777 = vld [vmem:[%s684 + $0x18d0] sm:$0xff]
        %v1778 = vld [vmem:[%s684 + $0x18d8] sm:$0xff]
        %v1779 = vld [vmem:[%s684 + $0x18e0] sm:$0xff]
        %v1780 = vld [vmem:[%s684 + $0x18e8] sm:$0xff]
        %v1781 = vld [vmem:[%s684 + $0x18f0] sm:$0xff]
        %v1782 = vld [vmem:[%s684 + $0x18f8] sm:$0xff]
        %v1783 = vld [vmem:[%s684 + $0x1900] sm:$0xff]
        %v1784 = vld [vmem:[%s684 + $0x1908] sm:$0xff]
        %v1785 = vld [vmem:[%s684 + $0x1910] sm:$0xff]
        %v1786 = vld [vmem:[%s684 + $0x1918] sm:$0xff]
        %v1787 = vld [vmem:[%s684 + $0x1920] sm:$0xff]
        %v1788 = vld [vmem:[%s684 + $0x1928] sm:$0xff]
        %v1789 = vld [vmem:[%s684 + $0x1930] sm:$0xff]
        %v1790 = vld [vmem:[%s684 + $0x1938] sm:$0xff]
        %v1791 = vld [vmem:[%s684 + $0x1940] sm:$0xff]
        %v1792 = vld [vmem:[%s684 + $0x1948] sm:$0xff]
        %v1793 = vld [vmem:[%s684 + $0x1950] sm:$0xff]
        %v1794 = vld [vmem:[%s684 + $0x1958] sm:$0xff]
        %v1795 = vld [vmem:[%s684 + $0x1960] sm:$0xff]
        %v1796 = vld [vmem:[%s684 + $0x1968] sm:$0xff]
        %v1797 = vld [vmem:[%s684 + $0x1970] sm:$0xff]
        %v1798 = vld [vmem:[%s684 + $0x1978] sm:$0xff]
        %v1799 = vld [vmem:[%s684 + $0x1980] sm:$0xff]
        %v1800 = vld [vmem:[%s684 + $0x1988] sm:$0xff]
        %v1801 = vld [vmem:[%s684 + $0x1990] sm:$0xff]
        %v1802 = vld [vmem:[%s684 + $0x1998] sm:$0xff]
        %v1803 = vld [vmem:[%s684 + $0x19a0] sm:$0xff]
        %v1804 = vld [vmem:[%s684 + $0x19a8] sm:$0xff]
        %v1805 = vld [vmem:[%s684 + $0x19b0] sm:$0xff]
        %v1806 = vld [vmem:[%s684 + $0x19b8] sm:$0xff]
        %v1807 = vld [vmem:[%s684 + $0x19c0] sm:$0xff]
        %v1808 = vld [vmem:[%s684 + $0x19c8] sm:$0xff]
        %v1809 = vld [vmem:[%s684 + $0x19d0] sm:$0xff]
        %v1810 = vld [vmem:[%s684 + $0x19d8] sm:$0xff]
        %v1811 = vld [vmem:[%s684 + $0x19e0] sm:$0xff]
        %v1812 = vld [vmem:[%s684 + $0x19e8] sm:$0xff]
        %v1813 = vld [vmem:[%s684 + $0x19f0] sm:$0xff]
        %v1814 = vld [vmem:[%s684 + $0x19f8] sm:$0xff]
        %v1815 = vld [vmem:[%s684 + $0x1a00] sm:$0xff]
        %v1816 = vld [vmem:[%s684 + $0x1a08] sm:$0xff]
        %v1817 = vld [vmem:[%s684 + $0x1a10] sm:$0xff]
        %v1818 = vld [vmem:[%s684 + $0x1a18] sm:$0xff]
        %v1819 = vld [vmem:[%s684 + $0x1a20] sm:$0xff]
        %v1820 = vld [vmem:[%s684 + $0x1a28] sm:$0xff]
        %v1821 = vld [vmem:[%s684 + $0x1a30] sm:$0xff]
        %v1822 = vld [vmem:[%s684 + $0x1a38] sm:$0xff]
        %v1823 = vld [vmem:[%s684 + $0x1a40] sm:$0xff]
        %v1824 = vld [vmem:[%s684 + $0x1a48] sm:$0xff]
        %v1825 = vld [vmem:[%s684 + $0x1a50] sm:$0xff]
        %v1826 = vld [vmem:[%s684 + $0x1a58] sm:$0xff]
        %v1827 = vld [vmem:[%s684 + $0x1a60] sm:$0xff]
        %v1828 = vld [vmem:[%s684 + $0x1a68] sm:$0xff]
        %v1829 = vld [vmem:[%s684 + $0x1a70] sm:$0xff]
        %v1830 = vld [vmem:[%s684 + $0x1a78] sm:$0xff]
        %v1831 = vld [vmem:[%s684 + $0x1a80] sm:$0xff]
        %v1832 = vld [vmem:[%s684 + $0x1a88] sm:$0xff]
        %v1833 = vld [vmem:[%s684 + $0x1a90] sm:$0xff]
        %v1834 = vld [vmem:[%s684 + $0x1a98] sm:$0xff]
        %v1835 = vld [vmem:[%s684 + $0x1aa0] sm:$0xff]
        %v1836 = vld [vmem:[%s684 + $0x1aa8] sm:$0xff]
        %v1837 = vld [vmem:[%s684 + $0x1ab0] sm:$0xff]
        %v1838 = vld [vmem:[%s684 + $0x1ab8] sm:$0xff]
        %v1839 = vld [vmem:[%s684 + $0x1ac0] sm:$0xff]
        %v1840 = vld [vmem:[%s684 + $0x1ac8] sm:$0xff]
        %v1841 = vld [vmem:[%s684 + $0x1ad0] sm:$0xff]
        %v1842 = vld [vmem:[%s684 + $0x1ad8] sm:$0xff]
        %v1843 = vld [vmem:[%s684 + $0x1ae0] sm:$0xff]
        %v1844 = vld [vmem:[%s684 + $0x1ae8] sm:$0xff]
        %v1845 = vld [vmem:[%s684 + $0x1af0] sm:$0xff]
        %v1846 = vld [vmem:[%s684 + $0x1af8] sm:$0xff]
        %1847 = vmatprep.subr.mxu0 %v984
        %1848 = vmatpush1.msra.mxu0 %v983
        %1849 = vmatprep.subr.mxu0 %v986
        %1850 = vmatpush1.msra.mxu0 %v985
        %1851 = vmatprep.subr.mxu0 %v988
        %1852 = vmatpush1.msra.mxu0 %v987
        %1853 = vmatprep.subr.mxu0 %v990
        %1854 = vmatpush1.msra.mxu0 %v989
        %1855 = vmatprep.subr.mxu0 %v992
        %1856 = vmatpush1.msra.mxu0 %v991
        %1857 = vmatprep.subr.mxu0 %v994
        %1858 = vmatpush1.msra.mxu0 %v993
        %1859 = vmatprep.subr.mxu0 %v996
        %1860 = vmatpush1.msra.mxu0 %v995
        %1861 = vmatprep.subr.mxu0 %v998
        %1862 = vmatpush1.msra.mxu0 %v997
        %1863 = vmatprep.subr.mxu0 %v1000
        %1864 = vmatpush1.msra.mxu0 %v999
        %1865 = vmatprep.subr.mxu0 %v1002
        %1866 = vmatpush1.msra.mxu0 %v1001
        %1867 = vmatprep.subr.mxu0 %v1004
        %1868 = vmatpush1.msra.mxu0 %v1003
        %1869 = vmatprep.subr.mxu0 %v1006
        %1870 = vmatpush1.msra.mxu0 %v1005
        %1871 = vmatprep.subr.mxu0 %v1008
        %1872 = vmatpush1.msra.mxu0 %v1007
        %1873 = vmatprep.subr.mxu0 %v1010
        %1874 = vmatpush1.msra.mxu0 %v1009
        %1875 = vmatprep.subr.mxu0 %v1012
        %1876 = vmatpush1.msra.mxu0 %v1011
        %1877 = vmatprep.subr.mxu0 %v1014
        %1878 = vmatpush1.msra.mxu0 %v1013
        %1879 = vmatprep.subr.mxu0 %v1016
        %1880 = vmatpush1.msra.mxu0 %v1015
        %1881 = vmatprep.subr.mxu0 %v1018
        %1882 = vmatpush1.msra.mxu0 %v1017
        %1883 = vmatprep.subr.mxu0 %v1020
        %1884 = vmatpush1.msra.mxu0 %v1019
        %1885 = vmatprep.subr.mxu0 %v1022
        %1886 = vmatpush1.msra.mxu0 %v1021
        %1887 = vmatprep.subr.mxu0 %v1024
        %1888 = vmatpush1.msra.mxu0 %v1023
        %1889 = vmatprep.subr.mxu0 %v1026
        %1890 = vmatpush1.msra.mxu0 %v1025
        %1891 = vmatprep.subr.mxu0 %v1028
        %1892 = vmatpush1.msra.mxu0 %v1027
        %1893 = vmatprep.subr.mxu0 %v1030
        %1894 = vmatpush1.msra.mxu0 %v1029
        %1895 = vmatprep.subr.mxu0 %v1032
        %1896 = vmatpush1.msra.mxu0 %v1031
        %1897 = vmatprep.subr.mxu0 %v1034
        %1898 = vmatpush1.msra.mxu0 %v1033
        %1899 = vmatprep.subr.mxu0 %v1036
        %1900 = vmatpush1.msra.mxu0 %v1035
        %1901 = vmatprep.subr.mxu0 %v1038
        %1902 = vmatpush1.msra.mxu0 %v1037
        %1903 = vmatprep.subr.mxu0 %v1040
        %1904 = vmatpush1.msra.mxu0 %v1039
        %1905 = vmatprep.subr.mxu0 %v1042
        %1906 = vmatpush1.msra.mxu0 %v1041
        %1907 = vmatprep.subr.mxu0 %v1044
        %1908 = vmatpush1.msra.mxu0 %v1043
        %1909 = vmatprep.subr.mxu0 %v1046
        %1910 = vmatpush1.msra.mxu0 %v1045
        %1911 = vmatprep.mubr.f32.mxu0 %v741
        %1912 = vmatmul.mubr.f32.gmra.mrb[0].mxu0 %v740
        %v1913 = vpop.f32.mrb[0].mxu0
        %v1914 = vadd.f32 0.0, %v1913
        %v1915 = vpop.f32.mrb[0].mxu0
        %v1916 = vadd.f32 0.0, %v1915
        %1917 = vmatprep.mubr.f32.mxu0 %v768
        %1918 = vmatmul.mubr.f32.gmra.mrb[0].mxu0 %v767
        %v1919 = vpop.f32.mrb[0].mxu0
        %v1920 = vadd.f32 0.0, %v1919
        %v1921 = vpop.f32.mrb[0].mxu0
        %v1922 = vadd.f32 0.0, %v1921
        %1923 = vmatprep.mubr.f32.mxu0 %v795
        %1924 = vmatmul.mubr.f32.gmra.mrb[0].mxu0 %v794
        %v1925 = vpop.f32.mrb[0].mxu0
        %v1926 = vadd.f32 0.0, %v1925
        %v1927 = vpop.f32.mrb[0].mxu0
        %v1928 = vadd.f32 0.0, %v1927
        %1929 = vmatprep.mubr.f32.mxu0 %v822
        %1930 = vmatmul.mubr.f32.gmra.mrb[0].mxu0 %v821
        %v1931 = vpop.f32.mrb[0].mxu0
        %v1932 = vadd.f32 0.0, %v1931
        %v1933 = vpop.f32.mrb[0].mxu0
        %v1934 = vadd.f32 0.0, %v1933
        %1935 = vmatprep.mubr.f32.mxu0 %v849
        %1936 = vmatmul.mubr.f32.gmra.mrb[0].mxu0 %v848
        %v1937 = vpop.f32.mrb[0].mxu0
        %v1938 = vadd.f32 0.0, %v1937
        %v1939 = vpop.f32.mrb[0].mxu0
        %v1940 = vadd.f32 0.0, %v1939
        %1941 = vmatprep.mubr.f32.mxu0 %v876
        %1942 = vmatmul.mubr.f32.gmra.mrb[0].mxu0 %v875
        %v1943 = vpop.f32.mrb[0].mxu0
        %v1944 = vadd.f32 0.0, %v1943
        %v1945 = vpop.f32.mrb[0].mxu0
        %v1946 = vadd.f32 0.0, %v1945
        %1947 = vmatprep.mubr.f32.mxu0 %v903
        %1948 = vmatmul.mubr.f32.gmra.mrb[0].mxu0 %v902
        %v1949 = vpop.f32.mrb[0].mxu0
        %v1950 = vadd.f32 0.0, %v1949
        %v1951 = vpop.f32.mrb[0].mxu0
        %v1952 = vadd.f32 0.0, %v1951
        %1953 = vmatprep.mubr.f32.mxu0 %v930
        %1954 = vmatmul.mubr.f32.gmra.mrb[0].mxu0 %v929
        %v1955 = vpop.f32.mrb[0].mxu0
        %v1956 = vadd.f32 0.0, %v1955
        %v1957 = vpop.f32.mrb[0].mxu0
        %v1958 = vadd.f32 0.0, %v1957
        %1959 = vmatprep.mubr.f32.mxu0 %v957
        %1960 = vmatmul.mubr.f32.gmra.mrb[0].mxu0 %v956
        %v1961 = vpop.f32.mrb[0].mxu0
        %v1962 = vadd.f32 0.0, %v1961
        %v1963 = vpop.f32.mrb[0].mxu0
        %v1964 = vadd.f32 0.0, %v1963
        %1965 = vdwg.mxu0
        %1966 = vmatprep.subr.mxu0 %v1048
        %1967 = vmatpush1.msra.mxu0 %v1047
        %1968 = vmatprep.subr.mxu0 %v1050
        %1969 = vmatpush1.msra.mxu0 %v1049
        %1970 = vmatprep.subr.mxu0 %v1052
        %1971 = vmatpush1.msra.mxu0 %v1051
        %1972 = vmatprep.subr.mxu0 %v1054
        %1973 = vmatpush1.msra.mxu0 %v1053
        %1974 = vmatprep.subr.mxu0 %v1056
        %1975 = vmatpush1.msra.mxu0 %v1055
        %1976 = vmatprep.subr.mxu0 %v1058
        %1977 = vmatpush1.msra.mxu0 %v1057
        %1978 = vmatprep.subr.mxu0 %v1060
        %1979 = vmatpush1.msra.mxu0 %v1059
        %1980 = vmatprep.subr.mxu0 %v1062
        %1981 = vmatpush1.msra.mxu0 %v1061
        %1982 = vmatprep.subr.mxu0 %v1064
        %1983 = vmatpush1.msra.mxu0 %v1063
        %1984 = vmatprep.subr.mxu0 %v1066
        %1985 = vmatpush1.msra.mxu0 %v1065
        %1986 = vmatprep.subr.mxu0 %v1068
        %1987 = vmatpush1.msra.mxu0 %v1067
        %1988 = vmatprep.subr.mxu0 %v1070
        %1989 = vmatpush1.msra.mxu0 %v1069
        %1990 = vmatprep.subr.mxu0 %v1072
        %1991 = vmatpush1.msra.mxu0 %v1071
        %1992 = vmatprep.subr.mxu0 %v1074
        %1993 = vmatpush1.msra.mxu0 %v1073
        %1994 = vmatprep.subr.mxu0 %v1076
        %1995 = vmatpush1.msra.mxu0 %v1075
        %1996 = vmatprep.subr.mxu0 %v1078
        %1997 = vmatpush1.msra.mxu0 %v1077
        %1998 = vmatprep.subr.mxu0 %v1080
        %1999 = vmatpush1.msra.mxu0 %v1079
        %2000 = vmatprep.subr.mxu0 %v1082
        %2001 = vmatpush1.msra.mxu0 %v1081
        %2002 = vmatprep.subr.mxu0 %v1084
        %2003 = vmatpush1.msra.mxu0 %v1083
        %2004 = vmatprep.subr.mxu0 %v1086
        %2005 = vmatpush1.msra.mxu0 %v1085
        %2006 = vmatprep.subr.mxu0 %v1088
        %2007 = vmatpush1.msra.mxu0 %v1087
        %2008 = vmatprep.subr.mxu0 %v1090
        %2009 = vmatpush1.msra.mxu0 %v1089
        %2010 = vmatprep.subr.mxu0 %v1092
        %2011 = vmatpush1.msra.mxu0 %v1091
        %2012 = vmatprep.subr.mxu0 %v1094
        %2013 = vmatpush1.msra.mxu0 %v1093
        %2014 = vmatprep.subr.mxu0 %v1096
        %2015 = vmatpush1.msra.mxu0 %v1095
        %2016 = vmatprep.subr.mxu0 %v1098
        %2017 = vmatpush1.msra.mxu0 %v1097
        %2018 = vmatprep.subr.mxu0 %v1100
        %2019 = vmatpush1.msra.mxu0 %v1099
        %2020 = vmatprep.subr.mxu0 %v1102
        %2021 = vmatpush1.msra.mxu0 %v1101
        %2022 = vmatprep.subr.mxu0 %v1104
        %2023 = vmatpush1.msra.mxu0 %v1103
        %2024 = vmatprep.subr.mxu0 %v1106
        %2025 = vmatpush1.msra.mxu0 %v1105
        %2026 = vmatprep.subr.mxu0 %v1108
        %2027 = vmatpush1.msra.mxu0 %v1107
        %2028 = vmatprep.subr.mxu0 %v1110
        %2029 = vmatpush1.msra.mxu0 %v1109
        %2030 = vmatprep.mubr.f32.mxu0 %v743
        %2031 = vmatmul.mubr.f32.gmra.mrb[0].mxu0 %v742
        %v2032 = vpop.f32.mrb[0].mxu0
        %v2033 = vadd.f32 %v1914, %v2032
        %v2034 = vpop.f32.mrb[0].mxu0
        %v2035 = vadd.f32 %v1916, %v2034
        %2036 = vmatprep.mubr.f32.mxu0 %v770
        %2037 = vmatmul.mubr.f32.gmra.mrb[0].mxu0 %v769
        %v2038 = vpop.f32.mrb[0].mxu0
        %v2039 = vadd.f32 %v1920, %v2038
        %v2040 = vpop.f32.mrb[0].mxu0
        %v2041 = vadd.f32 %v1922, %v2040
        %2042 = vmatprep.mubr.f32.mxu0 %v797
        %2043 = vmatmul.mubr.f32.gmra.mrb[0].mxu0 %v796
        %v2044 = vpop.f32.mrb[0].mxu0
        %v2045 = vadd.f32 %v1926, %v2044
        %v2046 = vpop.f32.mrb[0].mxu0
        %v2047 = vadd.f32 %v1928, %v2046
        %2048 = vmatprep.mubr.f32.mxu0 %v824
        %2049 = vmatmul.mubr.f32.gmra.mrb[0].mxu0 %v823
        %v2050 = vpop.f32.mrb[0].mxu0
        %v2051 = vadd.f32 %v1932, %v2050
        %v2052 = vpop.f32.mrb[0].mxu0
        %v2053 = vadd.f32 %v1934, %v2052
        %2054 = vmatprep.mubr.f32.mxu0 %v851
        %2055 = vmatmul.mubr.f32.gmra.mrb[0].mxu0 %v850
        %v2056 = vpop.f32.mrb[0].mxu0
        %v2057 = vadd.f32 %v1938, %v2056
        %v2058 = vpop.f32.mrb[0].mxu0
        %v2059 = vadd.f32 %v1940, %v2058
        %2060 = vmatprep.mubr.f32.mxu0 %v878
        %2061 = vmatmul.mubr.f32.gmra.mrb[0].mxu0 %v877
        %v2062 = vpop.f32.mrb[0].mxu0
        %v2063 = vadd.f32 %v1944, %v2062
        %v2064 = vpop.f32.mrb[0].mxu0
        %v2065 = vadd.f32 %v1946, %v2064
        %2066 = vmatprep.mubr.f32.mxu0 %v905
        %2067 = vmatmul.mubr.f32.gmra.mrb[0].mxu0 %v904
        %v2068 = vpop.f32.mrb[0].mxu0
        %v2069 = vadd.f32 %v1950, %v2068
        %v2070 = vpop.f32.mrb[0].mxu0
        %v2071 = vadd.f32 %v1952, %v2070
        %2072 = vmatprep.mubr.f32.mxu0 %v932
        %2073 = vmatmul.mubr.f32.gmra.mrb[0].mxu0 %v931
        %v2074 = vpop.f32.mrb[0].mxu0
        %v2075 = vadd.f32 %v1956, %v2074
        %v2076 = vpop.f32.mrb[0].mxu0
        %v2077 = vadd.f32 %v1958, %v2076
        %2078 = vmatprep.mubr.f32.mxu0 %v959
        %2079 = vmatmul.mubr.f32.gmra.mrb[0].mxu0 %v958
        %v2080 = vpop.f32.mrb[0].mxu0
        %v2081 = vadd.f32 %v1962, %v2080
        %v2082 = vpop.f32.mrb[0].mxu0
        %v2083 = vadd.f32 %v1964, %v2082
        %2084 = vdwg.mxu0
        %2085 = vmatprep.subr.mxu0 %v1112
        %2086 = vmatpush1.msra.mxu0 %v1111
        %2087 = vmatprep.subr.mxu0 %v1114
        %2088 = vmatpush1.msra.mxu0 %v1113
        %2089 = vmatprep.subr.mxu0 %v1116
        %2090 = vmatpush1.msra.mxu0 %v1115
        %2091 = vmatprep.subr.mxu0 %v1118
        %2092 = vmatpush1.msra.mxu0 %v1117
        %2093 = vmatprep.subr.mxu0 %v1120
        %2094 = vmatpush1.msra.mxu0 %v1119
        %2095 = vmatprep.subr.mxu0 %v1122
        %2096 = vmatpush1.msra.mxu0 %v1121
        %2097 = vmatprep.subr.mxu0 %v1124
        %2098 = vmatpush1.msra.mxu0 %v1123
        %2099 = vmatprep.subr.mxu0 %v1126
        %2100 = vmatpush1.msra.mxu0 %v1125
        %2101 = vmatprep.subr.mxu0 %v1128
        %2102 = vmatpush1.msra.mxu0 %v1127
        %2103 = vmatprep.subr.mxu0 %v1130
        %2104 = vmatpush1.msra.mxu0 %v1129
        %2105 = vmatprep.subr.mxu0 %v1132
        %2106 = vmatpush1.msra.mxu0 %v1131
        %2107 = vmatprep.subr.mxu0 %v1134
        %2108 = vmatpush1.msra.mxu0 %v1133
        %2109 = vmatprep.subr.mxu0 %v1136
        %2110 = vmatpush1.msra.mxu0 %v1135
        %2111 = vmatprep.subr.mxu0 %v1138
        %2112 = vmatpush1.msra.mxu0 %v1137
        %2113 = vmatprep.subr.mxu0 %v1140
        %2114 = vmatpush1.msra.mxu0 %v1139
        %2115 = vmatprep.subr.mxu0 %v1142
        %2116 = vmatpush1.msra.mxu0 %v1141
        %2117 = vmatprep.subr.mxu0 %v1144
        %2118 = vmatpush1.msra.mxu0 %v1143
        %2119 = vmatprep.subr.mxu0 %v1146
        %2120 = vmatpush1.msra.mxu0 %v1145
        %2121 = vmatprep.subr.mxu0 %v1148
        %2122 = vmatpush1.msra.mxu0 %v1147
        %2123 = vmatprep.subr.mxu0 %v1150
        %2124 = vmatpush1.msra.mxu0 %v1149
        %2125 = vmatprep.subr.mxu0 %v1152
        %2126 = vmatpush1.msra.mxu0 %v1151
        %2127 = vmatprep.subr.mxu0 %v1154
        %2128 = vmatpush1.msra.mxu0 %v1153
        %2129 = vmatprep.subr.mxu0 %v1156
        %2130 = vmatpush1.msra.mxu0 %v1155
        %2131 = vmatprep.subr.mxu0 %v1158
        %2132 = vmatpush1.msra.mxu0 %v1157
        %2133 = vmatprep.subr.mxu0 %v1160
        %2134 = vmatpush1.msra.mxu0 %v1159
        %2135 = vmatprep.subr.mxu0 %v1162
        %2136 = vmatpush1.msra.mxu0 %v1161
        %2137 = vmatprep.subr.mxu0 %v1164
        %2138 = vmatpush1.msra.mxu0 %v1163
        %2139 = vmatprep.subr.mxu0 %v1166
        %2140 = vmatpush1.msra.mxu0 %v1165
        %2141 = vmatprep.subr.mxu0 %v1168
        %2142 = vmatpush1.msra.mxu0 %v1167
        %2143 = vmatprep.subr.mxu0 %v1170
        %2144 = vmatpush1.msra.mxu0 %v1169
        %2145 = vmatprep.subr.mxu0 %v1172
        %2146 = vmatpush1.msra.mxu0 %v1171
        %2147 = vmatprep.subr.mxu0 %v1174
        %2148 = vmatpush1.msra.mxu0 %v1173
        %2149 = vmatprep.mubr.f32.mxu0 %v745
        %2150 = vmatmul.mubr.f32.gmra.mrb[0].mxu0 %v744
        %v2151 = vpop.f32.mrb[0].mxu0
        %v2152 = vadd.f32 %v2033, %v2151
        %v2153 = vpop.f32.mrb[0].mxu0
        %v2154 = vadd.f32 %v2035, %v2153
        %2155 = vmatprep.mubr.f32.mxu0 %v772
        %2156 = vmatmul.mubr.f32.gmra.mrb[0].mxu0 %v771
        %v2157 = vpop.f32.mrb[0].mxu0
        %v2158 = vadd.f32 %v2039, %v2157
        %v2159 = vpop.f32.mrb[0].mxu0
        %v2160 = vadd.f32 %v2041, %v2159
        %2161 = vmatprep.mubr.f32.mxu0 %v799
        %2162 = vmatmul.mubr.f32.gmra.mrb[0].mxu0 %v798
        %v2163 = vpop.f32.mrb[0].mxu0
        %v2164 = vadd.f32 %v2045, %v2163
        %v2165 = vpop.f32.mrb[0].mxu0
        %v2166 = vadd.f32 %v2047, %v2165
        %2167 = vmatprep.mubr.f32.mxu0 %v826
        %2168 = vmatmul.mubr.f32.gmra.mrb[0].mxu0 %v825
        %v2169 = vpop.f32.mrb[0].mxu0
        %v2170 = vadd.f32 %v2051, %v2169
        %v2171 = vpop.f32.mrb[0].mxu0
        %v2172 = vadd.f32 %v2053, %v2171
        %2173 = vmatprep.mubr.f32.mxu0 %v853
        %2174 = vmatmul.mubr.f32.gmra.mrb[0].mxu0 %v852
        %v2175 = vpop.f32.mrb[0].mxu0
        %v2176 = vadd.f32 %v2057, %v2175
        %v2177 = vpop.f32.mrb[0].mxu0
        %v2178 = vadd.f32 %v2059, %v2177
        %2179 = vmatprep.mubr.f32.mxu0 %v880
        %2180 = vmatmul.mubr.f32.gmra.mrb[0].mxu0 %v879
        %v2181 = vpop.f32.mrb[0].mxu0
        %v2182 = vadd.f32 %v2063, %v2181
        %v2183 = vpop.f32.mrb[0].mxu0
        %v2184 = vadd.f32 %v2065, %v2183
        %2185 = vmatprep.mubr.f32.mxu0 %v907
        %2186 = vmatmul.mubr.f32.gmra.mrb[0].mxu0 %v906
        %v2187 = vpop.f32.mrb[0].mxu0
        %v2188 = vadd.f32 %v2069, %v2187
        %v2189 = vpop.f32.mrb[0].mxu0
        %v2190 = vadd.f32 %v2071, %v2189
        %2191 = vmatprep.mubr.f32.mxu0 %v934
        %2192 = vmatmul.mubr.f32.gmra.mrb[0].mxu0 %v933
        %v2193 = vpop.f32.mrb[0].mxu0
        %v2194 = vadd.f32 %v2075, %v2193
        %v2195 = vpop.f32.mrb[0].mxu0
        %v2196 = vadd.f32 %v2077, %v2195
        %2197 = vmatprep.mubr.f32.mxu0 %v961
        %2198 = vmatmul.mubr.f32.gmra.mrb[0].mxu0 %v960
        %v2199 = vpop.f32.mrb[0].mxu0
        %v2200 = vadd.f32 %v2081, %v2199
        %v2201 = vpop.f32.mrb[0].mxu0
        %v2202 = vadd.f32 %v2083, %v2201
        %2203 = vdwg.mxu0
        %2204 = vmatprep.subr.mxu0 %v1176
        %2205 = vmatpush1.msra.mxu0 %v1175
        %2206 = vmatprep.subr.mxu0 %v1178
        %2207 = vmatpush1.msra.mxu0 %v1177
        %2208 = vmatprep.subr.mxu0 %v1180
        %2209 = vmatpush1.msra.mxu0 %v1179
        %2210 = vmatprep.subr.mxu0 %v1182
        %2211 = vmatpush1.msra.mxu0 %v1181
        %2212 = vmatprep.subr.mxu0 %v1184
        %2213 = vmatpush1.msra.mxu0 %v1183
        %2214 = vmatprep.subr.mxu0 %v1186
        %2215 = vmatpush1.msra.mxu0 %v1185
        %2216 = vmatprep.subr.mxu0 %v1188
        %2217 = vmatpush1.msra.mxu0 %v1187
        %2218 = vmatprep.subr.mxu0 %v1190
        %2219 = vmatpush1.msra.mxu0 %v1189
        %2220 = vmatprep.subr.mxu0 %v1192
        %2221 = vmatpush1.msra.mxu0 %v1191
        %2222 = vmatprep.subr.mxu0 %v1194
        %2223 = vmatpush1.msra.mxu0 %v1193
        %2224 = vmatprep.subr.mxu0 %v1196
        %2225 = vmatpush1.msra.mxu0 %v1195
        %2226 = vmatprep.subr.mxu0 %v1198
        %2227 = vmatpush1.msra.mxu0 %v1197
        %2228 = vmatprep.subr.mxu0 %v1200
        %2229 = vmatpush1.msra.mxu0 %v1199
        %2230 = vmatprep.subr.mxu0 %v1202
        %2231 = vmatpush1.msra.mxu0 %v1201
        %2232 = vmatprep.subr.mxu0 %v1204
        %2233 = vmatpush1.msra.mxu0 %v1203
        %2234 = vmatprep.subr.mxu0 %v1206
        %2235 = vmatpush1.msra.mxu0 %v1205
        %2236 = vmatprep.subr.mxu0 %v1208
        %2237 = vmatpush1.msra.mxu0 %v1207
        %2238 = vmatprep.subr.mxu0 %v1210
        %2239 = vmatpush1.msra.mxu0 %v1209
        %2240 = vmatprep.subr.mxu0 %v1212
        %2241 = vmatpush1.msra.mxu0 %v1211
        %2242 = vmatprep.subr.mxu0 %v1214
        %2243 = vmatpush1.msra.mxu0 %v1213
        %2244 = vmatprep.subr.mxu0 %v1216
        %2245 = vmatpush1.msra.mxu0 %v1215
        %2246 = vmatprep.subr.mxu0 %v1218
        %2247 = vmatpush1.msra.mxu0 %v1217
        %2248 = vmatprep.subr.mxu0 %v1220
        %2249 = vmatpush1.msra.mxu0 %v1219
        %2250 = vmatprep.subr.mxu0 %v1222
        %2251 = vmatpush1.msra.mxu0 %v1221
        %2252 = vmatprep.subr.mxu0 %v1224
        %2253 = vmatpush1.msra.mxu0 %v1223
        %2254 = vmatprep.subr.mxu0 %v1226
        %2255 = vmatpush1.msra.mxu0 %v1225
        %2256 = vmatprep.subr.mxu0 %v1228
        %2257 = vmatpush1.msra.mxu0 %v1227
        %2258 = vmatprep.subr.mxu0 %v1230
        %2259 = vmatpush1.msra.mxu0 %v1229
        %2260 = vmatprep.subr.mxu0 %v1232
        %2261 = vmatpush1.msra.mxu0 %v1231
        %2262 = vmatprep.subr.mxu0 %v1234
        %2263 = vmatpush1.msra.mxu0 %v1233
        %2264 = vmatprep.subr.mxu0 %v1236
        %2265 = vmatpush1.msra.mxu0 %v1235
        %2266 = vmatprep.subr.mxu0 %v1238
        %2267 = vmatpush1.msra.mxu0 %v1237
        %2268 = vmatprep.mubr.f32.mxu0 %v747
        %2269 = vmatmul.mubr.f32.gmra.mrb[0].mxu0 %v746
        %v2270 = vpop.f32.mrb[0].mxu0
        %v2271 = vadd.f32 %v2152, %v2270
        %v2272 = vpop.f32.mrb[0].mxu0
        %v2273 = vadd.f32 %v2154, %v2272
        %2274 = vmatprep.mubr.f32.mxu0 %v774
        %2275 = vmatmul.mubr.f32.gmra.mrb[0].mxu0 %v773
        %v2276 = vpop.f32.mrb[0].mxu0
        %v2277 = vadd.f32 %v2158, %v2276
        %v2278 = vpop.f32.mrb[0].mxu0
        %v2279 = vadd.f32 %v2160, %v2278
        %2280 = vmatprep.mubr.f32.mxu0 %v801
        %2281 = vmatmul.mubr.f32.gmra.mrb[0].mxu0 %v800
        %v2282 = vpop.f32.mrb[0].mxu0
        %v2283 = vadd.f32 %v2164, %v2282
        %v2284 = vpop.f32.mrb[0].mxu0
        %v2285 = vadd.f32 %v2166, %v2284
        %2286 = vmatprep.mubr.f32.mxu0 %v828
        %2287 = vmatmul.mubr.f32.gmra.mrb[0].mxu0 %v827
        %v2288 = vpop.f32.mrb[0].mxu0
        %v2289 = vadd.f32 %v2170, %v2288
        %v2290 = vpop.f32.mrb[0].mxu0
        %v2291 = vadd.f32 %v2172, %v2290
        %2292 = vmatprep.mubr.f32.mxu0 %v855
        %2293 = vmatmul.mubr.f32.gmra.mrb[0].mxu0 %v854
        %v2294 = vpop.f32.mrb[0].mxu0
        %v2295 = vadd.f32 %v2176, %v2294
        %v2296 = vpop.f32.mrb[0].mxu0
        %v2297 = vadd.f32 %v2178, %v2296
        %2298 = vmatprep.mubr.f32.mxu0 %v882
        %2299 = vmatmul.mubr.f32.gmra.mrb[0].mxu0 %v881
        %v2300 = vpop.f32.mrb[0].mxu0
        %v2301 = vadd.f32 %v2182, %v2300
        %v2302 = vpop.f32.mrb[0].mxu0
        %v2303 = vadd.f32 %v2184, %v2302
        %2304 = vmatprep.mubr.f32.mxu0 %v909
        %2305 = vmatmul.mubr.f32.gmra.mrb[0].mxu0 %v908
        %v2306 = vpop.f32.mrb[0].mxu0
        %v2307 = vadd.f32 %v2188, %v2306
        %v2308 = vpop.f32.mrb[0].mxu0
        %v2309 = vadd.f32 %v2190, %v2308
        %2310 = vmatprep.mubr.f32.mxu0 %v936
        %2311 = vmatmul.mubr.f32.gmra.mrb[0].mxu0 %v935
        %v2312 = vpop.f32.mrb[0].mxu0
        %v2313 = vadd.f32 %v2194, %v2312
        %v2314 = vpop.f32.mrb[0].mxu0
        %v2315 = vadd.f32 %v2196, %v2314
        %2316 = vmatprep.mubr.f32.mxu0 %v963
        %2317 = vmatmul.mubr.f32.gmra.mrb[0].mxu0 %v962
        %v2318 = vpop.f32.mrb[0].mxu0
        %v2319 = vadd.f32 %v2200, %v2318
        %v2320 = vpop.f32.mrb[0].mxu0
        %v2321 = vadd.f32 %v2202, %v2320
        %2322 = vdwg.mxu0
        %2323 = vmatprep.subr.mxu0 %v1240
        %2324 = vmatpush1.msra.mxu0 %v1239
        %2325 = vmatprep.subr.mxu0 %v1242
        %2326 = vmatpush1.msra.mxu0 %v1241
        %2327 = vmatprep.subr.mxu0 %v1244
        %2328 = vmatpush1.msra.mxu0 %v1243
        %2329 = vmatprep.subr.mxu0 %v1246
        %2330 = vmatpush1.msra.mxu0 %v1245
        %2331 = vmatprep.subr.mxu0 %v1248
        %2332 = vmatpush1.msra.mxu0 %v1247
        %2333 = vmatprep.subr.mxu0 %v1250
        %2334 = vmatpush1.msra.mxu0 %v1249
        %2335 = vmatprep.subr.mxu0 %v1252
        %2336 = vmatpush1.msra.mxu0 %v1251
        %2337 = vmatprep.subr.mxu0 %v1254
        %2338 = vmatpush1.msra.mxu0 %v1253
        %2339 = vmatprep.subr.mxu0 %v1256
        %2340 = vmatpush1.msra.mxu0 %v1255
        %2341 = vmatprep.subr.mxu0 %v1258
        %2342 = vmatpush1.msra.mxu0 %v1257
        %2343 = vmatprep.subr.mxu0 %v1260
        %2344 = vmatpush1.msra.mxu0 %v1259
        %2345 = vmatprep.subr.mxu0 %v1262
        %2346 = vmatpush1.msra.mxu0 %v1261
        %2347 = vmatprep.subr.mxu0 %v1264
        %2348 = vmatpush1.msra.mxu0 %v1263
        %2349 = vmatprep.subr.mxu0 %v1266
        %2350 = vmatpush1.msra.mxu0 %v1265
        %2351 = vmatprep.subr.mxu0 %v1268
        %2352 = vmatpush1.msra.mxu0 %v1267
        %2353 = vmatprep.subr.mxu0 %v1270
        %2354 = vmatpush1.msra.mxu0 %v1269
        %2355 = vmatprep.subr.mxu0 %v1272
        %2356 = vmatpush1.msra.mxu0 %v1271
        %2357 = vmatprep.subr.mxu0 %v1274
        %2358 = vmatpush1.msra.mxu0 %v1273
        %2359 = vmatprep.subr.mxu0 %v1276
        %2360 = vmatpush1.msra.mxu0 %v1275
        %2361 = vmatprep.subr.mxu0 %v1278
        %2362 = vmatpush1.msra.mxu0 %v1277
        %2363 = vmatprep.subr.mxu0 %v1280
        %2364 = vmatpush1.msra.mxu0 %v1279
        %2365 = vmatprep.subr.mxu0 %v1282
        %2366 = vmatpush1.msra.mxu0 %v1281
        %2367 = vmatprep.subr.mxu0 %v1284
        %2368 = vmatpush1.msra.mxu0 %v1283
        %2369 = vmatprep.subr.mxu0 %v1286
        %2370 = vmatpush1.msra.mxu0 %v1285
        %2371 = vmatprep.subr.mxu0 %v1288
        %2372 = vmatpush1.msra.mxu0 %v1287
        %2373 = vmatprep.subr.mxu0 %v1290
        %2374 = vmatpush1.msra.mxu0 %v1289
        %2375 = vmatprep.subr.mxu0 %v1292
        %2376 = vmatpush1.msra.mxu0 %v1291
        %2377 = vmatprep.subr.mxu0 %v1294
        %2378 = vmatpush1.msra.mxu0 %v1293
        %2379 = vmatprep.subr.mxu0 %v1296
        %2380 = vmatpush1.msra.mxu0 %v1295
        %2381 = vmatprep.subr.mxu0 %v1298
        %2382 = vmatpush1.msra.mxu0 %v1297
        %2383 = vmatprep.subr.mxu0 %v1300
        %2384 = vmatpush1.msra.mxu0 %v1299
        %2385 = vmatprep.subr.mxu0 %v1302
        %2386 = vmatpush1.msra.mxu0 %v1301
        %2387 = vmatprep.mubr.f32.mxu0 %v749
        %2388 = vmatmul.mubr.f32.gmra.mrb[0].mxu0 %v748
        %v2389 = vpop.f32.mrb[0].mxu0
        %v2390 = vadd.f32 %v2271, %v2389
        %v2391 = vpop.f32.mrb[0].mxu0
        %v2392 = vadd.f32 %v2273, %v2391
        %2393 = vmatprep.mubr.f32.mxu0 %v776
        %2394 = vmatmul.mubr.f32.gmra.mrb[0].mxu0 %v775
        %v2395 = vpop.f32.mrb[0].mxu0
        %v2396 = vadd.f32 %v2277, %v2395
        %v2397 = vpop.f32.mrb[0].mxu0
        %v2398 = vadd.f32 %v2279, %v2397
        %2399 = vmatprep.mubr.f32.mxu0 %v803
        %2400 = vmatmul.mubr.f32.gmra.mrb[0].mxu0 %v802
        %v2401 = vpop.f32.mrb[0].mxu0
        %v2402 = vadd.f32 %v2283, %v2401
        %v2403 = vpop.f32.mrb[0].mxu0
        %v2404 = vadd.f32 %v2285, %v2403
        %2405 = vmatprep.mubr.f32.mxu0 %v830
        %2406 = vmatmul.mubr.f32.gmra.mrb[0].mxu0 %v829
        %v2407 = vpop.f32.mrb[0].mxu0
        %v2408 = vadd.f32 %v2289, %v2407
        %v2409 = vpop.f32.mrb[0].mxu0
        %v2410 = vadd.f32 %v2291, %v2409
        %2411 = vmatprep.mubr.f32.mxu0 %v857
        %2412 = vmatmul.mubr.f32.gmra.mrb[0].mxu0 %v856
        %v2413 = vpop.f32.mrb[0].mxu0
        %v2414 = vadd.f32 %v2295, %v2413
        %v2415 = vpop.f32.mrb[0].mxu0
        %v2416 = vadd.f32 %v2297, %v2415
        %2417 = vmatprep.mubr.f32.mxu0 %v884
        %2418 = vmatmul.mubr.f32.gmra.mrb[0].mxu0 %v883
        %v2419 = vpop.f32.mrb[0].mxu0
        %v2420 = vadd.f32 %v2301, %v2419
        %v2421 = vpop.f32.mrb[0].mxu0
        %v2422 = vadd.f32 %v2303, %v2421
        %2423 = vmatprep.mubr.f32.mxu0 %v911
        %2424 = vmatmul.mubr.f32.gmra.mrb[0].mxu0 %v910
        %v2425 = vpop.f32.mrb[0].mxu0
        %v2426 = vadd.f32 %v2307, %v2425
        %v2427 = vpop.f32.mrb[0].mxu0
        %v2428 = vadd.f32 %v2309, %v2427
        %2429 = vmatprep.mubr.f32.mxu0 %v938
        %2430 = vmatmul.mubr.f32.gmra.mrb[0].mxu0 %v937
        %v2431 = vpop.f32.mrb[0].mxu0
        %v2432 = vadd.f32 %v2313, %v2431
        %v2433 = vpop.f32.mrb[0].mxu0
        %v2434 = vadd.f32 %v2315, %v2433
        %2435 = vmatprep.mubr.f32.mxu0 %v965
        %2436 = vmatmul.mubr.f32.gmra.mrb[0].mxu0 %v964
        %v2437 = vpop.f32.mrb[0].mxu0
        %v2438 = vadd.f32 %v2319, %v2437
        %v2439 = vpop.f32.mrb[0].mxu0
        %v2440 = vadd.f32 %v2321, %v2439
        %2441 = vdwg.mxu0
        %2442 = vmatprep.subr.mxu0 %v1304
        %2443 = vmatpush1.msra.mxu0 %v1303
        %2444 = vmatprep.subr.mxu0 %v1306
        %2445 = vmatpush1.msra.mxu0 %v1305
        %2446 = vmatprep.subr.mxu0 %v1308
        %2447 = vmatpush1.msra.mxu0 %v1307
        %2448 = vmatprep.subr.mxu0 %v1310
        %2449 = vmatpush1.msra.mxu0 %v1309
        %2450 = vmatprep.subr.mxu0 %v1312
        %2451 = vmatpush1.msra.mxu0 %v1311
        %2452 = vmatprep.subr.mxu0 %v1314
        %2453 = vmatpush1.msra.mxu0 %v1313
        %2454 = vmatprep.subr.mxu0 %v1316
        %2455 = vmatpush1.msra.mxu0 %v1315
        %2456 = vmatprep.subr.mxu0 %v1318
        %2457 = vmatpush1.msra.mxu0 %v1317
        %2458 = vmatprep.subr.mxu0 %v1320
        %2459 = vmatpush1.msra.mxu0 %v1319
        %2460 = vmatprep.subr.mxu0 %v1322
        %2461 = vmatpush1.msra.mxu0 %v1321
        %2462 = vmatprep.subr.mxu0 %v1324
        %2463 = vmatpush1.msra.mxu0 %v1323
        %2464 = vmatprep.subr.mxu0 %v1326
        %2465 = vmatpush1.msra.mxu0 %v1325
        %2466 = vmatprep.subr.mxu0 %v1328
        %2467 = vmatpush1.msra.mxu0 %v1327
        %2468 = vmatprep.subr.mxu0 %v1330
        %2469 = vmatpush1.msra.mxu0 %v1329
        %2470 = vmatprep.subr.mxu0 %v1332
        %2471 = vmatpush1.msra.mxu0 %v1331
        %2472 = vmatprep.subr.mxu0 %v1334
        %2473 = vmatpush1.msra.mxu0 %v1333
        %2474 = vmatprep.subr.mxu0 %v1336
        %2475 = vmatpush1.msra.mxu0 %v1335
        %2476 = vmatprep.subr.mxu0 %v1338
        %2477 = vmatpush1.msra.mxu0 %v1337
        %2478 = vmatprep.subr.mxu0 %v1340
        %2479 = vmatpush1.msra.mxu0 %v1339
        %2480 = vmatprep.subr.mxu0 %v1342
        %2481 = vmatpush1.msra.mxu0 %v1341
        %2482 = vmatprep.subr.mxu0 %v1344
        %2483 = vmatpush1.msra.mxu0 %v1343
        %2484 = vmatprep.subr.mxu0 %v1346
        %2485 = vmatpush1.msra.mxu0 %v1345
        %2486 = vmatprep.subr.mxu0 %v1348
        %2487 = vmatpush1.msra.mxu0 %v1347
        %2488 = vmatprep.subr.mxu0 %v1350
        %2489 = vmatpush1.msra.mxu0 %v1349
        %2490 = vmatprep.subr.mxu0 %v1352
        %2491 = vmatpush1.msra.mxu0 %v1351
        %2492 = vmatprep.subr.mxu0 %v1354
        %2493 = vmatpush1.msra.mxu0 %v1353
        %2494 = vmatprep.subr.mxu0 %v1356
        %2495 = vmatpush1.msra.mxu0 %v1355
        %2496 = vmatprep.subr.mxu0 %v1358
        %2497 = vmatpush1.msra.mxu0 %v1357
        %2498 = vmatprep.subr.mxu0 %v1360
        %2499 = vmatpush1.msra.mxu0 %v1359
        %2500 = vmatprep.subr.mxu0 %v1362
        %2501 = vmatpush1.msra.mxu0 %v1361
        %2502 = vmatprep.subr.mxu0 %v1364
        %2503 = vmatpush1.msra.mxu0 %v1363
        %2504 = vmatprep.subr.mxu0 %v1366
        %2505 = vmatpush1.msra.mxu0 %v1365
        %2506 = vmatprep.mubr.f32.mxu0 %v751
        %2507 = vmatmul.mubr.f32.gmra.mrb[0].mxu0 %v750
        %v2508 = vpop.f32.mrb[0].mxu0
        %v2509 = vadd.f32 %v2390, %v2508
        %v2510 = vpop.f32.mrb[0].mxu0
        %v2511 = vadd.f32 %v2392, %v2510
        %2512 = vmatprep.mubr.f32.mxu0 %v778
        %2513 = vmatmul.mubr.f32.gmra.mrb[0].mxu0 %v777
        %v2514 = vpop.f32.mrb[0].mxu0
        %v2515 = vadd.f32 %v2396, %v2514
        %v2516 = vpop.f32.mrb[0].mxu0
        %v2517 = vadd.f32 %v2398, %v2516
        %2518 = vmatprep.mubr.f32.mxu0 %v805
        %2519 = vmatmul.mubr.f32.gmra.mrb[0].mxu0 %v804
        %v2520 = vpop.f32.mrb[0].mxu0
        %v2521 = vadd.f32 %v2402, %v2520
        %v2522 = vpop.f32.mrb[0].mxu0
        %v2523 = vadd.f32 %v2404, %v2522
        %2524 = vmatprep.mubr.f32.mxu0 %v832
        %2525 = vmatmul.mubr.f32.gmra.mrb[0].mxu0 %v831
        %v2526 = vpop.f32.mrb[0].mxu0
        %v2527 = vadd.f32 %v2408, %v2526
        %v2528 = vpop.f32.mrb[0].mxu0
        %v2529 = vadd.f32 %v2410, %v2528
        %2530 = vmatprep.mubr.f32.mxu0 %v859
        %2531 = vmatmul.mubr.f32.gmra.mrb[0].mxu0 %v858
        %v2532 = vpop.f32.mrb[0].mxu0
        %v2533 = vadd.f32 %v2414, %v2532
        %v2534 = vpop.f32.mrb[0].mxu0
        %v2535 = vadd.f32 %v2416, %v2534
        %2536 = vmatprep.mubr.f32.mxu0 %v886
        %2537 = vmatmul.mubr.f32.gmra.mrb[0].mxu0 %v885
        %v2538 = vpop.f32.mrb[0].mxu0
        %v2539 = vadd.f32 %v2420, %v2538
        %v2540 = vpop.f32.mrb[0].mxu0
        %v2541 = vadd.f32 %v2422, %v2540
        %2542 = vmatprep.mubr.f32.mxu0 %v913
        %2543 = vmatmul.mubr.f32.gmra.mrb[0].mxu0 %v912
        %v2544 = vpop.f32.mrb[0].mxu0
        %v2545 = vadd.f32 %v2426, %v2544
        %v2546 = vpop.f32.mrb[0].mxu0
        %v2547 = vadd.f32 %v2428, %v2546
        %2548 = vmatprep.mubr.f32.mxu0 %v940
        %2549 = vmatmul.mubr.f32.gmra.mrb[0].mxu0 %v939
        %v2550 = vpop.f32.mrb[0].mxu0
        %v2551 = vadd.f32 %v2432, %v2550
        %v2552 = vpop.f32.mrb[0].mxu0
        %v2553 = vadd.f32 %v2434, %v2552
        %2554 = vmatprep.mubr.f32.mxu0 %v967
        %2555 = vmatmul.mubr.f32.gmra.mrb[0].mxu0 %v966
        %v2556 = vpop.f32.mrb[0].mxu0
        %v2557 = vadd.f32 %v2438, %v2556
        %v2558 = vpop.f32.mrb[0].mxu0
        %v2559 = vadd.f32 %v2440, %v2558
        %2560 = vdwg.mxu0
        %2561 = vmatprep.subr.mxu0 %v1368
        %2562 = vmatpush1.msra.mxu0 %v1367
        %2563 = vmatprep.subr.mxu0 %v1370
        %2564 = vmatpush1.msra.mxu0 %v1369
        %2565 = vmatprep.subr.mxu0 %v1372
        %2566 = vmatpush1.msra.mxu0 %v1371
        %2567 = vmatprep.subr.mxu0 %v1374
        %2568 = vmatpush1.msra.mxu0 %v1373
        %2569 = vmatprep.subr.mxu0 %v1376
        %2570 = vmatpush1.msra.mxu0 %v1375
        %2571 = vmatprep.subr.mxu0 %v1378
        %2572 = vmatpush1.msra.mxu0 %v1377
        %2573 = vmatprep.subr.mxu0 %v1380
        %2574 = vmatpush1.msra.mxu0 %v1379
        %2575 = vmatprep.subr.mxu0 %v1382
        %2576 = vmatpush1.msra.mxu0 %v1381
        %2577 = vmatprep.subr.mxu0 %v1384
        %2578 = vmatpush1.msra.mxu0 %v1383
        %2579 = vmatprep.subr.mxu0 %v1386
        %2580 = vmatpush1.msra.mxu0 %v1385
        %2581 = vmatprep.subr.mxu0 %v1388
        %2582 = vmatpush1.msra.mxu0 %v1387
        %2583 = vmatprep.subr.mxu0 %v1390
        %2584 = vmatpush1.msra.mxu0 %v1389
        %2585 = vmatprep.subr.mxu0 %v1392
        %2586 = vmatpush1.msra.mxu0 %v1391
        %2587 = vmatprep.subr.mxu0 %v1394
        %2588 = vmatpush1.msra.mxu0 %v1393
        %2589 = vmatprep.subr.mxu0 %v1396
        %2590 = vmatpush1.msra.mxu0 %v1395
        %2591 = vmatprep.subr.mxu0 %v1398
        %2592 = vmatpush1.msra.mxu0 %v1397
        %2593 = vmatprep.subr.mxu0 %v1400
        %2594 = vmatpush1.msra.mxu0 %v1399
        %2595 = vmatprep.subr.mxu0 %v1402
        %2596 = vmatpush1.msra.mxu0 %v1401
        %2597 = vmatprep.subr.mxu0 %v1404
        %2598 = vmatpush1.msra.mxu0 %v1403
        %2599 = vmatprep.subr.mxu0 %v1406
        %2600 = vmatpush1.msra.mxu0 %v1405
        %2601 = vmatprep.subr.mxu0 %v1408
        %2602 = vmatpush1.msra.mxu0 %v1407
        %2603 = vmatprep.subr.mxu0 %v1410
        %2604 = vmatpush1.msra.mxu0 %v1409
        %2605 = vmatprep.subr.mxu0 %v1412
        %2606 = vmatpush1.msra.mxu0 %v1411
        %2607 = vmatprep.subr.mxu0 %v1414
        %2608 = vmatpush1.msra.mxu0 %v1413
        %2609 = vmatprep.subr.mxu0 %v1416
        %2610 = vmatpush1.msra.mxu0 %v1415
        %2611 = vmatprep.subr.mxu0 %v1418
        %2612 = vmatpush1.msra.mxu0 %v1417
        %2613 = vmatprep.subr.mxu0 %v1420
        %2614 = vmatpush1.msra.mxu0 %v1419
        %2615 = vmatprep.subr.mxu0 %v1422
        %2616 = vmatpush1.msra.mxu0 %v1421
        %2617 = vmatprep.subr.mxu0 %v1424
        %2618 = vmatpush1.msra.mxu0 %v1423
        %2619 = vmatprep.subr.mxu0 %v1426
        %2620 = vmatpush1.msra.mxu0 %v1425
        %2621 = vmatprep.subr.mxu0 %v1428
        %2622 = vmatpush1.msra.mxu0 %v1427
        %2623 = vmatprep.subr.mxu0 %v1430
        %2624 = vmatpush1.msra.mxu0 %v1429
        %2625 = vmatprep.mubr.f32.mxu0 %v753
        %2626 = vmatmul.mubr.f32.gmra.mrb[0].mxu0 %v752
        %v2627 = vpop.f32.mrb[0].mxu0
        %v2628 = vadd.f32 %v2509, %v2627
        %v2629 = vpop.f32.mrb[0].mxu0
        %v2630 = vadd.f32 %v2511, %v2629
        %2631 = vmatprep.mubr.f32.mxu0 %v780
        %2632 = vmatmul.mubr.f32.gmra.mrb[0].mxu0 %v779
        %v2633 = vpop.f32.mrb[0].mxu0
        %v2634 = vadd.f32 %v2515, %v2633
        %v2635 = vpop.f32.mrb[0].mxu0
        %v2636 = vadd.f32 %v2517, %v2635
        %2637 = vmatprep.mubr.f32.mxu0 %v807
        %2638 = vmatmul.mubr.f32.gmra.mrb[0].mxu0 %v806
        %v2639 = vpop.f32.mrb[0].mxu0
        %v2640 = vadd.f32 %v2521, %v2639
        %v2641 = vpop.f32.mrb[0].mxu0
        %v2642 = vadd.f32 %v2523, %v2641
        %2643 = vmatprep.mubr.f32.mxu0 %v834
        %2644 = vmatmul.mubr.f32.gmra.mrb[0].mxu0 %v833
        %v2645 = vpop.f32.mrb[0].mxu0
        %v2646 = vadd.f32 %v2527, %v2645
        %v2647 = vpop.f32.mrb[0].mxu0
        %v2648 = vadd.f32 %v2529, %v2647
        %2649 = vmatprep.mubr.f32.mxu0 %v861
        %2650 = vmatmul.mubr.f32.gmra.mrb[0].mxu0 %v860
        %v2651 = vpop.f32.mrb[0].mxu0
        %v2652 = vadd.f32 %v2533, %v2651
        %v2653 = vpop.f32.mrb[0].mxu0
        %v2654 = vadd.f32 %v2535, %v2653
        %2655 = vmatprep.mubr.f32.mxu0 %v888
        %2656 = vmatmul.mubr.f32.gmra.mrb[0].mxu0 %v887
        %v2657 = vpop.f32.mrb[0].mxu0
        %v2658 = vadd.f32 %v2539, %v2657
        %v2659 = vpop.f32.mrb[0].mxu0
        %v2660 = vadd.f32 %v2541, %v2659
        %2661 = vmatprep.mubr.f32.mxu0 %v915
        %2662 = vmatmul.mubr.f32.gmra.mrb[0].mxu0 %v914
        %v2663 = vpop.f32.mrb[0].mxu0
        %v2664 = vadd.f32 %v2545, %v2663
        %v2665 = vpop.f32.mrb[0].mxu0
        %v2666 = vadd.f32 %v2547, %v2665
        %2667 = vmatprep.mubr.f32.mxu0 %v942
        %2668 = vmatmul.mubr.f32.gmra.mrb[0].mxu0 %v941
        %v2669 = vpop.f32.mrb[0].mxu0
        %v2670 = vadd.f32 %v2551, %v2669
        %v2671 = vpop.f32.mrb[0].mxu0
        %v2672 = vadd.f32 %v2553, %v2671
        %2673 = vmatprep.mubr.f32.mxu0 %v969
        %2674 = vmatmul.mubr.f32.gmra.mrb[0].mxu0 %v968
        %v2675 = vpop.f32.mrb[0].mxu0
        %v2676 = vadd.f32 %v2557, %v2675
        %v2677 = vpop.f32.mrb[0].mxu0
        %v2678 = vadd.f32 %v2559, %v2677
        %2679 = vdwg.mxu0
        %2680 = vmatprep.subr.mxu0 %v1432
        %2681 = vmatpush1.msra.mxu0 %v1431
        %2682 = vmatprep.subr.mxu0 %v1434
        %2683 = vmatpush1.msra.mxu0 %v1433
        %2684 = vmatprep.subr.mxu0 %v1436
        %2685 = vmatpush1.msra.mxu0 %v1435
        %2686 = vmatprep.subr.mxu0 %v1438
        %2687 = vmatpush1.msra.mxu0 %v1437
        %2688 = vmatprep.subr.mxu0 %v1440
        %2689 = vmatpush1.msra.mxu0 %v1439
        %2690 = vmatprep.subr.mxu0 %v1442
        %2691 = vmatpush1.msra.mxu0 %v1441
        %2692 = vmatprep.subr.mxu0 %v1444
        %2693 = vmatpush1.msra.mxu0 %v1443
        %2694 = vmatprep.subr.mxu0 %v1446
        %2695 = vmatpush1.msra.mxu0 %v1445
        %2696 = vmatprep.subr.mxu0 %v1448
        %2697 = vmatpush1.msra.mxu0 %v1447
        %2698 = vmatprep.subr.mxu0 %v1450
        %2699 = vmatpush1.msra.mxu0 %v1449
        %2700 = vmatprep.subr.mxu0 %v1452
        %2701 = vmatpush1.msra.mxu0 %v1451
        %2702 = vmatprep.subr.mxu0 %v1454
        %2703 = vmatpush1.msra.mxu0 %v1453
        %2704 = vmatprep.subr.mxu0 %v1456
        %2705 = vmatpush1.msra.mxu0 %v1455
        %2706 = vmatprep.subr.mxu0 %v1458
        %2707 = vmatpush1.msra.mxu0 %v1457
        %2708 = vmatprep.subr.mxu0 %v1460
        %2709 = vmatpush1.msra.mxu0 %v1459
        %2710 = vmatprep.subr.mxu0 %v1462
        %2711 = vmatpush1.msra.mxu0 %v1461
        %2712 = vmatprep.subr.mxu0 %v1464
        %2713 = vmatpush1.msra.mxu0 %v1463
        %2714 = vmatprep.subr.mxu0 %v1466
        %2715 = vmatpush1.msra.mxu0 %v1465
        %2716 = vmatprep.subr.mxu0 %v1468
        %2717 = vmatpush1.msra.mxu0 %v1467
        %2718 = vmatprep.subr.mxu0 %v1470
        %2719 = vmatpush1.msra.mxu0 %v1469
        %2720 = vmatprep.subr.mxu0 %v1472
        %2721 = vmatpush1.msra.mxu0 %v1471
        %2722 = vmatprep.subr.mxu0 %v1474
        %2723 = vmatpush1.msra.mxu0 %v1473
        %2724 = vmatprep.subr.mxu0 %v1476
        %2725 = vmatpush1.msra.mxu0 %v1475
        %2726 = vmatprep.subr.mxu0 %v1478
        %2727 = vmatpush1.msra.mxu0 %v1477
        %2728 = vmatprep.subr.mxu0 %v1480
        %2729 = vmatpush1.msra.mxu0 %v1479
        %2730 = vmatprep.subr.mxu0 %v1482
        %2731 = vmatpush1.msra.mxu0 %v1481
        %2732 = vmatprep.subr.mxu0 %v1484
        %2733 = vmatpush1.msra.mxu0 %v1483
        %2734 = vmatprep.subr.mxu0 %v1486
        %2735 = vmatpush1.msra.mxu0 %v1485
        %2736 = vmatprep.subr.mxu0 %v1488
        %2737 = vmatpush1.msra.mxu0 %v1487
        %2738 = vmatprep.subr.mxu0 %v1490
        %2739 = vmatpush1.msra.mxu0 %v1489
        %2740 = vmatprep.subr.mxu0 %v1492
        %2741 = vmatpush1.msra.mxu0 %v1491
        %2742 = vmatprep.subr.mxu0 %v1494
        %2743 = vmatpush1.msra.mxu0 %v1493
        %2744 = vmatprep.mubr.f32.mxu0 %v755
        %2745 = vmatmul.mubr.f32.gmra.mrb[0].mxu0 %v754
        %v2746 = vpop.f32.mrb[0].mxu0
        %v2747 = vadd.f32 %v2628, %v2746
        %v2748 = vpop.f32.mrb[0].mxu0
        %v2749 = vadd.f32 %v2630, %v2748
        %2750 = vmatprep.mubr.f32.mxu0 %v782
        %2751 = vmatmul.mubr.f32.gmra.mrb[0].mxu0 %v781
        %v2752 = vpop.f32.mrb[0].mxu0
        %v2753 = vadd.f32 %v2634, %v2752
        %v2754 = vpop.f32.mrb[0].mxu0
        %v2755 = vadd.f32 %v2636, %v2754
        %2756 = vmatprep.mubr.f32.mxu0 %v809
        %2757 = vmatmul.mubr.f32.gmra.mrb[0].mxu0 %v808
        %v2758 = vpop.f32.mrb[0].mxu0
        %v2759 = vadd.f32 %v2640, %v2758
        %v2760 = vpop.f32.mrb[0].mxu0
        %v2761 = vadd.f32 %v2642, %v2760
        %2762 = vmatprep.mubr.f32.mxu0 %v836
        %2763 = vmatmul.mubr.f32.gmra.mrb[0].mxu0 %v835
        %v2764 = vpop.f32.mrb[0].mxu0
        %v2765 = vadd.f32 %v2646, %v2764
        %v2766 = vpop.f32.mrb[0].mxu0
        %v2767 = vadd.f32 %v2648, %v2766
        %2768 = vmatprep.mubr.f32.mxu0 %v863
        %2769 = vmatmul.mubr.f32.gmra.mrb[0].mxu0 %v862
        %v2770 = vpop.f32.mrb[0].mxu0
        %v2771 = vadd.f32 %v2652, %v2770
        %v2772 = vpop.f32.mrb[0].mxu0
        %v2773 = vadd.f32 %v2654, %v2772
        %2774 = vmatprep.mubr.f32.mxu0 %v890
        %2775 = vmatmul.mubr.f32.gmra.mrb[0].mxu0 %v889
        %v2776 = vpop.f32.mrb[0].mxu0
        %v2777 = vadd.f32 %v2658, %v2776
        %v2778 = vpop.f32.mrb[0].mxu0
        %v2779 = vadd.f32 %v2660, %v2778
        %2780 = vmatprep.mubr.f32.mxu0 %v917
        %2781 = vmatmul.mubr.f32.gmra.mrb[0].mxu0 %v916
        %v2782 = vpop.f32.mrb[0].mxu0
        %v2783 = vadd.f32 %v2664, %v2782
        %v2784 = vpop.f32.mrb[0].mxu0
        %v2785 = vadd.f32 %v2666, %v2784
        %2786 = vmatprep.mubr.f32.mxu0 %v944
        %2787 = vmatmul.mubr.f32.gmra.mrb[0].mxu0 %v943
        %v2788 = vpop.f32.mrb[0].mxu0
        %v2789 = vadd.f32 %v2670, %v2788
        %v2790 = vpop.f32.mrb[0].mxu0
        %v2791 = vadd.f32 %v2672, %v2790
        %2792 = vmatprep.mubr.f32.mxu0 %v971
        %2793 = vmatmul.mubr.f32.gmra.mrb[0].mxu0 %v970
        %v2794 = vpop.f32.mrb[0].mxu0
        %v2795 = vadd.f32 %v2676, %v2794
        %v2796 = vpop.f32.mrb[0].mxu0
        %v2797 = vadd.f32 %v2678, %v2796
        %2798 = vdwg.mxu0
        %2799 = vmatprep.subr.mxu0 %v1496
        %2800 = vmatpush1.msra.mxu0 %v1495
        %2801 = vmatprep.subr.mxu0 %v1498
        %2802 = vmatpush1.msra.mxu0 %v1497
        %2803 = vmatprep.subr.mxu0 %v1500
        %2804 = vmatpush1.msra.mxu0 %v1499
        %2805 = vmatprep.subr.mxu0 %v1502
        %2806 = vmatpush1.msra.mxu0 %v1501
        %2807 = vmatprep.subr.mxu0 %v1504
        %2808 = vmatpush1.msra.mxu0 %v1503
        %2809 = vmatprep.subr.mxu0 %v1506
        %2810 = vmatpush1.msra.mxu0 %v1505
        %2811 = vmatprep.subr.mxu0 %v1508
        %2812 = vmatpush1.msra.mxu0 %v1507
        %2813 = vmatprep.subr.mxu0 %v1510
        %2814 = vmatpush1.msra.mxu0 %v1509
        %2815 = vmatprep.subr.mxu0 %v1512
        %2816 = vmatpush1.msra.mxu0 %v1511
        %2817 = vmatprep.subr.mxu0 %v1514
        %2818 = vmatpush1.msra.mxu0 %v1513
        %2819 = vmatprep.subr.mxu0 %v1516
        %2820 = vmatpush1.msra.mxu0 %v1515
        %2821 = vmatprep.subr.mxu0 %v1518
        %2822 = vmatpush1.msra.mxu0 %v1517
        %2823 = vmatprep.subr.mxu0 %v1520
        %2824 = vmatpush1.msra.mxu0 %v1519
        %2825 = vmatprep.subr.mxu0 %v1522
        %2826 = vmatpush1.msra.mxu0 %v1521
        %2827 = vmatprep.subr.mxu0 %v1524
        %2828 = vmatpush1.msra.mxu0 %v1523
        %2829 = vmatprep.subr.mxu0 %v1526
        %2830 = vmatpush1.msra.mxu0 %v1525
        %2831 = vmatprep.subr.mxu0 %v1528
        %2832 = vmatpush1.msra.mxu0 %v1527
        %2833 = vmatprep.subr.mxu0 %v1530
        %2834 = vmatpush1.msra.mxu0 %v1529
        %2835 = vmatprep.subr.mxu0 %v1532
        %2836 = vmatpush1.msra.mxu0 %v1531
        %2837 = vmatprep.subr.mxu0 %v1534
        %2838 = vmatpush1.msra.mxu0 %v1533
        %2839 = vmatprep.subr.mxu0 %v1536
        %2840 = vmatpush1.msra.mxu0 %v1535
        %2841 = vmatprep.subr.mxu0 %v1538
        %2842 = vmatpush1.msra.mxu0 %v1537
        %2843 = vmatprep.subr.mxu0 %v1540
        %2844 = vmatpush1.msra.mxu0 %v1539
        %2845 = vmatprep.subr.mxu0 %v1542
        %2846 = vmatpush1.msra.mxu0 %v1541
        %2847 = vmatprep.subr.mxu0 %v1544
        %2848 = vmatpush1.msra.mxu0 %v1543
        %2849 = vmatprep.subr.mxu0 %v1546
        %2850 = vmatpush1.msra.mxu0 %v1545
        %2851 = vmatprep.subr.mxu0 %v1548
        %2852 = vmatpush1.msra.mxu0 %v1547
        %2853 = vmatprep.subr.mxu0 %v1550
        %2854 = vmatpush1.msra.mxu0 %v1549
        %2855 = vmatprep.subr.mxu0 %v1552
        %2856 = vmatpush1.msra.mxu0 %v1551
        %2857 = vmatprep.subr.mxu0 %v1554
        %2858 = vmatpush1.msra.mxu0 %v1553
        %2859 = vmatprep.subr.mxu0 %v1556
        %2860 = vmatpush1.msra.mxu0 %v1555
        %2861 = vmatprep.subr.mxu0 %v1558
        %2862 = vmatpush1.msra.mxu0 %v1557
        %2863 = vmatprep.mubr.f32.mxu0 %v757
        %2864 = vmatmul.mubr.f32.gmra.mrb[0].mxu0 %v756
        %v2865 = vpop.f32.mrb[0].mxu0
        %v2866 = vadd.f32 %v2747, %v2865
        %v2867 = vpop.f32.mrb[0].mxu0
        %v2868 = vadd.f32 %v2749, %v2867
        %2869 = vmatprep.mubr.f32.mxu0 %v784
        %2870 = vmatmul.mubr.f32.gmra.mrb[0].mxu0 %v783
        %v2871 = vpop.f32.mrb[0].mxu0
        %v2872 = vadd.f32 %v2753, %v2871
        %v2873 = vpop.f32.mrb[0].mxu0
        %v2874 = vadd.f32 %v2755, %v2873
        %2875 = vmatprep.mubr.f32.mxu0 %v811
        %2876 = vmatmul.mubr.f32.gmra.mrb[0].mxu0 %v810
        %v2877 = vpop.f32.mrb[0].mxu0
        %v2878 = vadd.f32 %v2759, %v2877
        %v2879 = vpop.f32.mrb[0].mxu0
        %v2880 = vadd.f32 %v2761, %v2879
        %2881 = vmatprep.mubr.f32.mxu0 %v838
        %2882 = vmatmul.mubr.f32.gmra.mrb[0].mxu0 %v837
        %v2883 = vpop.f32.mrb[0].mxu0
        %v2884 = vadd.f32 %v2765, %v2883
        %v2885 = vpop.f32.mrb[0].mxu0
        %v2886 = vadd.f32 %v2767, %v2885
        %2887 = vmatprep.mubr.f32.mxu0 %v865
        %2888 = vmatmul.mubr.f32.gmra.mrb[0].mxu0 %v864
        %v2889 = vpop.f32.mrb[0].mxu0
        %v2890 = vadd.f32 %v2771, %v2889
        %v2891 = vpop.f32.mrb[0].mxu0
        %v2892 = vadd.f32 %v2773, %v2891
        %2893 = vmatprep.mubr.f32.mxu0 %v892
        %2894 = vmatmul.mubr.f32.gmra.mrb[0].mxu0 %v891
        %v2895 = vpop.f32.mrb[0].mxu0
        %v2896 = vadd.f32 %v2777, %v2895
        %v2897 = vpop.f32.mrb[0].mxu0
        %v2898 = vadd.f32 %v2779, %v2897
        %2899 = vmatprep.mubr.f32.mxu0 %v919
        %2900 = vmatmul.mubr.f32.gmra.mrb[0].mxu0 %v918
        %v2901 = vpop.f32.mrb[0].mxu0
        %v2902 = vadd.f32 %v2783, %v2901
        %v2903 = vpop.f32.mrb[0].mxu0
        %v2904 = vadd.f32 %v2785, %v2903
        %2905 = vmatprep.mubr.f32.mxu0 %v946
        %2906 = vmatmul.mubr.f32.gmra.mrb[0].mxu0 %v945
        %v2907 = vpop.f32.mrb[0].mxu0
        %v2908 = vadd.f32 %v2789, %v2907
        %v2909 = vpop.f32.mrb[0].mxu0
        %v2910 = vadd.f32 %v2791, %v2909
        %2911 = vmatprep.mubr.f32.mxu0 %v973
        %2912 = vmatmul.mubr.f32.gmra.mrb[0].mxu0 %v972
        %v2913 = vpop.f32.mrb[0].mxu0
        %v2914 = vadd.f32 %v2795, %v2913
        %v2915 = vpop.f32.mrb[0].mxu0
        %v2916 = vadd.f32 %v2797, %v2915
        %2917 = vdwg.mxu0
        %2918 = vmatprep.subr.mxu0 %v1560
        %2919 = vmatpush1.msra.mxu0 %v1559
        %2920 = vmatprep.subr.mxu0 %v1562
        %2921 = vmatpush1.msra.mxu0 %v1561
        %2922 = vmatprep.subr.mxu0 %v1564
        %2923 = vmatpush1.msra.mxu0 %v1563
        %2924 = vmatprep.subr.mxu0 %v1566
        %2925 = vmatpush1.msra.mxu0 %v1565
        %2926 = vmatprep.subr.mxu0 %v1568
        %2927 = vmatpush1.msra.mxu0 %v1567
        %2928 = vmatprep.subr.mxu0 %v1570
        %2929 = vmatpush1.msra.mxu0 %v1569
        %2930 = vmatprep.subr.mxu0 %v1572
        %2931 = vmatpush1.msra.mxu0 %v1571
        %2932 = vmatprep.subr.mxu0 %v1574
        %2933 = vmatpush1.msra.mxu0 %v1573
        %2934 = vmatprep.subr.mxu0 %v1576
        %2935 = vmatpush1.msra.mxu0 %v1575
        %2936 = vmatprep.subr.mxu0 %v1578
        %2937 = vmatpush1.msra.mxu0 %v1577
        %2938 = vmatprep.subr.mxu0 %v1580
        %2939 = vmatpush1.msra.mxu0 %v1579
        %2940 = vmatprep.subr.mxu0 %v1582
        %2941 = vmatpush1.msra.mxu0 %v1581
        %2942 = vmatprep.subr.mxu0 %v1584
        %2943 = vmatpush1.msra.mxu0 %v1583
        %2944 = vmatprep.subr.mxu0 %v1586
        %2945 = vmatpush1.msra.mxu0 %v1585
        %2946 = vmatprep.subr.mxu0 %v1588
        %2947 = vmatpush1.msra.mxu0 %v1587
        %2948 = vmatprep.subr.mxu0 %v1590
        %2949 = vmatpush1.msra.mxu0 %v1589
        %2950 = vmatprep.subr.mxu0 %v1592
        %2951 = vmatpush1.msra.mxu0 %v1591
        %2952 = vmatprep.subr.mxu0 %v1594
        %2953 = vmatpush1.msra.mxu0 %v1593
        %2954 = vmatprep.subr.mxu0 %v1596
        %2955 = vmatpush1.msra.mxu0 %v1595
        %2956 = vmatprep.subr.mxu0 %v1598
        %2957 = vmatpush1.msra.mxu0 %v1597
        %2958 = vmatprep.subr.mxu0 %v1600
        %2959 = vmatpush1.msra.mxu0 %v1599
        %2960 = vmatprep.subr.mxu0 %v1602
        %2961 = vmatpush1.msra.mxu0 %v1601
        %2962 = vmatprep.subr.mxu0 %v1604
        %2963 = vmatpush1.msra.mxu0 %v1603
        %2964 = vmatprep.subr.mxu0 %v1606
        %2965 = vmatpush1.msra.mxu0 %v1605
        %2966 = vmatprep.subr.mxu0 %v1608
        %2967 = vmatpush1.msra.mxu0 %v1607
        %2968 = vmatprep.subr.mxu0 %v1610
        %2969 = vmatpush1.msra.mxu0 %v1609
        %2970 = vmatprep.subr.mxu0 %v1612
        %2971 = vmatpush1.msra.mxu0 %v1611
        %2972 = vmatprep.subr.mxu0 %v1614
        %2973 = vmatpush1.msra.mxu0 %v1613
        %2974 = vmatprep.subr.mxu0 %v1616
        %2975 = vmatpush1.msra.mxu0 %v1615
        %2976 = vmatprep.subr.mxu0 %v1618
        %2977 = vmatpush1.msra.mxu0 %v1617
        %2978 = vmatprep.subr.mxu0 %v1620
        %2979 = vmatpush1.msra.mxu0 %v1619
        %2980 = vmatprep.subr.mxu0 %v1622
        %2981 = vmatpush1.msra.mxu0 %v1621
        %2982 = vmatprep.mubr.f32.mxu0 %v759
        %2983 = vmatmul.mubr.f32.gmra.mrb[0].mxu0 %v758
        %v2984 = vpop.f32.mrb[0].mxu0
        %v2985 = vadd.f32 %v2866, %v2984
        %v2986 = vpop.f32.mrb[0].mxu0
        %v2987 = vadd.f32 %v2868, %v2986
        %2988 = vmatprep.mubr.f32.mxu0 %v786
        %2989 = vmatmul.mubr.f32.gmra.mrb[0].mxu0 %v785
        %v2990 = vpop.f32.mrb[0].mxu0
        %v2991 = vadd.f32 %v2872, %v2990
        %v2992 = vpop.f32.mrb[0].mxu0
        %v2993 = vadd.f32 %v2874, %v2992
        %2994 = vmatprep.mubr.f32.mxu0 %v813
        %2995 = vmatmul.mubr.f32.gmra.mrb[0].mxu0 %v812
        %v2996 = vpop.f32.mrb[0].mxu0
        %v2997 = vadd.f32 %v2878, %v2996
        %v2998 = vpop.f32.mrb[0].mxu0
        %v2999 = vadd.f32 %v2880, %v2998
        %3000 = vmatprep.mubr.f32.mxu0 %v840
        %3001 = vmatmul.mubr.f32.gmra.mrb[0].mxu0 %v839
        %v3002 = vpop.f32.mrb[0].mxu0
        %v3003 = vadd.f32 %v2884, %v3002
        %v3004 = vpop.f32.mrb[0].mxu0
        %v3005 = vadd.f32 %v2886, %v3004
        %3006 = vmatprep.mubr.f32.mxu0 %v867
        %3007 = vmatmul.mubr.f32.gmra.mrb[0].mxu0 %v866
        %v3008 = vpop.f32.mrb[0].mxu0
        %v3009 = vadd.f32 %v2890, %v3008
        %v3010 = vpop.f32.mrb[0].mxu0
        %v3011 = vadd.f32 %v2892, %v3010
        %3012 = vmatprep.mubr.f32.mxu0 %v894
        %3013 = vmatmul.mubr.f32.gmra.mrb[0].mxu0 %v893
        %v3014 = vpop.f32.mrb[0].mxu0
        %v3015 = vadd.f32 %v2896, %v3014
        %v3016 = vpop.f32.mrb[0].mxu0
        %v3017 = vadd.f32 %v2898, %v3016
        %3018 = vmatprep.mubr.f32.mxu0 %v921
        %3019 = vmatmul.mubr.f32.gmra.mrb[0].mxu0 %v920
        %v3020 = vpop.f32.mrb[0].mxu0
        %v3021 = vadd.f32 %v2902, %v3020
        %v3022 = vpop.f32.mrb[0].mxu0
        %v3023 = vadd.f32 %v2904, %v3022
        %3024 = vmatprep.mubr.f32.mxu0 %v948
        %3025 = vmatmul.mubr.f32.gmra.mrb[0].mxu0 %v947
        %v3026 = vpop.f32.mrb[0].mxu0
        %v3027 = vadd.f32 %v2908, %v3026
        %v3028 = vpop.f32.mrb[0].mxu0
        %v3029 = vadd.f32 %v2910, %v3028
        %3030 = vmatprep.mubr.f32.mxu0 %v975
        %3031 = vmatmul.mubr.f32.gmra.mrb[0].mxu0 %v974
        %v3032 = vpop.f32.mrb[0].mxu0
        %v3033 = vadd.f32 %v2914, %v3032
        %v3034 = vpop.f32.mrb[0].mxu0
        %v3035 = vadd.f32 %v2916, %v3034
        %3036 = vdwg.mxu0
        %3037 = vmatprep.subr.mxu0 %v1624
        %3038 = vmatpush1.msra.mxu0 %v1623
        %3039 = vmatprep.subr.mxu0 %v1626
        %3040 = vmatpush1.msra.mxu0 %v1625
        %3041 = vmatprep.subr.mxu0 %v1628
        %3042 = vmatpush1.msra.mxu0 %v1627
        %3043 = vmatprep.subr.mxu0 %v1630
        %3044 = vmatpush1.msra.mxu0 %v1629
        %3045 = vmatprep.subr.mxu0 %v1632
        %3046 = vmatpush1.msra.mxu0 %v1631
        %3047 = vmatprep.subr.mxu0 %v1634
        %3048 = vmatpush1.msra.mxu0 %v1633
        %3049 = vmatprep.subr.mxu0 %v1636
        %3050 = vmatpush1.msra.mxu0 %v1635
        %3051 = vmatprep.subr.mxu0 %v1638
        %3052 = vmatpush1.msra.mxu0 %v1637
        %3053 = vmatprep.subr.mxu0 %v1640
        %3054 = vmatpush1.msra.mxu0 %v1639
        %3055 = vmatprep.subr.mxu0 %v1642
        %3056 = vmatpush1.msra.mxu0 %v1641
        %3057 = vmatprep.subr.mxu0 %v1644
        %3058 = vmatpush1.msra.mxu0 %v1643
        %3059 = vmatprep.subr.mxu0 %v1646
        %3060 = vmatpush1.msra.mxu0 %v1645
        %3061 = vmatprep.subr.mxu0 %v1648
        %3062 = vmatpush1.msra.mxu0 %v1647
        %3063 = vmatprep.subr.mxu0 %v1650
        %3064 = vmatpush1.msra.mxu0 %v1649
        %3065 = vmatprep.subr.mxu0 %v1652
        %3066 = vmatpush1.msra.mxu0 %v1651
        %3067 = vmatprep.subr.mxu0 %v1654
        %3068 = vmatpush1.msra.mxu0 %v1653
        %3069 = vmatprep.subr.mxu0 %v1656
        %3070 = vmatpush1.msra.mxu0 %v1655
        %3071 = vmatprep.subr.mxu0 %v1658
        %3072 = vmatpush1.msra.mxu0 %v1657
        %3073 = vmatprep.subr.mxu0 %v1660
        %3074 = vmatpush1.msra.mxu0 %v1659
        %3075 = vmatprep.subr.mxu0 %v1662
        %3076 = vmatpush1.msra.mxu0 %v1661
        %3077 = vmatprep.subr.mxu0 %v1664
        %3078 = vmatpush1.msra.mxu0 %v1663
        %3079 = vmatprep.subr.mxu0 %v1666
        %3080 = vmatpush1.msra.mxu0 %v1665
        %3081 = vmatprep.subr.mxu0 %v1668
        %3082 = vmatpush1.msra.mxu0 %v1667
        %3083 = vmatprep.subr.mxu0 %v1670
        %3084 = vmatpush1.msra.mxu0 %v1669
        %3085 = vmatprep.subr.mxu0 %v1672
        %3086 = vmatpush1.msra.mxu0 %v1671
        %3087 = vmatprep.subr.mxu0 %v1674
        %3088 = vmatpush1.msra.mxu0 %v1673
        %3089 = vmatprep.subr.mxu0 %v1676
        %3090 = vmatpush1.msra.mxu0 %v1675
        %3091 = vmatprep.subr.mxu0 %v1678
        %3092 = vmatpush1.msra.mxu0 %v1677
        %3093 = vmatprep.subr.mxu0 %v1680
        %3094 = vmatpush1.msra.mxu0 %v1679
        %3095 = vmatprep.subr.mxu0 %v1682
        %3096 = vmatpush1.msra.mxu0 %v1681
        %3097 = vmatprep.subr.mxu0 %v1684
        %3098 = vmatpush1.msra.mxu0 %v1683
        %3099 = vmatprep.subr.mxu0 %v1686
        %3100 = vmatpush1.msra.mxu0 %v1685
        %3101 = vmatprep.mubr.f32.mxu0 %v761
        %3102 = vmatmul.mubr.f32.gmra.mrb[0].mxu0 %v760
        %v3103 = vpop.f32.mrb[0].mxu0
        %v3104 = vadd.f32 %v2985, %v3103
        %v3105 = vpop.f32.mrb[0].mxu0
        %v3106 = vadd.f32 %v2987, %v3105
        %3107 = vmatprep.mubr.f32.mxu0 %v788
        %3108 = vmatmul.mubr.f32.gmra.mrb[0].mxu0 %v787
        %v3109 = vpop.f32.mrb[0].mxu0
        %v3110 = vadd.f32 %v2991, %v3109
        %v3111 = vpop.f32.mrb[0].mxu0
        %v3112 = vadd.f32 %v2993, %v3111
        %3113 = vmatprep.mubr.f32.mxu0 %v815
        %3114 = vmatmul.mubr.f32.gmra.mrb[0].mxu0 %v814
        %v3115 = vpop.f32.mrb[0].mxu0
        %v3116 = vadd.f32 %v2997, %v3115
        %v3117 = vpop.f32.mrb[0].mxu0
        %v3118 = vadd.f32 %v2999, %v3117
        %3119 = vmatprep.mubr.f32.mxu0 %v842
        %3120 = vmatmul.mubr.f32.gmra.mrb[0].mxu0 %v841
        %v3121 = vpop.f32.mrb[0].mxu0
        %v3122 = vadd.f32 %v3003, %v3121
        %v3123 = vpop.f32.mrb[0].mxu0
        %v3124 = vadd.f32 %v3005, %v3123
        %3125 = vmatprep.mubr.f32.mxu0 %v869
        %3126 = vmatmul.mubr.f32.gmra.mrb[0].mxu0 %v868
        %v3127 = vpop.f32.mrb[0].mxu0
        %v3128 = vadd.f32 %v3009, %v3127
        %v3129 = vpop.f32.mrb[0].mxu0
        %v3130 = vadd.f32 %v3011, %v3129
        %3131 = vmatprep.mubr.f32.mxu0 %v896
        %3132 = vmatmul.mubr.f32.gmra.mrb[0].mxu0 %v895
        %v3133 = vpop.f32.mrb[0].mxu0
        %v3134 = vadd.f32 %v3015, %v3133
        %v3135 = vpop.f32.mrb[0].mxu0
        %v3136 = vadd.f32 %v3017, %v3135
        %3137 = vmatprep.mubr.f32.mxu0 %v923
        %3138 = vmatmul.mubr.f32.gmra.mrb[0].mxu0 %v922
        %v3139 = vpop.f32.mrb[0].mxu0
        %v3140 = vadd.f32 %v3021, %v3139
        %v3141 = vpop.f32.mrb[0].mxu0
        %v3142 = vadd.f32 %v3023, %v3141
        %3143 = vmatprep.mubr.f32.mxu0 %v950
        %3144 = vmatmul.mubr.f32.gmra.mrb[0].mxu0 %v949
        %v3145 = vpop.f32.mrb[0].mxu0
        %v3146 = vadd.f32 %v3027, %v3145
        %v3147 = vpop.f32.mrb[0].mxu0
        %v3148 = vadd.f32 %v3029, %v3147
        %3149 = vmatprep.mubr.f32.mxu0 %v977
        %3150 = vmatmul.mubr.f32.gmra.mrb[0].mxu0 %v976
        %v3151 = vpop.f32.mrb[0].mxu0
        %v3152 = vadd.f32 %v3033, %v3151
        %v3153 = vpop.f32.mrb[0].mxu0
        %v3154 = vadd.f32 %v3035, %v3153
        %3155 = vdwg.mxu0
        %3156 = vmatprep.subr.mxu0 %v1688
        %3157 = vmatpush1.msra.mxu0 %v1687
        %3158 = vmatprep.subr.mxu0 %v1690
        %3159 = vmatpush1.msra.mxu0 %v1689
        %3160 = vmatprep.subr.mxu0 %v1692
        %3161 = vmatpush1.msra.mxu0 %v1691
        %3162 = vmatprep.subr.mxu0 %v1694
        %3163 = vmatpush1.msra.mxu0 %v1693
        %3164 = vmatprep.subr.mxu0 %v1696
        %3165 = vmatpush1.msra.mxu0 %v1695
        %3166 = vmatprep.subr.mxu0 %v1698
        %3167 = vmatpush1.msra.mxu0 %v1697
        %3168 = vmatprep.subr.mxu0 %v1700
        %3169 = vmatpush1.msra.mxu0 %v1699
        %3170 = vmatprep.subr.mxu0 %v1702
        %3171 = vmatpush1.msra.mxu0 %v1701
        %3172 = vmatprep.subr.mxu0 %v1704
        %3173 = vmatpush1.msra.mxu0 %v1703
        %3174 = vmatprep.subr.mxu0 %v1706
        %3175 = vmatpush1.msra.mxu0 %v1705
        %3176 = vmatprep.subr.mxu0 %v1708
        %3177 = vmatpush1.msra.mxu0 %v1707
        %3178 = vmatprep.subr.mxu0 %v1710
        %3179 = vmatpush1.msra.mxu0 %v1709
        %3180 = vmatprep.subr.mxu0 %v1712
        %3181 = vmatpush1.msra.mxu0 %v1711
        %3182 = vmatprep.subr.mxu0 %v1714
        %3183 = vmatpush1.msra.mxu0 %v1713
        %3184 = vmatprep.subr.mxu0 %v1716
        %3185 = vmatpush1.msra.mxu0 %v1715
        %3186 = vmatprep.subr.mxu0 %v1718
        %3187 = vmatpush1.msra.mxu0 %v1717
        %3188 = vmatprep.subr.mxu0 %v1720
        %3189 = vmatpush1.msra.mxu0 %v1719
        %3190 = vmatprep.subr.mxu0 %v1722
        %3191 = vmatpush1.msra.mxu0 %v1721
        %3192 = vmatprep.subr.mxu0 %v1724
        %3193 = vmatpush1.msra.mxu0 %v1723
        %3194 = vmatprep.subr.mxu0 %v1726
        %3195 = vmatpush1.msra.mxu0 %v1725
        %3196 = vmatprep.subr.mxu0 %v1728
        %3197 = vmatpush1.msra.mxu0 %v1727
        %3198 = vmatprep.subr.mxu0 %v1730
        %3199 = vmatpush1.msra.mxu0 %v1729
        %3200 = vmatprep.subr.mxu0 %v1732
        %3201 = vmatpush1.msra.mxu0 %v1731
        %3202 = vmatprep.subr.mxu0 %v1734
        %3203 = vmatpush1.msra.mxu0 %v1733
        %3204 = vmatprep.subr.mxu0 %v1736
        %3205 = vmatpush1.msra.mxu0 %v1735
        %3206 = vmatprep.subr.mxu0 %v1738
        %3207 = vmatpush1.msra.mxu0 %v1737
        %3208 = vmatprep.subr.mxu0 %v1740
        %3209 = vmatpush1.msra.mxu0 %v1739
        %3210 = vmatprep.subr.mxu0 %v1742
        %3211 = vmatpush1.msra.mxu0 %v1741
        %3212 = vmatprep.subr.mxu0 %v1744
        %3213 = vmatpush1.msra.mxu0 %v1743
        %3214 = vmatprep.subr.mxu0 %v1746
        %3215 = vmatpush1.msra.mxu0 %v1745
        %3216 = vmatprep.subr.mxu0 %v1748
        %3217 = vmatpush1.msra.mxu0 %v1747
        %3218 = vmatprep.subr.mxu0 %v1750
        %3219 = vmatpush1.msra.mxu0 %v1749
        %3220 = vmatprep.mubr.f32.mxu0 %v763
        %3221 = vmatmul.mubr.f32.gmra.mrb[0].mxu0 %v762
        %v3222 = vpop.f32.mrb[0].mxu0
        %v3223 = vadd.f32 %v3104, %v3222
        %v3224 = vpop.f32.mrb[0].mxu0
        %v3225 = vadd.f32 %v3106, %v3224
        %3226 = vmatprep.mubr.f32.mxu0 %v790
        %3227 = vmatmul.mubr.f32.gmra.mrb[0].mxu0 %v789
        %v3228 = vpop.f32.mrb[0].mxu0
        %v3229 = vadd.f32 %v3110, %v3228
        %v3230 = vpop.f32.mrb[0].mxu0
        %v3231 = vadd.f32 %v3112, %v3230
        %3232 = vmatprep.mubr.f32.mxu0 %v817
        %3233 = vmatmul.mubr.f32.gmra.mrb[0].mxu0 %v816
        %v3234 = vpop.f32.mrb[0].mxu0
        %v3235 = vadd.f32 %v3116, %v3234
        %v3236 = vpop.f32.mrb[0].mxu0
        %v3237 = vadd.f32 %v3118, %v3236
        %3238 = vmatprep.mubr.f32.mxu0 %v844
        %3239 = vmatmul.mubr.f32.gmra.mrb[0].mxu0 %v843
        %v3240 = vpop.f32.mrb[0].mxu0
        %v3241 = vadd.f32 %v3122, %v3240
        %v3242 = vpop.f32.mrb[0].mxu0
        %v3243 = vadd.f32 %v3124, %v3242
        %3244 = vmatprep.mubr.f32.mxu0 %v871
        %3245 = vmatmul.mubr.f32.gmra.mrb[0].mxu0 %v870
        %v3246 = vpop.f32.mrb[0].mxu0
        %v3247 = vadd.f32 %v3128, %v3246
        %v3248 = vpop.f32.mrb[0].mxu0
        %v3249 = vadd.f32 %v3130, %v3248
        %3250 = vmatprep.mubr.f32.mxu0 %v898
        %3251 = vmatmul.mubr.f32.gmra.mrb[0].mxu0 %v897
        %v3252 = vpop.f32.mrb[0].mxu0
        %v3253 = vadd.f32 %v3134, %v3252
        %v3254 = vpop.f32.mrb[0].mxu0
        %v3255 = vadd.f32 %v3136, %v3254
        %3256 = vmatprep.mubr.f32.mxu0 %v925
        %3257 = vmatmul.mubr.f32.gmra.mrb[0].mxu0 %v924
        %v3258 = vpop.f32.mrb[0].mxu0
        %v3259 = vadd.f32 %v3140, %v3258
        %v3260 = vpop.f32.mrb[0].mxu0
        %v3261 = vadd.f32 %v3142, %v3260
        %3262 = vmatprep.mubr.f32.mxu0 %v952
        %3263 = vmatmul.mubr.f32.gmra.mrb[0].mxu0 %v951
        %v3264 = vpop.f32.mrb[0].mxu0
        %v3265 = vadd.f32 %v3146, %v3264
        %v3266 = vpop.f32.mrb[0].mxu0
        %v3267 = vadd.f32 %v3148, %v3266
        %3268 = vmatprep.mubr.f32.mxu0 %v979
        %3269 = vmatmul.mubr.f32.gmra.mrb[0].mxu0 %v978
        %v3270 = vpop.f32.mrb[0].mxu0
        %v3271 = vadd.f32 %v3152, %v3270
        %v3272 = vpop.f32.mrb[0].mxu0
        %v3273 = vadd.f32 %v3154, %v3272
        %3274 = vdwg.mxu0
        %3275 = vmatprep.subr.mxu0 %v1752
        %3276 = vmatpush1.msra.mxu0 %v1751
        %3277 = vmatprep.subr.mxu0 %v1754
        %3278 = vmatpush1.msra.mxu0 %v1753
        %3279 = vmatprep.subr.mxu0 %v1756
        %3280 = vmatpush1.msra.mxu0 %v1755
        %3281 = vmatprep.subr.mxu0 %v1758
        %3282 = vmatpush1.msra.mxu0 %v1757
        %3283 = vmatprep.subr.mxu0 %v1760
        %3284 = vmatpush1.msra.mxu0 %v1759
        %3285 = vmatprep.subr.mxu0 %v1762
        %3286 = vmatpush1.msra.mxu0 %v1761
        %3287 = vmatprep.subr.mxu0 %v1764
        %3288 = vmatpush1.msra.mxu0 %v1763
        %3289 = vmatprep.subr.mxu0 %v1766
        %3290 = vmatpush1.msra.mxu0 %v1765
        %3291 = vmatprep.subr.mxu0 %v1768
        %3292 = vmatpush1.msra.mxu0 %v1767
        %3293 = vmatprep.subr.mxu0 %v1770
        %3294 = vmatpush1.msra.mxu0 %v1769
        %3295 = vmatprep.subr.mxu0 %v1772
        %3296 = vmatpush1.msra.mxu0 %v1771
        %3297 = vmatprep.subr.mxu0 %v1774
        %3298 = vmatpush1.msra.mxu0 %v1773
        %3299 = vmatprep.subr.mxu0 %v1776
        %3300 = vmatpush1.msra.mxu0 %v1775
        %3301 = vmatprep.subr.mxu0 %v1778
        %3302 = vmatpush1.msra.mxu0 %v1777
        %3303 = vmatprep.subr.mxu0 %v1780
        %3304 = vmatpush1.msra.mxu0 %v1779
        %3305 = vmatprep.subr.mxu0 %v1782
        %3306 = vmatpush1.msra.mxu0 %v1781
        %3307 = vmatprep.subr.mxu0 %v1784
        %3308 = vmatpush1.msra.mxu0 %v1783
        %3309 = vmatprep.subr.mxu0 %v1786
        %3310 = vmatpush1.msra.mxu0 %v1785
        %3311 = vmatprep.subr.mxu0 %v1788
        %3312 = vmatpush1.msra.mxu0 %v1787
        %3313 = vmatprep.subr.mxu0 %v1790
        %3314 = vmatpush1.msra.mxu0 %v1789
        %3315 = vmatprep.subr.mxu0 %v1792
        %3316 = vmatpush1.msra.mxu0 %v1791
        %3317 = vmatprep.subr.mxu0 %v1794
        %3318 = vmatpush1.msra.mxu0 %v1793
        %3319 = vmatprep.subr.mxu0 %v1796
        %3320 = vmatpush1.msra.mxu0 %v1795
        %3321 = vmatprep.subr.mxu0 %v1798
        %3322 = vmatpush1.msra.mxu0 %v1797
        %3323 = vmatprep.subr.mxu0 %v1800
        %3324 = vmatpush1.msra.mxu0 %v1799
        %3325 = vmatprep.subr.mxu0 %v1802
        %3326 = vmatpush1.msra.mxu0 %v1801
        %3327 = vmatprep.subr.mxu0 %v1804
        %3328 = vmatpush1.msra.mxu0 %v1803
        %3329 = vmatprep.subr.mxu0 %v1806
        %3330 = vmatpush1.msra.mxu0 %v1805
        %3331 = vmatprep.subr.mxu0 %v1808
        %3332 = vmatpush1.msra.mxu0 %v1807
        %3333 = vmatprep.subr.mxu0 %v1810
        %3334 = vmatpush1.msra.mxu0 %v1809
        %3335 = vmatprep.subr.mxu0 %v1812
        %3336 = vmatpush1.msra.mxu0 %v1811
        %3337 = vmatprep.subr.mxu0 %v1814
        %3338 = vmatpush1.msra.mxu0 %v1813
        %3339 = vmatprep.mubr.f32.mxu0 %v765
        %3340 = vmatmul.mubr.f32.gmra.mrb[0].mxu0 %v764
        %v3341 = vpop.f32.mrb[0].mxu0
        %v3342 = vadd.f32 %v3223, %v3341
        %v3343 = vpop.f32.mrb[0].mxu0
        %v3344 = vadd.f32 %v3225, %v3343
        %3345 = vmatprep.mubr.f32.mxu0 %v792
        %3346 = vmatmul.mubr.f32.gmra.mrb[0].mxu0 %v791
        %v3347 = vpop.f32.mrb[0].mxu0
        %v3348 = vadd.f32 %v3229, %v3347
        %v3349 = vpop.f32.mrb[0].mxu0
        %v3350 = vadd.f32 %v3231, %v3349
        %3351 = vmatprep.mubr.f32.mxu0 %v819
        %3352 = vmatmul.mubr.f32.gmra.mrb[0].mxu0 %v818
        %v3353 = vpop.f32.mrb[0].mxu0
        %v3354 = vadd.f32 %v3235, %v3353
        %v3355 = vpop.f32.mrb[0].mxu0
        %v3356 = vadd.f32 %v3237, %v3355
        %3357 = vmatprep.mubr.f32.mxu0 %v846
        %3358 = vmatmul.mubr.f32.gmra.mrb[0].mxu0 %v845
        %v3359 = vpop.f32.mrb[0].mxu0
        %v3360 = vadd.f32 %v3241, %v3359
        %v3361 = vpop.f32.mrb[0].mxu0
        %v3362 = vadd.f32 %v3243, %v3361
        %3363 = vmatprep.mubr.f32.mxu0 %v873
        %3364 = vmatmul.mubr.f32.gmra.mrb[0].mxu0 %v872
        %v3365 = vpop.f32.mrb[0].mxu0
        %v3366 = vadd.f32 %v3247, %v3365
        %v3367 = vpop.f32.mrb[0].mxu0
        %v3368 = vadd.f32 %v3249, %v3367
        %3369 = vmatprep.mubr.f32.mxu0 %v900
        %3370 = vmatmul.mubr.f32.gmra.mrb[0].mxu0 %v899
        %v3371 = vpop.f32.mrb[0].mxu0
        %v3372 = vadd.f32 %v3253, %v3371
        %v3373 = vpop.f32.mrb[0].mxu0
        %v3374 = vadd.f32 %v3255, %v3373
        %3375 = vmatprep.mubr.f32.mxu0 %v927
        %3376 = vmatmul.mubr.f32.gmra.mrb[0].mxu0 %v926
        %v3377 = vpop.f32.mrb[0].mxu0
        %v3378 = vadd.f32 %v3259, %v3377
        %v3379 = vpop.f32.mrb[0].mxu0
        %v3380 = vadd.f32 %v3261, %v3379
        %3381 = vmatprep.mubr.f32.mxu0 %v954
        %3382 = vmatmul.mubr.f32.gmra.mrb[0].mxu0 %v953
        %v3383 = vpop.f32.mrb[0].mxu0
        %v3384 = vadd.f32 %v3265, %v3383
        %v3385 = vpop.f32.mrb[0].mxu0
        %v3386 = vadd.f32 %v3267, %v3385
        %3387 = vmatprep.mubr.f32.mxu0 %v981
        %3388 = vmatmul.mubr.f32.gmra.mrb[0].mxu0 %v980
        %v3389 = vpop.f32.mrb[0].mxu0
        %v3390 = vadd.f32 %v3271, %v3389
        %v3391 = vpop.f32.mrb[0].mxu0
        %v3392 = vadd.f32 %v3273, %v3391
        %3393 = vdwg.mxu0
        %3394 = vmatprep.subr.mxu0 %v1816
        %3395 = vmatpush1.msra.mxu0 %v1815
        %3396 = vmatprep.subr.mxu0 %v1818
        %3397 = vmatpush1.msra.mxu0 %v1817
        %3398 = vmatprep.subr.mxu0 %v1820
        %3399 = vmatpush1.msra.mxu0 %v1819
        %3400 = vmatprep.subr.mxu0 %v1822
        %3401 = vmatpush1.msra.mxu0 %v1821
        %3402 = vmatprep.subr.mxu0 %v1824
        %3403 = vmatpush1.msra.mxu0 %v1823
        %3404 = vmatprep.subr.mxu0 %v1826
        %3405 = vmatpush1.msra.mxu0 %v1825
        %3406 = vmatprep.subr.mxu0 %v1828
        %3407 = vmatpush1.msra.mxu0 %v1827
        %3408 = vmatprep.subr.mxu0 %v1830
        %3409 = vmatpush1.msra.mxu0 %v1829
        %3410 = vmatprep.subr.mxu0 %v1832
        %3411 = vmatpush1.msra.mxu0 %v1831
        %3412 = vmatprep.subr.mxu0 %v1834
        %3413 = vmatpush1.msra.mxu0 %v1833
        %3414 = vmatprep.subr.mxu0 %v1836
        %3415 = vmatpush1.msra.mxu0 %v1835
        %3416 = vmatprep.subr.mxu0 %v1838
        %3417 = vmatpush1.msra.mxu0 %v1837
        %3418 = vmatprep.subr.mxu0 %v1840
        %3419 = vmatpush1.msra.mxu0 %v1839
        %3420 = vmatprep.subr.mxu0 %v1842
        %3421 = vmatpush1.msra.mxu0 %v1841
        %3422 = vmatprep.subr.mxu0 %v1844
        %3423 = vmatpush1.msra.mxu0 %v1843
        %3424 = vmatprep.subr.mxu0 %v1846
        %3425 = vmatpush1.msra.mxu0 %v1845
        %3426 = vmatprep.subr.mxu0 0.0
        %3427 = vmatpush1.msra.mxu0 0.0
        %3428 = vmatprep.subr.mxu0 0.0
        %3429 = vmatpush1.msra.mxu0 0.0
        %3430 = vmatprep.subr.mxu0 0.0
        %3431 = vmatpush1.msra.mxu0 0.0
        %3432 = vmatprep.subr.mxu0 0.0
        %3433 = vmatpush1.msra.mxu0 0.0
        %3434 = vmatprep.subr.mxu0 0.0
        %3435 = vmatpush1.msra.mxu0 0.0
        %3436 = vmatprep.subr.mxu0 0.0
        %3437 = vmatpush1.msra.mxu0 0.0
        %3438 = vmatprep.subr.mxu0 0.0
        %3439 = vmatpush1.msra.mxu0 0.0
        %3440 = vmatprep.subr.mxu0 0.0
        %3441 = vmatpush1.msra.mxu0 0.0
        %3442 = vmatprep.subr.mxu0 0.0
        %3443 = vmatpush1.msra.mxu0 0.0
        %3444 = vmatprep.subr.mxu0 0.0
        %3445 = vmatpush1.msra.mxu0 0.0
        %3446 = vmatprep.subr.mxu0 0.0
        %3447 = vmatpush1.msra.mxu0 0.0
        %3448 = vmatprep.subr.mxu0 0.0
        %3449 = vmatpush1.msra.mxu0 0.0
        %3450 = vmatprep.subr.mxu0 0.0
        %3451 = vmatpush1.msra.mxu0 0.0
        %3452 = vmatprep.subr.mxu0 0.0
        %3453 = vmatpush1.msra.mxu0 0.0
        %3454 = vmatprep.subr.mxu0 0.0
        %3455 = vmatpush1.msra.mxu0 0.0
        %3456 = vmatprep.subr.mxu0 0.0
        %3457 = vmatpush1.msra.mxu0 0.0
        %3458 = vmatprep.mubr.f32.mxu0 0.0
        %3459 = vmatmul.mubr.f32.gmra.mrb[0].mxu0 %v766
        %v3460 = vpop.f32.mrb[0].mxu0
        %v3461 = vadd.f32 %v3342, %v3460
        %v3462 = vpop.f32.mrb[0].mxu0
        %v3463 = vadd.f32 %v3344, %v3462
        %3464 = vmatprep.mubr.f32.mxu0 0.0
        %3465 = vmatmul.mubr.f32.gmra.mrb[0].mxu0 %v793
        %v3466 = vpop.f32.mrb[0].mxu0
        %v3467 = vadd.f32 %v3348, %v3466
        %v3468 = vpop.f32.mrb[0].mxu0
        %v3469 = vadd.f32 %v3350, %v3468
        %3470 = vmatprep.mubr.f32.mxu0 0.0
        %3471 = vmatmul.mubr.f32.gmra.mrb[0].mxu0 %v820
        %v3472 = vpop.f32.mrb[0].mxu0
        %v3473 = vadd.f32 %v3354, %v3472
        %v3474 = vpop.f32.mrb[0].mxu0
        %v3475 = vadd.f32 %v3356, %v3474
        %3476 = vmatprep.mubr.f32.mxu0 0.0
        %3477 = vmatmul.mubr.f32.gmra.mrb[0].mxu0 %v847
        %v3478 = vpop.f32.mrb[0].mxu0
        %v3479 = vadd.f32 %v3360, %v3478
        %v3480 = vpop.f32.mrb[0].mxu0
        %v3481 = vadd.f32 %v3362, %v3480
        %3482 = vmatprep.mubr.f32.mxu0 0.0
        %3483 = vmatmul.mubr.f32.gmra.mrb[0].mxu0 %v874
        %v3484 = vpop.f32.mrb[0].mxu0
        %v3485 = vadd.f32 %v3366, %v3484
        %v3486 = vpop.f32.mrb[0].mxu0
        %v3487 = vadd.f32 %v3368, %v3486
        %3488 = vmatprep.mubr.f32.mxu0 0.0
        %3489 = vmatmul.mubr.f32.gmra.mrb[0].mxu0 %v901
        %v3490 = vpop.f32.mrb[0].mxu0
        %v3491 = vadd.f32 %v3372, %v3490
        %v3492 = vpop.f32.mrb[0].mxu0
        %v3493 = vadd.f32 %v3374, %v3492
        %3494 = vmatprep.mubr.f32.mxu0 0.0
        %3495 = vmatmul.mubr.f32.gmra.mrb[0].mxu0 %v928
        %v3496 = vpop.f32.mrb[0].mxu0
        %v3497 = vadd.f32 %v3378, %v3496
        %v3498 = vpop.f32.mrb[0].mxu0
        %v3499 = vadd.f32 %v3380, %v3498
        %3500 = vmatprep.mubr.f32.mxu0 0.0
        %3501 = vmatmul.mubr.f32.gmra.mrb[0].mxu0 %v955
        %v3502 = vpop.f32.mrb[0].mxu0
        %v3503 = vadd.f32 %v3384, %v3502
        %v3504 = vpop.f32.mrb[0].mxu0
        %v3505 = vadd.f32 %v3386, %v3504
        %3506 = vmatprep.mubr.f32.mxu0 0.0
        %3507 = vmatmul.mubr.f32.gmra.mrb[0].mxu0 %v982
        %v3508 = vpop.f32.mrb[0].mxu0
        %v3509 = vadd.f32 %v3390, %v3508
        %v3510 = vpop.f32.mrb[0].mxu0
        %v3511 = vadd.f32 %v3392, %v3510
        %3512 = vdwg.mxu0
        %v3513 = vadd.f32 %v722, %v3461
        %v3514 = vadd.f32 %v723, %v3463
        %v3515 = vadd.f32 %v724, %v3467
        %v3516 = vadd.f32 %v725, %v3469
        %v3517 = vadd.f32 %v726, %v3473
        %v3518 = vadd.f32 %v727, %v3475
        %v3519 = vadd.f32 %v728, %v3479
        %v3520 = vadd.f32 %v729, %v3481
        %v3521 = vadd.f32 %v730, %v3485
        %v3522 = vadd.f32 %v731, %v3487
        %v3523 = vadd.f32 %v732, %v3491
        %v3524 = vadd.f32 %v733, %v3493
        %v3525 = vadd.f32 %v734, %v3497
        %v3526 = vadd.f32 %v735, %v3499
        %v3527 = vadd.f32 %v736, %v3503
        %v3528 = vadd.f32 %v737, %v3505
        %v3529 = vadd.f32 %v738, %v3509
        %v3530 = vadd.f32 %v739, %v3511
        %3531 = vst [vmem:[%s3] sm:$0xff] %v3513
        %3532 = vst [vmem:[%s3 + $0x8] sm:$0xff] %v3514
        %3533 = vst [vmem:[%s3 + $0x10] sm:$0xff] %v3515
        %3534 = vst [vmem:[%s3 + $0x18] sm:$0xff] %v3516
        %3535 = vst [vmem:[%s3 + $0x20] sm:$0xff] %v3517
        %3536 = vst [vmem:[%s3 + $0x28] sm:$0xff] %v3518
        %3537 = vst [vmem:[%s3 + $0x30] sm:$0xff] %v3519
        %3538 = vst [vmem:[%s3 + $0x38] sm:$0xff] %v3520
        %3539 = vst [vmem:[%s3 + $0x40] sm:$0xff] %v3521
        %3540 = vst [vmem:[%s3 + $0x48] sm:$0xff] %v3522
        %3541 = vst [vmem:[%s3 + $0x50] sm:$0xff] %v3523
        %3542 = vst [vmem:[%s3 + $0x58] sm:$0xff] %v3524
        %3543 = vst [vmem:[%s3 + $0x60] sm:$0xff] %v3525
        %3544 = vst [vmem:[%s3 + $0x68] sm:$0xff] %v3526
        %3545 = vst [vmem:[%s3 + $0x70] sm:$0xff] %v3527
        %3546 = vst [vmem:[%s3 + $0x78] sm:$0xff] %v3528
        %3547 = vst [vmem:[%s3 + $0x80] sm:$0xff] %v3529
        %3548 = vst [vmem:[%s3 + $0x88] sm:$0xff] %v3530
        // Predicated region
        $region60: #{forward_pallas.2} parent=50 // pred_check
          %p3549 = pneg %p100
        $region61: #{forward_pallas.2} parent=50 // pred_check_branch
          %3551 = sbr.rel (%p3549) target = $region63
        $region62: #{forward_pallas.2} parent=50 // pred_region
          _
        $region63: #{forward_pallas.2} parent=50 // pred_fallthru
          _
        // Predicated region
        $region64: #{forward_pallas.2} parent=50 // pred_check
          %p3552 = pneg %p100
        $region65: #{forward_pallas.2} parent=50 // pred_check_branch
          %3554 = sbr.rel (%p3552) target = $region67
        $region66: #{forward_pallas.2} parent=50 // pred_region
          _
        $region67: #{forward_pallas.2} parent=50 // pred_fallthru
          _
      $region51: #{forward_pallas.2} parent=5 // pred_fallthru
        _
      %p3555 = scmp.le.s32.totalorder 2, %s9
      // Predicated region
      $region68: #{forward_pallas.2} parent=5 // pred_check
        %p3556 = pneg %p3555
      $region69: #{forward_pallas.2} parent=5 // pred_check_branch
        %3558 = sbr.rel (%p3556) target = $region71
      $region70: #{forward_pallas.2} parent=5 // pred_region
        %s3559 = ssub.s32 %s9, 2
      $region71: #{forward_pallas.2} parent=5 // pred_fallthru
        _
    $region6: #{forward_pallas.2} parent=1 // loop_footer
      %s13 = sadd.s32 1, %s9
    $region7: #{forward_pallas.2} parent=1 // loop_footer_branch
      %8 = sbr.rel target = $region3
    $region8: #{forward_pallas.2} parent=1 // loop_exit
      _

// kernel: forward_pallas.3
$region0: #{forward_pallas.3}
  #allocation0 [shape = 'u32[]', space=smem, size = 0x4, offset = 0x4, fixed_abs, tag = 'smem constant byte address 0x4 - core index']
  #allocation1 [shape = 'u32[144,128]{1,0:T(1,128)}', space=vmem, size = 0x12000, scoped, tag = 'internal scratch']
  %s0 = inlined_call_operand.vmem [shape: f32[8,2304], index: 0, kind: input, shape index: {}]
  %s1 = inlined_call_operand.hbm [shape: f32[8,2304], index: 1, kind: output, shape index: {}]
  %s2 = sld [smem:[#allocation0]]
  $region14: #{forward_pallas.3} parent=0
    _
  %s4 = ssub.s32 1, %s2
  %s5 = scalar_select 0, %s4, %s2
  $region1: #{forward_pallas.3} parent=0
    #allocation2 [shape = 'u8[73728]{0}', space=vmem, size = 0x12000, scoped, tag = 'output window, operand 0, single buffered']
    #allocation3 [shape = 's32[1]{0}', space=sflag, size = 0x4, scoped, tag = 'scoped memory for forward_pallas.3']
    %6 = vsyncpa [#allocation3], 0
    // Predicated region
    $region2: #{forward_pallas.3} parent=1 // pred_check
      _
    $region3: #{forward_pallas.3} parent=1 // pred_check_branch
      %8 = sbr.rel (0) target = $region5
    $region4: #{forward_pallas.3} parent=1 // pred_region
      _
    $region5: #{forward_pallas.3} parent=1 // pred_fallthru
      _
    %v9 = vld [vmem:[%s0] sm:$0xff]
    %v10 = vld [vmem:[%s0 + $0x8] sm:$0xff]
    %v11 = vld [vmem:[%s0 + $0x10] sm:$0xff]
    %v12 = vld [vmem:[%s0 + $0x18] sm:$0xff]
    %v13 = vld [vmem:[%s0 + $0x20] sm:$0xff]
    %v14 = vld [vmem:[%s0 + $0x28] sm:$0xff]
    %v15 = vld [vmem:[%s0 + $0x30] sm:$0xff]
    %v16 = vld [vmem:[%s0 + $0x38] sm:$0xff]
    %v17 = vld [vmem:[%s0 + $0x40] sm:$0xff]
    %v18 = vld [vmem:[%s0 + $0x48] sm:$0xff]
    %v19 = vld [vmem:[%s0 + $0x50] sm:$0xff]
    %v20 = vld [vmem:[%s0 + $0x58] sm:$0xff]
    %v21 = vld [vmem:[%s0 + $0x60] sm:$0xff]
    %v22 = vld [vmem:[%s0 + $0x68] sm:$0xff]
    %v23 = vld [vmem:[%s0 + $0x70] sm:$0xff]
    %v24 = vld [vmem:[%s0 + $0x78] sm:$0xff]
    %v25 = vld [vmem:[%s0 + $0x80] sm:$0xff]
    %v26 = vld [vmem:[%s0 + $0x88] sm:$0xff]
    %v27 = vmul.f32 %v9, %v9
    %v28 = vmul.f32 %v10, %v10
    %v29 = vmul.f32 %v11, %v11
    %v30 = vmul.f32 %v12, %v12
    %v31 = vmul.f32 %v13, %v13
    %v32 = vmul.f32 %v14, %v14
    %v33 = vmul.f32 %v15, %v15
    %v34 = vmul.f32 %v16, %v16
    %v35 = vmul.f32 %v17, %v17
    %v36 = vmul.f32 %v18, %v18
    %v37 = vmul.f32 %v19, %v19
    %v38 = vmul.f32 %v20, %v20
    %v39 = vmul.f32 %v21, %v21
    %v40 = vmul.f32 %v22, %v22
    %v41 = vmul.f32 %v23, %v23
    %v42 = vmul.f32 %v24, %v24
    %v43 = vmul.f32 %v25, %v25
    %v44 = vmul.f32 %v26, %v26
    %v45 = vrot.slane %v27, 4
    %v46 = vadd.f32 %v27, %v45
    %v47 = vrot.slane %v46, 2
    %v48 = vadd.f32 %v46, %v47
    %v49 = vrot.slane %v48, 1
    %v50 = vadd.f32 %v48, %v49
    %v51 = vrot.slane %v28, 4
    %v52 = vadd.f32 %v28, %v51
    %v53 = vrot.slane %v52, 2
    %v54 = vadd.f32 %v52, %v53
    %v55 = vrot.slane %v54, 1
    %v56 = vadd.f32 %v54, %v55
    %v57 = vrot.slane %v29, 4
    %v58 = vadd.f32 %v29, %v57
    %v59 = vrot.slane %v58, 2
    %v60 = vadd.f32 %v58, %v59
    %v61 = vrot.slane %v60, 1
    %v62 = vadd.f32 %v60, %v61
    %v63 = vrot.slane %v30, 4
    %v64 = vadd.f32 %v30, %v63
    %v65 = vrot.slane %v64, 2
    %v66 = vadd.f32 %v64, %v65
    %v67 = vrot.slane %v66, 1
    %v68 = vadd.f32 %v66, %v67
    %v69 = vrot.slane %v31, 4
    %v70 = vadd.f32 %v31, %v69
    %v71 = vrot.slane %v70, 2
    %v72 = vadd.f32 %v70, %v71
    %v73 = vrot.slane %v72, 1
    %v74 = vadd.f32 %v72, %v73
    %v75 = vrot.slane %v32, 4
    %v76 = vadd.f32 %v32, %v75
    %v77 = vrot.slane %v76, 2
    %v78 = vadd.f32 %v76, %v77
    %v79 = vrot.slane %v78, 1
    %v80 = vadd.f32 %v78, %v79
    %v81 = vrot.slane %v33, 4
    %v82 = vadd.f32 %v33, %v81
    %v83 = vrot.slane %v82, 2
    %v84 = vadd.f32 %v82, %v83
    %v85 = vrot.slane %v84, 1
    %v86 = vadd.f32 %v84, %v85
    %v87 = vrot.slane %v34, 4
    %v88 = vadd.f32 %v34, %v87
    %v89 = vrot.slane %v88, 2
    %v90 = vadd.f32 %v88, %v89
    %v91 = vrot.slane %v90, 1
    %v92 = vadd.f32 %v90, %v91
    %v93 = vrot.slane %v35, 4
    %v94 = vadd.f32 %v35, %v93
    %v95 = vrot.slane %v94, 2
    %v96 = vadd.f32 %v94, %v95
    %v97 = vrot.slane %v96, 1
    %v98 = vadd.f32 %v96, %v97
    %v99 = vrot.slane %v36, 4
    %v100 = vadd.f32 %v36, %v99
    %v101 = vrot.slane %v100, 2
    %v102 = vadd.f32 %v100, %v101
    %v103 = vrot.slane %v102, 1
    %v104 = vadd.f32 %v102, %v103
    %v105 = vrot.slane %v37, 4
    %v106 = vadd.f32 %v37, %v105
    %v107 = vrot.slane %v106, 2
    %v108 = vadd.f32 %v106, %v107
    %v109 = vrot.slane %v108, 1
    %v110 = vadd.f32 %v108, %v109
    %v111 = vrot.slane %v38, 4
    %v112 = vadd.f32 %v38, %v111
    %v113 = vrot.slane %v112, 2
    %v114 = vadd.f32 %v112, %v113
    %v115 = vrot.slane %v114, 1
    %v116 = vadd.f32 %v114, %v115
    %v117 = vrot.slane %v39, 4
    %v118 = vadd.f32 %v39, %v117
    %v119 = vrot.slane %v118, 2
    %v120 = vadd.f32 %v118, %v119
    %v121 = vrot.slane %v120, 1
    %v122 = vadd.f32 %v120, %v121
    %v123 = vrot.slane %v40, 4
    %v124 = vadd.f32 %v40, %v123
    %v125 = vrot.slane %v124, 2
    %v126 = vadd.f32 %v124, %v125
    %v127 = vrot.slane %v126, 1
    %v128 = vadd.f32 %v126, %v127
    %v129 = vrot.slane %v41, 4
    %v130 = vadd.f32 %v41, %v129
    %v131 = vrot.slane %v130, 2
    %v132 = vadd.f32 %v130, %v131
    %v133 = vrot.slane %v132, 1
    %v134 = vadd.f32 %v132, %v133
    %v135 = vrot.slane %v42, 4
    %v136 = vadd.f32 %v42, %v135
    %v137 = vrot.slane %v136, 2
    %v138 = vadd.f32 %v136, %v137
    %v139 = vrot.slane %v138, 1
    %v140 = vadd.f32 %v138, %v139
    %v141 = vrot.slane %v43, 4
    %v142 = vadd.f32 %v43, %v141
    %v143 = vrot.slane %v142, 2
    %v144 = vadd.f32 %v142, %v143
    %v145 = vrot.slane %v144, 1
    %v146 = vadd.f32 %v144, %v145
    %v147 = vrot.slane %v44, 4
    %v148 = vadd.f32 %v44, %v147
    %v149 = vrot.slane %v148, 2
    %v150 = vadd.f32 %v148, %v149
    %v151 = vrot.slane %v150, 1
    %v152 = vadd.f32 %v150, %v151
    %v153 = vadd.f32 %v50, 1.0
    %v154 = vadd.f32 %v56, 1.0
    %v155 = vadd.f32 %v62, 1.0
    %v156 = vadd.f32 %v68, 1.0
    %v157 = vadd.f32 %v74, 1.0
    %v158 = vadd.f32 %v80, 1.0
    %v159 = vadd.f32 %v86, 1.0
    %v160 = vadd.f32 %v92, 1.0
    %v161 = vadd.f32 %v98, 1.0
    %v162 = vadd.f32 %v104, 1.0
    %v163 = vadd.f32 %v110, 1.0
    %v164 = vadd.f32 %v116, 1.0
    %v165 = vadd.f32 %v122, 1.0
    %v166 = vadd.f32 %v128, 1.0
    %v167 = vadd.f32 %v134, 1.0
    %v168 = vadd.f32 %v140, 1.0
    %v169 = vadd.f32 %v146, 1.0
    %v170 = vadd.f32 %v152, 1.0
    %v171 = vrsqrt.pop %v50
    %v172 = vmul.f32 %v50, %v171
    %vm173 = vcmp.eq.f32.partialorder %v50, inf
    %v174 = vsel %vm173, %v50, %v172
    %vm175 = vcmp.eq.f32.partialorder %v50, 0.0
    %v176 = vand.u32 %v50, 2147483648
    %v177 = vsel %vm175, %v176, %v174
    %v178 = vrsqrt.pop %v56
    %v179 = vmul.f32 %v56, %v178
    %vm180 = vcmp.eq.f32.partialorder %v56, inf
    %v181 = vsel %vm180, %v56, %v179
    %vm182 = vcmp.eq.f32.partialorder %v56, 0.0
    %v183 = vand.u32 %v56, 2147483648
    %v184 = vsel %vm182, %v183, %v181
    %v185 = vrsqrt.pop %v62
    %v186 = vmul.f32 %v62, %v185
    %vm187 = vcmp.eq.f32.partialorder %v62, inf
    %v188 = vsel %vm187, %v62, %v186
    %vm189 = vcmp.eq.f32.partialorder %v62, 0.0
    %v190 = vand.u32 %v62, 2147483648
    %v191 = vsel %vm189, %v190, %v188
    %v192 = vrsqrt.pop %v68
    %v193 = vmul.f32 %v68, %v192
    %vm194 = vcmp.eq.f32.partialorder %v68, inf
    %v195 = vsel %vm194, %v68, %v193
    %vm196 = vcmp.eq.f32.partialorder %v68, 0.0
    %v197 = vand.u32 %v68, 2147483648
    %v198 = vsel %vm196, %v197, %v195
    %v199 = vrsqrt.pop %v74
    %v200 = vmul.f32 %v74, %v199
    %vm201 = vcmp.eq.f32.partialorder %v74, inf
    %v202 = vsel %vm201, %v74, %v200
    %vm203 = vcmp.eq.f32.partialorder %v74, 0.0
    %v204 = vand.u32 %v74, 2147483648
    %v205 = vsel %vm203, %v204, %v202
    %v206 = vrsqrt.pop %v80
    %v207 = vmul.f32 %v80, %v206
    %vm208 = vcmp.eq.f32.partialorder %v80, inf
    %v209 = vsel %vm208, %v80, %v207
    %vm210 = vcmp.eq.f32.partialorder %v80, 0.0
    %v211 = vand.u32 %v80, 2147483648
    %v212 = vsel %vm210, %v211, %v209
    %v213 = vrsqrt.pop %v86
    %v214 = vmul.f32 %v86, %v213
    %vm215 = vcmp.eq.f32.partialorder %v86, inf
    %v216 = vsel %vm215, %v86, %v214
    %vm217 = vcmp.eq.f32.partialorder %v86, 0.0
    %v218 = vand.u32 %v86, 2147483648
    %v219 = vsel %vm217, %v218, %v216
    %v220 = vrsqrt.pop %v92
    %v221 = vmul.f32 %v92, %v220
    %vm222 = vcmp.eq.f32.partialorder %v92, inf
    %v223 = vsel %vm222, %v92, %v221
    %vm224 = vcmp.eq.f32.partialorder %v92, 0.0
    %v225 = vand.u32 %v92, 2147483648
    %v226 = vsel %vm224, %v225, %v223
    %v227 = vrsqrt.pop %v98
    %v228 = vmul.f32 %v98, %v227
    %vm229 = vcmp.eq.f32.partialorder %v98, inf
    %v230 = vsel %vm229, %v98, %v228
    %vm231 = vcmp.eq.f32.partialorder %v98, 0.0
    %v232 = vand.u32 %v98, 2147483648
    %v233 = vsel %vm231, %v232, %v230
    %v234 = vrsqrt.pop %v104
    %v235 = vmul.f32 %v104, %v234
    %vm236 = vcmp.eq.f32.partialorder %v104, inf
    %v237 = vsel %vm236, %v104, %v235
    %vm238 = vcmp.eq.f32.partialorder %v104, 0.0
    %v239 = vand.u32 %v104, 2147483648
    %v240 = vsel %vm238, %v239, %v237
    %v241 = vrsqrt.pop %v110
    %v242 = vmul.f32 %v110, %v241
    %vm243 = vcmp.eq.f32.partialorder %v110, inf
    %v244 = vsel %vm243, %v110, %v242
    %vm245 = vcmp.eq.f32.partialorder %v110, 0.0
    %v246 = vand.u32 %v110, 2147483648
    %v247 = vsel %vm245, %v246, %v244
    %v248 = vrsqrt.pop %v116
    %v249 = vmul.f32 %v116, %v248
    %vm250 = vcmp.eq.f32.partialorder %v116, inf
    %v251 = vsel %vm250, %v116, %v249
    %vm252 = vcmp.eq.f32.partialorder %v116, 0.0
    %v253 = vand.u32 %v116, 2147483648
    %v254 = vsel %vm252, %v253, %v251
    %v255 = vrsqrt.pop %v122
    %v256 = vmul.f32 %v122, %v255
    %vm257 = vcmp.eq.f32.partialorder %v122, inf
    %v258 = vsel %vm257, %v122, %v256
    %vm259 = vcmp.eq.f32.partialorder %v122, 0.0
    %v260 = vand.u32 %v122, 2147483648
    %v261 = vsel %vm259, %v260, %v258
    %v262 = vrsqrt.pop %v128
    %v263 = vmul.f32 %v128, %v262
    %vm264 = vcmp.eq.f32.partialorder %v128, inf
    %v265 = vsel %vm264, %v128, %v263
    %vm266 = vcmp.eq.f32.partialorder %v128, 0.0
    %v267 = vand.u32 %v128, 2147483648
    %v268 = vsel %vm266, %v267, %v265
    %v269 = vrsqrt.pop %v134
    %v270 = vmul.f32 %v134, %v269
    %vm271 = vcmp.eq.f32.partialorder %v134, inf
    %v272 = vsel %vm271, %v134, %v270
    %vm273 = vcmp.eq.f32.partialorder %v134, 0.0
    %v274 = vand.u32 %v134, 2147483648
    %v275 = vsel %vm273, %v274, %v272
    %v276 = vrsqrt.pop %v140
    %v277 = vmul.f32 %v140, %v276
    %vm278 = vcmp.eq.f32.partialorder %v140, inf
    %v279 = vsel %vm278, %v140, %v277
    %vm280 = vcmp.eq.f32.partialorder %v140, 0.0
    %v281 = vand.u32 %v140, 2147483648
    %v282 = vsel %vm280, %v281, %v279
    %v283 = vrsqrt.pop %v146
    %v284 = vmul.f32 %v146, %v283
    %vm285 = vcmp.eq.f32.partialorder %v146, inf
    %v286 = vsel %vm285, %v146, %v284
    %vm287 = vcmp.eq.f32.partialorder %v146, 0.0
    %v288 = vand.u32 %v146, 2147483648
    %v289 = vsel %vm287, %v288, %v286
    %v290 = vrsqrt.pop %v152
    %v291 = vmul.f32 %v152, %v290
    %vm292 = vcmp.eq.f32.partialorder %v152, inf
    %v293 = vsel %vm292, %v152, %v291
    %vm294 = vcmp.eq.f32.partialorder %v152, 0.0
    %v295 = vand.u32 %v152, 2147483648
    %v296 = vsel %vm294, %v295, %v293
    %v297 = vmul.f32 %v153, %v177
    %v298 = vmul.f32 %v154, %v184
    %v299 = vmul.f32 %v155, %v191
    %v300 = vmul.f32 %v156, %v198
    %v301 = vmul.f32 %v157, %v205
    %v302 = vmul.f32 %v158, %v212
    %v303 = vmul.f32 %v159, %v219
    %v304 = vmul.f32 %v160, %v226
    %v305 = vmul.f32 %v161, %v233
    %v306 = vmul.f32 %v162, %v240
    %v307 = vmul.f32 %v163, %v247
    %v308 = vmul.f32 %v164, %v254
    %v309 = vmul.f32 %v165, %v261
    %v310 = vmul.f32 %v166, %v268
    %v311 = vmul.f32 %v167, %v275
    %v312 = vmul.f32 %v168, %v282
    %v313 = vmul.f32 %v169, %v289
    %v314 = vmul.f32 %v170, %v296
    %v315 = vrcp.pop %v297
    %v316 = vmul.f32 %v50, %v315
    %v317 = vrcp.pop %v298
    %v318 = vmul.f32 %v56, %v317
    %v319 = vrcp.pop %v299
    %v320 = vmul.f32 %v62, %v319
    %v321 = vrcp.pop %v300
    %v322 = vmul.f32 %v68, %v321
    %v323 = vrcp.pop %v301
    %v324 = vmul.f32 %v74, %v323
    %v325 = vrcp.pop %v302
    %v326 = vmul.f32 %v80, %v325
    %v327 = vrcp.pop %v303
    %v328 = vmul.f32 %v86, %v327
    %v329 = vrcp.pop %v304
    %v330 = vmul.f32 %v92, %v329
    %v331 = vrcp.pop %v305
    %v332 = vmul.f32 %v98, %v331
    %v333 = vrcp.pop %v306
    %v334 = vmul.f32 %v104, %v333
    %v335 = vrcp.pop %v307
    %v336 = vmul.f32 %v110, %v335
    %v337 = vrcp.pop %v308
    %v338 = vmul.f32 %v116, %v337
    %v339 = vrcp.pop %v309
    %v340 = vmul.f32 %v122, %v339
    %v341 = vrcp.pop %v310
    %v342 = vmul.f32 %v128, %v341
    %v343 = vrcp.pop %v311
    %v344 = vmul.f32 %v134, %v343
    %v345 = vrcp.pop %v312
    %v346 = vmul.f32 %v140, %v345
    %v347 = vrcp.pop %v313
    %v348 = vmul.f32 %v146, %v347
    %v349 = vrcp.pop %v314
    %v350 = vmul.f32 %v152, %v349
    %v351 = vmul.f32 %v9, %v316
    %v352 = vmul.f32 %v10, %v318
    %v353 = vmul.f32 %v11, %v320
    %v354 = vmul.f32 %v12, %v322
    %v355 = vmul.f32 %v13, %v324
    %v356 = vmul.f32 %v14, %v326
    %v357 = vmul.f32 %v15, %v328
    %v358 = vmul.f32 %v16, %v330
    %v359 = vmul.f32 %v17, %v332
    %v360 = vmul.f32 %v18, %v334
    %v361 = vmul.f32 %v19, %v336
    %v362 = vmul.f32 %v20, %v338
    %v363 = vmul.f32 %v21, %v340
    %v364 = vmul.f32 %v22, %v342
    %v365 = vmul.f32 %v23, %v344
    %v366 = vmul.f32 %v24, %v346
    %v367 = vmul.f32 %v25, %v348
    %v368 = vmul.f32 %v26, %v350
    %369 = vst [vmem:[#allocation2] sm:$0xff] %v351
    %370 = vst [vmem:[#allocation2 + $0x8] sm:$0xff] %v352
    %371 = vst [vmem:[#allocation2 + $0x10] sm:$0xff] %v353
    %372 = vst [vmem:[#allocation2 + $0x18] sm:$0xff] %v354
    %373 = vst [vmem:[#allocation2 + $0x20] sm:$0xff] %v355
    %374 = vst [vmem:[#allocation2 + $0x28] sm:$0xff] %v356
    %375 = vst [vmem:[#allocation2 + $0x30] sm:$0xff] %v357
    %376 = vst [vmem:[#allocation2 + $0x38] sm:$0xff] %v358
    %377 = vst [vmem:[#allocation2 + $0x40] sm:$0xff] %v359
    %378 = vst [vmem:[#allocation2 + $0x48] sm:$0xff] %v360
    %379 = vst [vmem:[#allocation2 + $0x50] sm:$0xff] %v361
    %380 = vst [vmem:[#allocation2 + $0x58] sm:$0xff] %v362
    %381 = vst [vmem:[#allocation2 + $0x60] sm:$0xff] %v363
    %382 = vst [vmem:[#allocation2 + $0x68] sm:$0xff] %v364
    %383 = vst [vmem:[#allocation2 + $0x70] sm:$0xff] %v365
    %384 = vst [vmem:[#allocation2 + $0x78] sm:$0xff] %v366
    %385 = vst [vmem:[#allocation2 + $0x80] sm:$0xff] %v367
    %386 = vst [vmem:[#allocation2 + $0x88] sm:$0xff] %v368
    // Predicated region
    $region6: #{forward_pallas.3} parent=1 // pred_check
      _
    $region7: #{forward_pallas.3} parent=1 // pred_check_branch
      %388 = sbr.rel (0) target = $region9
    $region8: #{forward_pallas.3} parent=1 // pred_region
      %s390 = ssub.s32 2304, 2304
      %391 = vsyncadd [#allocation3], %s390
      %s393 = sshll.u32 [#allocation2], 4
      %s394 = int_to_ptr.vmem [resolvable:$true] %s393
      %396 = dma.vmem_to_hbm [thread:$0]  %s394, 2304, %s1, [#allocation3]
    $region9: #{forward_pallas.3} parent=1 // pred_fallthru
      _
    // Predicated region
    $region10: #{forward_pallas.3} parent=1 // pred_check
      _
    $region11: #{forward_pallas.3} parent=1 // pred_check_branch
      %398 = sbr.rel (0) target = $region13
    $region12: #{forward_pallas.3} parent=1 // pred_region
      %399 = dma.done [#allocation3], 2304
    $region13: #{forward_pallas.3} parent=1 // pred_fallthru
      _
    %400 = vsyncpa [#allocation3], 1

</llo_original>
